<compile_context>
chip_gen: v7x
topology: tpu7x:2x2x1
jax: 0.10.0
libtpu: 0.0.40
codegen_flags: <defaults>
</compile_context>

<pallas_src>
import functools

import jax
import jax.numpy as jnp
from jax import lax
from jax.experimental import pallas as pl
from jax.experimental.pallas import tpu as pltpu

_BN_EPS = 1e-5


def _round_up(x, m):
    return ((x + m - 1) // m) * m


# ------------------------------ fused kernel --------------------------------

def _bottleneck_fused_kernel(x_ref, halo_ref, w1_ref, b1_ref, w2_ref, b2_ref,
                             w3_ref, b3_ref, we_ref, be_ref, o_ref,
                             *, th, wp, H, W, im2col):
    """One row tile: x rows + halo -> 1x1 -> 3x3 -> 1x1 (+ equalizer) -> out.

    x_ref   : (1, th, wp, Cin)   bf16, width-padded image rows of this tile
    halo_ref: (1, 1, 3, wp, Cin) bf16, [row above, 2 rows below] (zeros at edges)
    w*_ref  : bf16 weights with the BN scale folded in; w2 is (9*Cmid, Cmid)
    b*_ref  : (1, C) f32 folded biases
    o_ref   : (1, th, wp, Cout)  f32 full-width lane-dense output block
    """
    t = pl.program_id(1)
    R = th + 3                     # 1 top halo + th rows + 2 bottom rows
    S = R * wp
    n_out = th * wp
    Cmid = w1_ref.shape[1]

    # --- assemble the row slab (aligned outer-dim concat; wp % 8 == 0) -------
    halo = halo_ref[0, 0]                                    # (3, wp, Cin)
    xs3 = jnp.concatenate([halo[0:1], x_ref[0], halo[1:3]], axis=0)  # (R, wp, Cin)
    xs = xs3.reshape(S, xs3.shape[-1])                       # (S, Cin), layout-free

    # --- stage 1: 1x1 conv (BN folded) + ReLU; zero at conv-padding positions
    h1 = jnp.dot(xs, w1_ref[...], preferred_element_type=jnp.float32)
    h1 = jnp.maximum(h1 + b1_ref[...], 0.0)
    # validity mask generated in-kernel (no mask input / DMA): padded-image row
    # index of slab row r is t*th + r; real pixels are rows 1..H, cols 1..W.
    rid = lax.broadcasted_iota(jnp.int32, (R, wp, 1), 0) + t * th
    cid = lax.broadcasted_iota(jnp.int32, (R, wp, 1), 1)
    valid = (rid >= 1) & (rid <= H) & (cid >= 1) & (cid <= W)
    h1 = jnp.where(valid, h1.reshape(R, wp, Cmid), 0.0)
    h1 = h1.astype(jnp.bfloat16).reshape(S, Cmid)            # (S, Cmid)

    # --- stage 2: 3x3 conv on the flattened slab.
    # Only 3 dx-shifted copies (2 unaligned sublane shifts total); every dy
    # offset is dy*wp which is 8-aligned, so tap slices below are aligned.
    L = n_out + 2 * wp
    shifts = (h1[0:L], h1[1:1 + L], h1[2:2 + L])
    if im2col:
        # Fold the 9 taps into the contraction dim: one MXU pass, K = 9*Cmid.
        cols = [shifts[dx][dy * wp: dy * wp + n_out]
                for dy in range(3) for dx in range(3)]
        patches = jnp.concatenate(cols, axis=-1)             # (n_out, 9*Cmid)
        acc = jnp.dot(patches, w2_ref[...], preferred_element_type=jnp.float32)
    else:
        w2 = w2_ref[...]                                     # (9*Cmid, Cmid)
        acc = jnp.zeros((n_out, w2.shape[1]), jnp.float32)
        for tap in range(9):                                 # static unroll
            dy, dx = divmod(tap, 3)
            acc = acc + jnp.dot(shifts[dx][dy * wp: dy * wp + n_out],
                                w2[tap * Cmid:(tap + 1) * Cmid, :],
                                preferred_element_type=jnp.float32)
    h2 = jnp.maximum(acc + b2_ref[...], 0.0).astype(jnp.bfloat16)    # (n_out, Cmid)

    # --- stage 3: 1x1 conv (BN folded) + ReLU, plus dim_equalizer + residual.
    # (The two matmuls cannot be merged: ReLU applies only to the conv branch.)
    y = jnp.dot(h2, w3_ref[...], preferred_element_type=jnp.float32)
    y = jnp.maximum(y + b3_ref[...], 0.0)
    x_c = xs[wp + 1: wp + 1 + n_out, :]                      # x at the centre tap
    eq = jnp.dot(x_c, we_ref[...], preferred_element_type=jnp.float32) + be_ref[...]
    out = (y + eq).astype(o_ref.dtype)                       # (n_out, Cout)

    # --- full wp-wide block store (unmasked, lane-dense); scratch columns are
    # dropped by the wrapper.
    o_ref[0] = out.reshape(th, wp, out.shape[-1])


# ------------------------------ parameters ----------------------------------

def _fold_bn(conv_b, gamma, beta, mean, var):
    s = gamma / jnp.sqrt(var + _BN_EPS)
    b = (conv_b - mean) * s + beta
    return s.reshape(1, -1), b.reshape(1, -1)


def _prepare_params(p):
    """Fold BN scale into conv weights; cast matmul operands to bf16."""
    s1, b1 = _fold_bn(p["b1"], p["g1"], p["be1"], p["m1"], p["v1"])
    s2, b2 = _fold_bn(p["b2"], p["g2"], p["be2"], p["m2"], p["v2"])
    s3, b3 = _fold_bn(p["b3"], p["g3"], p["be3"], p["m3"], p["v3"])
    cmid = p["w2"].shape[1]
    return {
        "w1": (p["w1"] * s1).astype(jnp.bfloat16),
        "b1": b1.astype(jnp.float32),
        # (9, Cmid, Cmid) -> (9*Cmid, Cmid): tap-major rows, matches im2col order
        "w2": (p["w2"] * s2.reshape(1, 1, -1)).astype(jnp.bfloat16).reshape(9 * cmid, cmid),
        "b2": b2.astype(jnp.float32),
        "w3": (p["w3"] * s3).astype(jnp.bfloat16),
        "b3": b3.astype(jnp.float32),
        "we": p["we"].astype(jnp.bfloat16),
        "be": p["beq"].reshape(1, -1).astype(jnp.float32),
    }


def init_params(key, in_dim, mid_dim, out_dim):
    ks = jax.random.split(key, 24)
    n = lambda k, shp, sc: sc * jax.random.normal(k, shp, jnp.float32)
    p = {}
    # conv_block_1(in -> mid): 1x1 conv + BN
    p["w1"] = n(ks[0], (in_dim, mid_dim), 0.4)
    p["b1"] = n(ks[1], (mid_dim,), 0.1)
    p["g1"] = 1.0 + n(ks[2], (mid_dim,), 0.1)
    p["be1"] = n(ks[3], (mid_dim,), 0.1)
    p["m1"] = n(ks[4], (mid_dim,), 0.1)
    p["v1"] = 0.5 + jnp.abs(n(ks[5], (mid_dim,), 0.2))
    # conv_block_3(mid -> mid): 3x3 conv (taps flattened to 9, (ky,kx) order) + BN
    p["w2"] = n(ks[6], (9, mid_dim, mid_dim), 0.2)
    p["b2"] = n(ks[7], (mid_dim,), 0.1)
    p["g2"] = 1.0 + n(ks[8], (mid_dim,), 0.1)
    p["be2"] = n(ks[9], (mid_dim,), 0.1)
    p["m2"] = n(ks[10], (mid_dim,), 0.1)
    p["v2"] = 0.5 + jnp.abs(n(ks[11], (mid_dim,), 0.2))
    # conv_block_1(mid -> out): 1x1 conv + BN
    p["w3"] = n(ks[12], (mid_dim, out_dim), 0.4)
    p["b3"] = n(ks[13], (out_dim,), 0.1)
    p["g3"] = 1.0 + n(ks[14], (out_dim,), 0.1)
    p["be3"] = n(ks[15], (out_dim,), 0.1)
    p["m3"] = n(ks[16], (out_dim,), 0.1)
    p["v3"] = 0.5 + jnp.abs(n(ks[17], (out_dim,), 0.2))
    # dim_equalizer(in -> out): plain 1x1 conv with bias (no BN, no ReLU)
    p["we"] = n(ks[18], (in_dim, out_dim), 0.4)
    p["beq"] = n(ks[19], (out_dim,), 0.1)
    return p


# ------------------------------ tiling heuristic -----------------------------

def _tile_vmem_estimate(th, wp, cin, cmid, cout):
    S = (th + 3) * wp
    n_out = th * wp
    return (
        2 * 2 * (th * wp * cin * 2 + 3 * wp * cin * 2)        # pipelined x + halo
        + 2 * 2 * (n_out * cout * 4)                           # pipelined output
        + S * cin * 2                                          # assembled slab
        + 4 * S * cmid * 2                                     # h1 + 3 dx shifts
        + n_out * 9 * cmid * 2                                 # im2col patches
        + n_out * cmid * 4 + 2 * n_out * cout * 4              # acc / y / eq
        + 2 * 2 * (cin * cmid + 9 * cmid * cmid + cmid * cout + cin * cout) * 2
    )


def _pick_row_tile(H, W, cin, cmid, cout, max_tile=64, budget_bytes=24 << 20):
    """Largest divisor of H (<= max_tile) whose working set fits the budget.
    Budget keeps the per-step working set well under the 64 MiB v7x VMEM."""
    wp = _round_up(W + 2, 8)
    best = 1
    for th in range(1, min(H, max_tile) + 1):
        if H % th:
            continue
        if _tile_vmem_estimate(th, wp, cin, cmid, cout) <= budget_bytes:
            best = th
    return best


# -------------------------------- forward -----------------------------------

def bottleneck_forward(x_nchw, p, *, row_tile=None):
    """down=False path of BottleNeck.forward (dim_equalizer always applied)."""
    N, Cin, H, W = x_nchw.shape
    Cmid = p["w1"].shape[1]
    Cout = p["w3"].shape[1]

    wp = _round_up(W + 2, 8)                 # padded width (1 left + >=1 right), x8
    if row_tile is None:
        th = _pick_row_tile(H, W, Cin, Cmid, Cout)
    else:
        th = max(1, min(row_tile, H))
        while H % th:
            th -= 1
    nt = H // th

    q = _prepare_params(p)

    # NHWC, bf16 BEFORE padding (halves wrapper-side HBM traffic), width pad only.
    x = jnp.transpose(x_nchw, (0, 2, 3, 1)).astype(jnp.bfloat16)        # (N,H,W,Cin)
    xw = jnp.pad(x, ((0, 0), (0, 0), (1, wp - (W + 1)), (0, 0)))        # (N,H,wp,Cin)

    # Tiny halo tensor: for tile t -> [row t*th-1, row (t+1)*th, row (t+1)*th+1]
    # (zeros where outside the image).  Only 3 rows per tile land in HBM.
    zero_row = jnp.zeros((N, 1, wp, Cin), xw.dtype)
    halos = []
    for t in range(nt):
        top = xw[:, t * th - 1: t * th] if t > 0 else zero_row
        lo = (t + 1) * th
        nbot = max(0, min(2, H - lo))
        if nbot == 2:
            bot = xw[:, lo: lo + 2]
        elif nbot == 1:
            bot = jnp.concatenate([xw[:, lo: lo + 1], zero_row], axis=1)
        else:
            bot = jnp.concatenate([zero_row, zero_row], axis=1)
        halos.append(jnp.concatenate([top, bot], axis=1))               # (N,3,wp,Cin)
    halo = jnp.stack(halos, axis=1)                                     # (N,nt,3,wp,Cin)

    kern = functools.partial(_bottleneck_fused_kernel, th=th, wp=wp, H=H, W=W,
                             im2col=(Cmid <= 64))
    out = pl.pallas_call(
        kern,
        out_shape=jax.ShapeDtypeStruct((N, H, wp, Cout), jnp.float32),
        grid_spec=pltpu.PrefetchScalarGridSpec(
            num_scalar_prefetch=0,
            grid=(N, nt),
            in_specs=[
                pl.BlockSpec((1, th, wp, Cin), lambda n, t: (n, t, 0, 0)),
                pl.BlockSpec((1, 1, 3, wp, Cin), lambda n, t: (n, t, 0, 0, 0)),
                pl.BlockSpec((Cin, Cmid), lambda n, t: (0, 0)),
                pl.BlockSpec((1, Cmid), lambda n, t: (0, 0)),
                pl.BlockSpec((9 * Cmid, Cmid), lambda n, t: (0, 0)),
                pl.BlockSpec((1, Cmid), lambda n, t: (0, 0)),
                pl.BlockSpec((Cmid, Cout), lambda n, t: (0, 0)),
                pl.BlockSpec((1, Cout), lambda n, t: (0, 0)),
                pl.BlockSpec((Cin, Cout), lambda n, t: (0, 0)),
                pl.BlockSpec((1, Cout), lambda n, t: (0, 0)),
            ],
            out_specs=pl.BlockSpec((1, th, wp, Cout), lambda n, t: (n, t, 0, 0)),
        ),
        compiler_params=pltpu.CompilerParams(
            dimension_semantics=("parallel", "parallel"),
            vmem_limit_bytes=48 * 1024 * 1024,   # > v5e scoped default, < v7x physical
        ),
    )(xw, halo, q["w1"], q["b1"], q["w2"], q["b2"], q["w3"], q["b3"],
      q["we"], q["be"])

    # Drop the (wp - W) scratch columns; return NCHW to match the module's output.
    out = out[:, :, :W, :]
    return jnp.transpose(out, (0, 3, 1, 2))


def reference_forward(x_nchw, p):
    """Pure-JAX reference mirroring the kernel's folding & bf16 rounding."""
    q = _prepare_params(p)
    f32 = lambda a: a.astype(jnp.float32)
    rnd = lambda a: a.astype(jnp.bfloat16).astype(jnp.float32)
    Cmid = p["w1"].shape[1]

    x = jnp.transpose(x_nchw, (0, 2, 3, 1)).astype(jnp.float32)
    xq = rnd(x)
    h1 = rnd(jnp.maximum(jnp.einsum("nhwc,cd->nhwd", xq, f32(q["w1"])) + q["b1"], 0.0))
    w2 = f32(q["w2"]).reshape(3, 3, Cmid, Cmid)
    h2 = lax.conv_general_dilated(h1, w2, window_strides=(1, 1), padding="SAME",
                                  dimension_numbers=("NHWC", "HWIO", "NHWC"))
    h2 = rnd(jnp.maximum(h2 + q["b2"], 0.0))
    y = jnp.maximum(jnp.einsum("nhwc,cd->nhwd", h2, f32(q["w3"])) + q["b3"], 0.0)
    eq = jnp.einsum("nhwc,cd->nhwd", xq, f32(q["we"])) + q["be"]
    return jnp.transpose(y + eq, (0, 3, 1, 2))


# ---------------------------------- main -------------------------------------

if __name__ == "__main__":
    in_dim, mid_dim, out_dim = 4, 4, 8
    N, H, W = 2, 16, 16

    key = jax.random.PRNGKey(0)
    kx, kp = jax.random.split(key)
    x = jax.random.normal(kx, (N, in_dim, H, W), jnp.float32)   # PyTorch NCHW
    params = init_params(kp, in_dim, mid_dim, out_dim)

    out = jax.jit(bottleneck_forward)(x, params)
    out = jax.block_until_ready(out)

    assert out.shape == (N, out_dim, H, W), out.shape
    ref = reference_forward(x, params)
    max_err = float(jnp.max(jnp.abs(out - ref)))
    assert jnp.allclose(out, ref, atol=5e-2, rtol=5e-2), f"max_err={max_err}"

    print("KERNEL_OK")
</pallas_src>

<mosaic_0001>
module attributes {stable_mosaic.version = 11 : i64} {
  func.func @_bottleneck_fused_kernel(%arg0: i32, %arg1: i32, %arg2: memref<1x16x24x4xbf16, #tpu.memory_space<vmem>>, %arg3: memref<1x1x3x24x4xbf16, #tpu.memory_space<vmem>>, %arg4: memref<4x4xbf16, #tpu.memory_space<vmem>>, %arg5: memref<1x4xf32, #tpu.memory_space<vmem>>, %arg6: memref<36x4xbf16, #tpu.memory_space<vmem>>, %arg7: memref<1x4xf32, #tpu.memory_space<vmem>>, %arg8: memref<4x8xbf16, #tpu.memory_space<vmem>>, %arg9: memref<1x8xf32, #tpu.memory_space<vmem>>, %arg10: memref<4x8xbf16, #tpu.memory_space<vmem>>, %arg11: memref<1x8xf32, #tpu.memory_space<vmem>>, %arg12: memref<1x16x24x8xf32, #tpu.memory_space<vmem>>) attributes {dimension_semantics = [#tpu.dimension_semantics<parallel>, #tpu.dimension_semantics<parallel>], iteration_bounds = array<i64: 2, 1>, scalar_prefetch = 0 : i64, scratch_operands = 0 : i64, tpu.core_type = #tpu.core_type<tc>, window_params = [{transform_indices = @transform_0, window_bounds = array<i64: 1, 16, 24, 4>}, {transform_indices = @transform_1, window_bounds = array<i64: 1, 1, 3, 24, 4>}, {pipeline_mode = #tpu.pipeline_mode<synchronous>, transform_indices = @transform_2, window_bounds = array<i64: 4, 4>}, {pipeline_mode = #tpu.pipeline_mode<synchronous>, transform_indices = @transform_3, window_bounds = array<i64: 1, 4>}, {pipeline_mode = #tpu.pipeline_mode<synchronous>, transform_indices = @transform_4, window_bounds = array<i64: 36, 4>}, {pipeline_mode = #tpu.pipeline_mode<synchronous>, transform_indices = @transform_5, window_bounds = array<i64: 1, 4>}, {pipeline_mode = #tpu.pipeline_mode<synchronous>, transform_indices = @transform_6, window_bounds = array<i64: 4, 8>}, {pipeline_mode = #tpu.pipeline_mode<synchronous>, transform_indices = @transform_7, window_bounds = array<i64: 1, 8>}, {pipeline_mode = #tpu.pipeline_mode<synchronous>, transform_indices = @transform_8, window_bounds = array<i64: 4, 8>}, {pipeline_mode = #tpu.pipeline_mode<synchronous>, transform_indices = @transform_9, window_bounds = array<i64: 1, 8>}, {transform_indices = @transform_10, window_bounds = array<i64: 1, 16, 24, 8>}]} {
    %c0 = arith.constant 0 : index
    %c0_0 = arith.constant 0 : index
    %c0_1 = arith.constant 0 : index
    %c0_2 = arith.constant 0 : index
    %c0_3 = arith.constant 0 : index
    %0 = vector.load %arg3[%c0, %c0_0, %c0_1, %c0_2, %c0_3] : memref<1x1x3x24x4xbf16, #tpu.memory_space<vmem>>, vector<1x1x3x24x4xbf16>
    %1 = vector.shape_cast %0 : vector<1x1x3x24x4xbf16> to vector<3x24x4xbf16>
    %2 = vector.extract_strided_slice %1 {offsets = [0, 0, 0], sizes = [1, 24, 4], strides = [1, 1, 1]} : vector<3x24x4xbf16> to vector<1x24x4xbf16>
    %c0_4 = arith.constant 0 : index
    %c0_5 = arith.constant 0 : index
    %c0_6 = arith.constant 0 : index
    %c0_7 = arith.constant 0 : index
    %3 = vector.load %arg2[%c0_4, %c0_5, %c0_6, %c0_7] : memref<1x16x24x4xbf16, #tpu.memory_space<vmem>>, vector<1x16x24x4xbf16>
    %4 = vector.shape_cast %3 : vector<1x16x24x4xbf16> to vector<16x24x4xbf16>
    %5 = vector.extract_strided_slice %1 {offsets = [1, 0, 0], sizes = [2, 24, 4], strides = [1, 1, 1]} : vector<3x24x4xbf16> to vector<2x24x4xbf16>
    %6 = tpu.concatenate %2, %4, %5 in 0 : vector<1x24x4xbf16>, vector<16x24x4xbf16>, vector<2x24x4xbf16> -> vector<19x24x4xbf16>
    %7 = vector.shape_cast %6 : vector<19x24x4xbf16> to vector<456x4xbf16>
    %c0_8 = arith.constant 0 : index
    %c0_9 = arith.constant 0 : index
    %8 = vector.load %arg4[%c0_8, %c0_9] : memref<4x4xbf16, #tpu.memory_space<vmem>>, vector<4x4xbf16>
    %cst = arith.constant dense<0.000000e+00> : vector<456x4xf32>
    %9 = tpu.matmul %7, %8, %cst {dimension_numbers = #tpu.dot_dimension_numbers<[1], [0], [0], [1], [0, 0, 1, 1], [], []>} : vector<456x4xbf16>, vector<4x4xbf16>, vector<456x4xf32> -> vector<456x4xf32>
    %c0_10 = arith.constant 0 : index
    %c0_11 = arith.constant 0 : index
    %10 = vector.load %arg5[%c0_10, %c0_11] : memref<1x4xf32, #tpu.memory_space<vmem>>, vector<1x4xf32>
    %11 = vector.broadcast %10 : vector<1x4xf32> to vector<456x4xf32>
    %12 = arith.addf %9, %11 : vector<456x4xf32>
    %cst_12 = arith.constant 0.000000e+00 : f32
    %13 = vector.broadcast %cst_12 : f32 to vector<456x4xf32>
    %14 = arith.maximumf %12, %13 : vector<456x4xf32>
    %15 = tpu.iota {dimensions = array<i32: 0>} : vector<19x24x1xi32>
    %c16_i32 = arith.constant 16 : i32
    %16 = arith.muli %arg1, %c16_i32 : i32
    %17 = vector.broadcast %16 : i32 to vector<19x24x1xi32>
    %18 = arith.addi %15, %17 : vector<19x24x1xi32>
    %19 = tpu.iota {dimensions = array<i32: 1>} : vector<19x24x1xi32>
    %c1_i32 = arith.constant 1 : i32
    %20 = vector.broadcast %c1_i32 : i32 to vector<19x24x1xi32>
    %21 = arith.cmpi sge, %18, %20 : vector<19x24x1xi32>
    %c16_i32_13 = arith.constant 16 : i32
    %22 = vector.broadcast %c16_i32_13 : i32 to vector<19x24x1xi32>
    %23 = arith.cmpi sle, %18, %22 : vector<19x24x1xi32>
    %24 = arith.andi %21, %23 : vector<19x24x1xi1>
    %c1_i32_14 = arith.constant 1 : i32
    %25 = vector.broadcast %c1_i32_14 : i32 to vector<19x24x1xi32>
    %26 = arith.cmpi sge, %19, %25 : vector<19x24x1xi32>
    %27 = arith.andi %24, %26 : vector<19x24x1xi1>
    %c16_i32_15 = arith.constant 16 : i32
    %28 = vector.broadcast %c16_i32_15 : i32 to vector<19x24x1xi32>
    %29 = arith.cmpi sle, %19, %28 : vector<19x24x1xi32>
    %30 = arith.andi %27, %29 : vector<19x24x1xi1>
    %31 = vector.shape_cast %14 : vector<456x4xf32> to vector<19x24x4xf32>
    %cst_16 = arith.constant 0.000000e+00 : f32
    %32 = vector.shape_cast %30 : vector<19x24x1xi1> to vector<19x24x1xi1>
    %33 = vector.broadcast %32 : vector<19x24x1xi1> to vector<19x24x4xi1>
    %34 = vector.broadcast %cst_16 : f32 to vector<19x24x4xf32>
    %35 = arith.select %33, %31, %34 : vector<19x24x4xi1>, vector<19x24x4xf32>
    %36 = arith.truncf %35 : vector<19x24x4xf32> to vector<19x24x4xbf16>
    %37 = vector.shape_cast %36 : vector<19x24x4xbf16> to vector<456x4xbf16>
    %38 = vector.extract_strided_slice %37 {offsets = [0, 0], sizes = [432, 4], strides = [1, 1]} : vector<456x4xbf16> to vector<432x4xbf16>
    %39 = vector.extract_strided_slice %37 {offsets = [1, 0], sizes = [432, 4], strides = [1, 1]} : vector<456x4xbf16> to vector<432x4xbf16>
    %40 = vector.extract_strided_slice %37 {offsets = [2, 0], sizes = [432, 4], strides = [1, 1]} : vector<456x4xbf16> to vector<432x4xbf16>
    %41 = vector.extract_strided_slice %38 {offsets = [0, 0], sizes = [384, 4], strides = [1, 1]} : vector<432x4xbf16> to vector<384x4xbf16>
    %42 = vector.extract_strided_slice %39 {offsets = [0, 0], sizes = [384, 4], strides = [1, 1]} : vector<432x4xbf16> to vector<384x4xbf16>
    %43 = vector.extract_strided_slice %40 {offsets = [0, 0], sizes = [384, 4], strides = [1, 1]} : vector<432x4xbf16> to vector<384x4xbf16>
    %44 = vector.extract_strided_slice %38 {offsets = [24, 0], sizes = [384, 4], strides = [1, 1]} : vector<432x4xbf16> to vector<384x4xbf16>
    %45 = vector.extract_strided_slice %39 {offsets = [24, 0], sizes = [384, 4], strides = [1, 1]} : vector<432x4xbf16> to vector<384x4xbf16>
    %46 = vector.extract_strided_slice %40 {offsets = [24, 0], sizes = [384, 4], strides = [1, 1]} : vector<432x4xbf16> to vector<384x4xbf16>
    %47 = vector.extract_strided_slice %38 {offsets = [48, 0], sizes = [384, 4], strides = [1, 1]} : vector<432x4xbf16> to vector<384x4xbf16>
    %48 = vector.extract_strided_slice %39 {offsets = [48, 0], sizes = [384, 4], strides = [1, 1]} : vector<432x4xbf16> to vector<384x4xbf16>
    %49 = vector.extract_strided_slice %40 {offsets = [48, 0], sizes = [384, 4], strides = [1, 1]} : vector<432x4xbf16> to vector<384x4xbf16>
    %50 = tpu.concatenate %41, %42, %43, %44, %45, %46, %47, %48, %49 in 1 : vector<384x4xbf16>, vector<384x4xbf16>, vector<384x4xbf16>, vector<384x4xbf16>, vector<384x4xbf16>, vector<384x4xbf16>, vector<384x4xbf16>, vector<384x4xbf16>, vector<384x4xbf16> -> vector<384x36xbf16>
    %c0_17 = arith.constant 0 : index
    %c0_18 = arith.constant 0 : index
    %51 = vector.load %arg6[%c0_17, %c0_18] : memref<36x4xbf16, #tpu.memory_space<vmem>>, vector<36x4xbf16>
    %cst_19 = arith.constant dense<0.000000e+00> : vector<384x4xf32>
    %52 = tpu.matmul %50, %51, %cst_19 {dimension_numbers = #tpu.dot_dimension_numbers<[1], [0], [0], [1], [0, 0, 1, 1], [], []>} : vector<384x36xbf16>, vector<36x4xbf16>, vector<384x4xf32> -> vector<384x4xf32>
    %c0_20 = arith.constant 0 : index
    %c0_21 = arith.constant 0 : index
    %53 = vector.load %arg7[%c0_20, %c0_21] : memref<1x4xf32, #tpu.memory_space<vmem>>, vector<1x4xf32>
    %54 = vector.broadcast %53 : vector<1x4xf32> to vector<384x4xf32>
    %55 = arith.addf %52, %54 : vector<384x4xf32>
    %cst_22 = arith.constant 0.000000e+00 : f32
    %56 = vector.broadcast %cst_22 : f32 to vector<384x4xf32>
    %57 = arith.maximumf %55, %56 : vector<384x4xf32>
    %58 = arith.truncf %57 : vector<384x4xf32> to vector<384x4xbf16>
    %c0_23 = arith.constant 0 : index
    %c0_24 = arith.constant 0 : index
    %59 = vector.load %arg8[%c0_23, %c0_24] : memref<4x8xbf16, #tpu.memory_space<vmem>>, vector<4x8xbf16>
    %cst_25 = arith.constant dense<0.000000e+00> : vector<384x8xf32>
    %60 = tpu.matmul %58, %59, %cst_25 {dimension_numbers = #tpu.dot_dimension_numbers<[1], [0], [0], [1], [0, 0, 1, 1], [], []>} : vector<384x4xbf16>, vector<4x8xbf16>, vector<384x8xf32> -> vector<384x8xf32>
    %c0_26 = arith.constant 0 : index
    %c0_27 = arith.constant 0 : index
    %61 = vector.load %arg9[%c0_26, %c0_27] : memref<1x8xf32, #tpu.memory_space<vmem>>, vector<1x8xf32>
    %62 = vector.broadcast %61 : vector<1x8xf32> to vector<384x8xf32>
    %63 = arith.addf %60, %62 : vector<384x8xf32>
    %cst_28 = arith.constant 0.000000e+00 : f32
    %64 = vector.broadcast %cst_28 : f32 to vector<384x8xf32>
    %65 = arith.maximumf %63, %64 : vector<384x8xf32>
    %66 = vector.extract_strided_slice %7 {offsets = [25, 0], sizes = [384, 4], strides = [1, 1]} : vector<456x4xbf16> to vector<384x4xbf16>
    %c0_29 = arith.constant 0 : index
    %c0_30 = arith.constant 0 : index
    %67 = vector.load %arg10[%c0_29, %c0_30] : memref<4x8xbf16, #tpu.memory_space<vmem>>, vector<4x8xbf16>
    %cst_31 = arith.constant dense<0.000000e+00> : vector<384x8xf32>
    %68 = tpu.matmul %66, %67, %cst_31 {dimension_numbers = #tpu.dot_dimension_numbers<[1], [0], [0], [1], [0, 0, 1, 1], [], []>} : vector<384x4xbf16>, vector<4x8xbf16>, vector<384x8xf32> -> vector<384x8xf32>
    %c0_32 = arith.constant 0 : index
    %c0_33 = arith.constant 0 : index
    %69 = vector.load %arg11[%c0_32, %c0_33] : memref<1x8xf32, #tpu.memory_space<vmem>>, vector<1x8xf32>
    %70 = vector.broadcast %69 : vector<1x8xf32> to vector<384x8xf32>
    %71 = arith.addf %68, %70 : vector<384x8xf32>
    %72 = arith.addf %65, %71 : vector<384x8xf32>
    %73 = vector.shape_cast %72 : vector<384x8xf32> to vector<16x24x8xf32>
    %c0_34 = arith.constant 0 : index
    %c0_35 = arith.constant 0 : index
    %c0_36 = arith.constant 0 : index
    %c0_37 = arith.constant 0 : index
    %74 = vector.load %arg12[%c0_34, %c0_35, %c0_36, %c0_37] : memref<1x16x24x8xf32, #tpu.memory_space<vmem>>, vector<1x16x24x8xf32>
    %75 = vector.shape_cast %74 : vector<1x16x24x8xf32> to vector<16x24x8xf32>
    %76 = vector.shape_cast %73 : vector<16x24x8xf32> to vector<1x16x24x8xf32>
    tpu.vector_store %arg12[%c0_34, %c0_35, %c0_36, %c0_37], %76 {strides = array<i32>} : memref<1x16x24x8xf32, #tpu.memory_space<vmem>>, vector<1x16x24x8xf32>,
    return
  }
  func.func @transform_0(%arg0: i32, %arg1: i32) -> (i32, i32, i32, i32) {
    %c0_i32 = arith.constant 0 : i32
    %c0_i32_0 = arith.constant 0 : i32
    %c0_i32_1 = arith.constant 0 : i32
    return %arg0, %arg1, %c0_i32, %c0_i32_0 : i32, i32, i32, i32
  }
  func.func @transform_1(%arg0: i32, %arg1: i32) -> (i32, i32, i32, i32, i32) {
    %c0_i32 = arith.constant 0 : i32
    %c0_i32_0 = arith.constant 0 : i32
    %c0_i32_1 = arith.constant 0 : i32
    %c0_i32_2 = arith.constant 0 : i32
    return %arg0, %arg1, %c0_i32, %c0_i32_0, %c0_i32_1 : i32, i32, i32, i32, i32
  }
  func.func @transform_2(%arg0: i32, %arg1: i32) -> (i32, i32) {
    %c0_i32 = arith.constant 0 : i32
    %c0_i32_0 = arith.constant 0 : i32
    %c0_i32_1 = arith.constant 0 : i32
    return %c0_i32, %c0_i32_0 : i32, i32
  }
  func.func @transform_3(%arg0: i32, %arg1: i32) -> (i32, i32) {
    %c0_i32 = arith.constant 0 : i32
    %c0_i32_0 = arith.constant 0 : i32
    %c0_i32_1 = arith.constant 0 : i32
    return %c0_i32, %c0_i32_0 : i32, i32
  }
  func.func @transform_4(%arg0: i32, %arg1: i32) -> (i32, i32) {
    %c0_i32 = arith.constant 0 : i32
    %c0_i32_0 = arith.constant 0 : i32
    %c0_i32_1 = arith.constant 0 : i32
    return %c0_i32, %c0_i32_0 : i32, i32
  }
  func.func @transform_5(%arg0: i32, %arg1: i32) -> (i32, i32) {
    %c0_i32 = arith.constant 0 : i32
    %c0_i32_0 = arith.constant 0 : i32
    %c0_i32_1 = arith.constant 0 : i32
    return %c0_i32, %c0_i32_0 : i32, i32
  }
  func.func @transform_6(%arg0: i32, %arg1: i32) -> (i32, i32) {
    %c0_i32 = arith.constant 0 : i32
    %c0_i32_0 = arith.constant 0 : i32
    %c0_i32_1 = arith.constant 0 : i32
    return %c0_i32, %c0_i32_0 : i32, i32
  }
  func.func @transform_7(%arg0: i32, %arg1: i32) -> (i32, i32) {
    %c0_i32 = arith.constant 0 : i32
    %c0_i32_0 = arith.constant 0 : i32
    %c0_i32_1 = arith.constant 0 : i32
    return %c0_i32, %c0_i32_0 : i32, i32
  }
  func.func @transform_8(%arg0: i32, %arg1: i32) -> (i32, i32) {
    %c0_i32 = arith.constant 0 : i32
    %c0_i32_0 = arith.constant 0 : i32
    %c0_i32_1 = arith.constant 0 : i32
    return %c0_i32, %c0_i32_0 : i32, i32
  }
  func.func @transform_9(%arg0: i32, %arg1: i32) -> (i32, i32) {
    %c0_i32 = arith.constant 0 : i32
    %c0_i32_0 = arith.constant 0 : i32
    %c0_i32_1 = arith.constant 0 : i32
    return %c0_i32, %c0_i32_0 : i32, i32
  }
  func.func @transform_10(%arg0: i32, %arg1: i32) -> (i32, i32, i32, i32) {
    %c0_i32 = arith.constant 0 : i32
    %c0_i32_0 = arith.constant 0 : i32
    %c0_i32_1 = arith.constant 0 : i32
    return %arg0, %arg1, %c0_i32, %c0_i32_0 : i32, i32, i32, i32
  }
}

</mosaic_0001>

<llo_original>
// kernel: bottleneck_forward.1
$region0: #{bottleneck_forward.1}
  #allocation0 [shape = 'u32[]', space=smem, size = 0x4, offset = 0x4, fixed_abs, tag = 'smem constant byte address 0x4 - core index']
  #allocation1 [shape = 'u32[144,128]{1,0:T(1,128)}', space=vmem, size = 0x12000, scoped, tag = 'internal scratch']
  %s0 = inlined_call_operand.vmem [shape: bf16[2,16,24,4], index: 0, kind: input, shape index: {}]
  %s1 = inlined_call_operand.vmem [shape: bf16[2,1,3,24,4], index: 1, kind: input, shape index: {}]
  %s2 = inlined_call_operand.vmem [shape: bf16[4,4], index: 2, kind: input, shape index: {}]
  %s3 = inlined_call_operand.vmem [shape: f32[1,4], index: 3, kind: input, shape index: {}]
  %s4 = inlined_call_operand.vmem [shape: bf16[36,4], index: 4, kind: input, shape index: {}]
  %s5 = inlined_call_operand.vmem [shape: f32[1,4], index: 5, kind: input, shape index: {}]
  %s6 = inlined_call_operand.vmem [shape: bf16[4,8], index: 6, kind: input, shape index: {}]
  %s7 = inlined_call_operand.vmem [shape: f32[1,8], index: 7, kind: input, shape index: {}]
  %s8 = inlined_call_operand.vmem [shape: bf16[4,8], index: 8, kind: input, shape index: {}]
  %s9 = inlined_call_operand.vmem [shape: f32[1,8], index: 9, kind: input, shape index: {}]
  %s10 = inlined_call_operand.vmem [shape: f32[2,16,24,8], index: 10, kind: output, shape index: {}]
  %s11 = sld [smem:[#allocation0]]
  $region73: #{bottleneck_forward.1} parent=0
    _
  %s13 = ssub.s32 1, %s11
  %s14 = scalar_select 0, %s13, %s11
  loop: start=0, step=1, limit=4
  $region2: #{bottleneck_forward.1} parent=0 // loop_pre_header
    _
  $region3: #{bottleneck_forward.1} parent=0 // loop_header
    %s16 = sphi 0, %s20
    %p17 = scmp.ge.s32.totalorder %s16, 4
    %s23 = sphi 0, %s35
    %s24 = sphi 0, %s31
    %s25 = sphi 0, %s23
    %s26 = sphi 0, %s24
    %s27 = sphi 0, %s25
    %s28 = sphi 0, %s26
    %s40 = sphi 0, %s42
    %s43 = sphi 0, %s40
    %s44 = sphi 0, %s43
    %s60 = sphi 0, %s44
    %s68 = sphi 0, %s70
    %s71 = sphi 0, %s68
    %s72 = sphi 0, %s71
    %s88 = sphi 0, %s72
    %s92 = sphi 0, %s92
    %s94 = sphi 0, %s92
    %s95 = sphi 0, %s94
    %s109 = sphi 0, %s95
    %s113 = sphi 0, %s113
    %s115 = sphi 0, %s113
    %s116 = sphi 0, %s115
    %s130 = sphi 0, %s116
    %s134 = sphi 0, %s134
    %s136 = sphi 0, %s134
    %s137 = sphi 0, %s136
    %s151 = sphi 0, %s137
    %s155 = sphi 0, %s155
    %s157 = sphi 0, %s155
    %s158 = sphi 0, %s157
    %s172 = sphi 0, %s158
    %s176 = sphi 0, %s176
    %s178 = sphi 0, %s176
    %s179 = sphi 0, %s178
    %s193 = sphi 0, %s179
    %s197 = sphi 0, %s197
    %s199 = sphi 0, %s197
    %s200 = sphi 0, %s199
    %s214 = sphi 0, %s200
    %s218 = sphi 0, %s218
    %s220 = sphi 0, %s218
    %s221 = sphi 0, %s220
    %s235 = sphi 0, %s221
    %s239 = sphi 0, %s239
    %s241 = sphi 0, %s239
    %s242 = sphi 0, %s241
    %s256 = sphi 0, %s242
    %s264 = sphi 0, %s266
    %s267 = sphi 0, %s264
    %s268 = sphi 0, %s267
    %s284 = sphi 0, %s268
  $region4: #{bottleneck_forward.1} parent=0 // loop_header_branch
    %19 = sbr.rel (%p17) target = $region8
  $region5: #{bottleneck_forward.1} parent=0 // loop_body
    %s21 = ssub.s32 %s16, 1
    %s22 = ssub.s32 %s16, 2
    %s29 = sadd.s32 1, %s24
    %p30 = scmp.ge.s32.totalorder %s29, 1
    %s31 = scalar_select %p30, 0, %s29
    %s32 = sadd.s32 1, %s23
    %s33 = scalar_select %p30, %s32, %s23
    %p34 = scmp.ge.s32.totalorder %s33, 2
    %s35 = scalar_select %p34, 0, %s33
    %s36 = ssub.s32 %s23, %s35
    %s37 = ssub.s32 %s24, %s31
    %s38 = sor.u32 %s36, %s37
    %p39 = scmp.eq.s32.totalorder %s38, 0
    %s41 = sadd.s32 %s40, 1
    %s42 = scalar_select %p39, %s40, %s41
    %p45 = pneg %p39
    %p46 = scmp.eq.s32.totalorder %s16, 1
    %p47 = por %p45, %p46
    %p48 = scmp.ne.s32.totalorder %s40, %s43
    %p49 = scmp.eq.s32.totalorder %s16, 0
    %p50 = por %p48, %p49
    %p51 = scmp.ne.s32.totalorder %s40, %s43
    %p52 = scmp.eq.s32.totalorder %s21, 1
    %p53 = por %p51, %p52
    %p54 = scmp.ne.s32.totalorder %s43, %s44
    %p55 = scmp.eq.s32.totalorder %s21, 0
    %p56 = por %p54, %p55
    %p57 = scmp.ne.s32.totalorder %s43, %s44
    %p58 = scmp.eq.s32.totalorder %s22, 1
    %p59 = por %p57, %p58
    %p61 = scmp.ne.s32.totalorder %s44, %s60
    %p62 = scmp.eq.s32.totalorder %s22, 0
    %p63 = por %p61, %p62
    %s64 = ssub.s32 %s23, %s35
    %s65 = ssub.s32 %s24, %s31
    %s66 = sor.u32 %s64, %s65
    %p67 = scmp.eq.s32.totalorder %s66, 0
    %s69 = sadd.s32 %s68, 1
    %s70 = scalar_select %p67, %s68, %s69
    %p73 = pneg %p67
    %p74 = scmp.eq.s32.totalorder %s16, 1
    %p75 = por %p73, %p74
    %p76 = scmp.ne.s32.totalorder %s68, %s71
    %p77 = scmp.eq.s32.totalorder %s16, 0
    %p78 = por %p76, %p77
    %p79 = scmp.ne.s32.totalorder %s68, %s71
    %p80 = scmp.eq.s32.totalorder %s21, 1
    %p81 = por %p79, %p80
    %p82 = scmp.ne.s32.totalorder %s71, %s72
    %p83 = scmp.eq.s32.totalorder %s21, 0
    %p84 = por %p82, %p83
    %p85 = scmp.ne.s32.totalorder %s71, %s72
    %p86 = scmp.eq.s32.totalorder %s22, 1
    %p87 = por %p85, %p86
    %p89 = scmp.ne.s32.totalorder %s72, %s88
    %p90 = scmp.eq.s32.totalorder %s22, 0
    %p91 = por %p89, %p90
    %s93 = sadd.s32 %s92, 1
    %p96 = scmp.eq.s32.totalorder %s16, 1
    %p97 = scmp.ne.s32.totalorder %s92, %s94
    %p98 = scmp.eq.s32.totalorder %s16, 0
    %p99 = por %p97, %p98
    %p100 = scmp.ne.s32.totalorder %s92, %s94
    %p101 = scmp.eq.s32.totalorder %s21, 1
    %p102 = por %p100, %p101
    %p103 = scmp.ne.s32.totalorder %s94, %s95
    %p104 = scmp.eq.s32.totalorder %s21, 0
    %p105 = por %p103, %p104
    %p106 = scmp.ne.s32.totalorder %s94, %s95
    %p107 = scmp.eq.s32.totalorder %s22, 1
    %p108 = por %p106, %p107
    %p110 = scmp.ne.s32.totalorder %s95, %s109
    %p111 = scmp.eq.s32.totalorder %s22, 0
    %p112 = por %p110, %p111
    %s114 = sadd.s32 %s113, 1
    %p117 = scmp.eq.s32.totalorder %s16, 1
    %p118 = scmp.ne.s32.totalorder %s113, %s115
    %p119 = scmp.eq.s32.totalorder %s16, 0
    %p120 = por %p118, %p119
    %p121 = scmp.ne.s32.totalorder %s113, %s115
    %p122 = scmp.eq.s32.totalorder %s21, 1
    %p123 = por %p121, %p122
    %p124 = scmp.ne.s32.totalorder %s115, %s116
    %p125 = scmp.eq.s32.totalorder %s21, 0
    %p126 = por %p124, %p125
    %p127 = scmp.ne.s32.totalorder %s115, %s116
    %p128 = scmp.eq.s32.totalorder %s22, 1
    %p129 = por %p127, %p128
    %p131 = scmp.ne.s32.totalorder %s116, %s130
    %p132 = scmp.eq.s32.totalorder %s22, 0
    %p133 = por %p131, %p132
    %s135 = sadd.s32 %s134, 1
    %p138 = scmp.eq.s32.totalorder %s16, 1
    %p139 = scmp.ne.s32.totalorder %s134, %s136
    %p140 = scmp.eq.s32.totalorder %s16, 0
    %p141 = por %p139, %p140
    %p142 = scmp.ne.s32.totalorder %s134, %s136
    %p143 = scmp.eq.s32.totalorder %s21, 1
    %p144 = por %p142, %p143
    %p145 = scmp.ne.s32.totalorder %s136, %s137
    %p146 = scmp.eq.s32.totalorder %s21, 0
    %p147 = por %p145, %p146
    %p148 = scmp.ne.s32.totalorder %s136, %s137
    %p149 = scmp.eq.s32.totalorder %s22, 1
    %p150 = por %p148, %p149
    %p152 = scmp.ne.s32.totalorder %s137, %s151
    %p153 = scmp.eq.s32.totalorder %s22, 0
    %p154 = por %p152, %p153
    %s156 = sadd.s32 %s155, 1
    %p159 = scmp.eq.s32.totalorder %s16, 1
    %p160 = scmp.ne.s32.totalorder %s155, %s157
    %p161 = scmp.eq.s32.totalorder %s16, 0
    %p162 = por %p160, %p161
    %p163 = scmp.ne.s32.totalorder %s155, %s157
    %p164 = scmp.eq.s32.totalorder %s21, 1
    %p165 = por %p163, %p164
    %p166 = scmp.ne.s32.totalorder %s157, %s158
    %p167 = scmp.eq.s32.totalorder %s21, 0
    %p168 = por %p166, %p167
    %p169 = scmp.ne.s32.totalorder %s157, %s158
    %p170 = scmp.eq.s32.totalorder %s22, 1
    %p171 = por %p169, %p170
    %p173 = scmp.ne.s32.totalorder %s158, %s172
    %p174 = scmp.eq.s32.totalorder %s22, 0
    %p175 = por %p173, %p174
    %s177 = sadd.s32 %s176, 1
    %p180 = scmp.eq.s32.totalorder %s16, 1
    %p181 = scmp.ne.s32.totalorder %s176, %s178
    %p182 = scmp.eq.s32.totalorder %s16, 0
    %p183 = por %p181, %p182
    %p184 = scmp.ne.s32.totalorder %s176, %s178
    %p185 = scmp.eq.s32.totalorder %s21, 1
    %p186 = por %p184, %p185
    %p187 = scmp.ne.s32.totalorder %s178, %s179
    %p188 = scmp.eq.s32.totalorder %s21, 0
    %p189 = por %p187, %p188
    %p190 = scmp.ne.s32.totalorder %s178, %s179
    %p191 = scmp.eq.s32.totalorder %s22, 1
    %p192 = por %p190, %p191
    %p194 = scmp.ne.s32.totalorder %s179, %s193
    %p195 = scmp.eq.s32.totalorder %s22, 0
    %p196 = por %p194, %p195
    %s198 = sadd.s32 %s197, 1
    %p201 = scmp.eq.s32.totalorder %s16, 1
    %p202 = scmp.ne.s32.totalorder %s197, %s199
    %p203 = scmp.eq.s32.totalorder %s16, 0
    %p204 = por %p202, %p203
    %p205 = scmp.ne.s32.totalorder %s197, %s199
    %p206 = scmp.eq.s32.totalorder %s21, 1
    %p207 = por %p205, %p206
    %p208 = scmp.ne.s32.totalorder %s199, %s200
    %p209 = scmp.eq.s32.totalorder %s21, 0
    %p210 = por %p208, %p209
    %p211 = scmp.ne.s32.totalorder %s199, %s200
    %p212 = scmp.eq.s32.totalorder %s22, 1
    %p213 = por %p211, %p212
    %p215 = scmp.ne.s32.totalorder %s200, %s214
    %p216 = scmp.eq.s32.totalorder %s22, 0
    %p217 = por %p215, %p216
    %s219 = sadd.s32 %s218, 1
    %p222 = scmp.eq.s32.totalorder %s16, 1
    %p223 = scmp.ne.s32.totalorder %s218, %s220
    %p224 = scmp.eq.s32.totalorder %s16, 0
    %p225 = por %p223, %p224
    %p226 = scmp.ne.s32.totalorder %s218, %s220
    %p227 = scmp.eq.s32.totalorder %s21, 1
    %p228 = por %p226, %p227
    %p229 = scmp.ne.s32.totalorder %s220, %s221
    %p230 = scmp.eq.s32.totalorder %s21, 0
    %p231 = por %p229, %p230
    %p232 = scmp.ne.s32.totalorder %s220, %s221
    %p233 = scmp.eq.s32.totalorder %s22, 1
    %p234 = por %p232, %p233
    %p236 = scmp.ne.s32.totalorder %s221, %s235
    %p237 = scmp.eq.s32.totalorder %s22, 0
    %p238 = por %p236, %p237
    %s240 = sadd.s32 %s239, 1
    %p243 = scmp.eq.s32.totalorder %s16, 1
    %p244 = scmp.ne.s32.totalorder %s239, %s241
    %p245 = scmp.eq.s32.totalorder %s16, 0
    %p246 = por %p244, %p245
    %p247 = scmp.ne.s32.totalorder %s239, %s241
    %p248 = scmp.eq.s32.totalorder %s21, 1
    %p249 = por %p247, %p248
    %p250 = scmp.ne.s32.totalorder %s241, %s242
    %p251 = scmp.eq.s32.totalorder %s21, 0
    %p252 = por %p250, %p251
    %p253 = scmp.ne.s32.totalorder %s241, %s242
    %p254 = scmp.eq.s32.totalorder %s22, 1
    %p255 = por %p253, %p254
    %p257 = scmp.ne.s32.totalorder %s242, %s256
    %p258 = scmp.eq.s32.totalorder %s22, 0
    %p259 = por %p257, %p258
    %s260 = ssub.s32 %s23, %s35
    %s261 = ssub.s32 %s24, %s31
    %s262 = sor.u32 %s260, %s261
    %p263 = scmp.eq.s32.totalorder %s262, 0
    %s265 = sadd.s32 %s264, 1
    %s266 = scalar_select %p263, %s264, %s265
    %p269 = pneg %p263
    %p270 = scmp.eq.s32.totalorder %s16, 1
    %p271 = por %p269, %p270
    %p272 = scmp.ne.s32.totalorder %s264, %s267
    %p273 = scmp.eq.s32.totalorder %s16, 0
    %p274 = por %p272, %p273
    %p275 = scmp.ne.s32.totalorder %s264, %s267
    %p276 = scmp.eq.s32.totalorder %s21, 1
    %p277 = por %p275, %p276
    %p278 = scmp.ne.s32.totalorder %s267, %s268
    %p279 = scmp.eq.s32.totalorder %s21, 0
    %p280 = por %p278, %p279
    %p281 = scmp.ne.s32.totalorder %s267, %s268
    %p282 = scmp.eq.s32.totalorder %s22, 1
    %p283 = por %p281, %p282
    %p285 = scmp.ne.s32.totalorder %s268, %s284
    %p286 = scmp.eq.s32.totalorder %s22, 0
    %p287 = por %p285, %p286
    %p288 = scmp.le.s32.totalorder 1, %s16
    %p289 = scmp.lt.s32.totalorder %s16, 3
    %p290 = pnand %p288, %p289
    %p291 = pneg %p290
    // Predicated region
    $region9: #{bottleneck_forward.1} parent=5 // pred_check
      _
    $region10: #{bottleneck_forward.1} parent=5 // pred_check_branch
      %293 = sbr.rel (%p290) target = $region12
    $region11: #{bottleneck_forward.1} parent=5 // pred_region
      %s294 = ssub.s32 %s16, 1
      // Predicated region
      $region13: #{bottleneck_forward.1} parent=11 // pred_check
        %p295 = pneg %p105
      $region14: #{bottleneck_forward.1} parent=11 // pred_check_branch
        %297 = sbr.rel (%p295) target = $region16
      $region15: #{bottleneck_forward.1} parent=11 // pred_region
        _
      $region16: #{bottleneck_forward.1} parent=11 // pred_fallthru
        _
      // Predicated region
      $region17: #{bottleneck_forward.1} parent=11 // pred_check
        %p298 = pneg %p126
      $region18: #{bottleneck_forward.1} parent=11 // pred_check_branch
        %300 = sbr.rel (%p298) target = $region20
      $region19: #{bottleneck_forward.1} parent=11 // pred_region
        _
      $region20: #{bottleneck_forward.1} parent=11 // pred_fallthru
        _
      // Predicated region
      $region21: #{bottleneck_forward.1} parent=11 // pred_check
        %p301 = pneg %p147
      $region22: #{bottleneck_forward.1} parent=11 // pred_check_branch
        %303 = sbr.rel (%p301) target = $region24
      $region23: #{bottleneck_forward.1} parent=11 // pred_region
        _
      $region24: #{bottleneck_forward.1} parent=11 // pred_fallthru
        _
      // Predicated region
      $region25: #{bottleneck_forward.1} parent=11 // pred_check
        %p304 = pneg %p168
      $region26: #{bottleneck_forward.1} parent=11 // pred_check_branch
        %306 = sbr.rel (%p304) target = $region28
      $region27: #{bottleneck_forward.1} parent=11 // pred_region
        _
      $region28: #{bottleneck_forward.1} parent=11 // pred_fallthru
        _
      // Predicated region
      $region29: #{bottleneck_forward.1} parent=11 // pred_check
        %p307 = pneg %p189
      $region30: #{bottleneck_forward.1} parent=11 // pred_check_branch
        %309 = sbr.rel (%p307) target = $region32
      $region31: #{bottleneck_forward.1} parent=11 // pred_region
        _
      $region32: #{bottleneck_forward.1} parent=11 // pred_fallthru
        _
      // Predicated region
      $region33: #{bottleneck_forward.1} parent=11 // pred_check
        %p310 = pneg %p210
      $region34: #{bottleneck_forward.1} parent=11 // pred_check_branch
        %312 = sbr.rel (%p310) target = $region36
      $region35: #{bottleneck_forward.1} parent=11 // pred_region
        _
      $region36: #{bottleneck_forward.1} parent=11 // pred_fallthru
        _
      // Predicated region
      $region37: #{bottleneck_forward.1} parent=11 // pred_check
        %p313 = pneg %p231
      $region38: #{bottleneck_forward.1} parent=11 // pred_check_branch
        %315 = sbr.rel (%p313) target = $region40
      $region39: #{bottleneck_forward.1} parent=11 // pred_region
        _
      $region40: #{bottleneck_forward.1} parent=11 // pred_fallthru
        _
      // Predicated region
      $region41: #{bottleneck_forward.1} parent=11 // pred_check
        %p316 = pneg %p252
      $region42: #{bottleneck_forward.1} parent=11 // pred_check_branch
        %318 = sbr.rel (%p316) target = $region44
      $region43: #{bottleneck_forward.1} parent=11 // pred_region
        _
      $region44: #{bottleneck_forward.1} parent=11 // pred_fallthru
        _
    $region12: #{bottleneck_forward.1} parent=5 // pred_fallthru
      _
    %p319 = scmp.lt.s32.totalorder %s16, 2
    // Predicated region
    $region45: #{bottleneck_forward.1} parent=5 // pred_check
      %p320 = pneg %p319
    $region46: #{bottleneck_forward.1} parent=5 // pred_check_branch
      %322 = sbr.rel (%p320) target = $region48
    $region47: #{bottleneck_forward.1} parent=5 // pred_region
      // Predicated region
      $region49: #{bottleneck_forward.1} parent=47 // pred_check
        %p323 = pneg %p50
      $region50: #{bottleneck_forward.1} parent=47 // pred_check_branch
        %325 = sbr.rel (%p323) target = $region52
      $region51: #{bottleneck_forward.1} parent=47 // pred_region
        %s326 = smul.u32 16, %s24
        %p327 = scmp.lt.s32.totalorder %s23, 1
        %s328 = scalar_select %p327, %s23, 1
        %p329 = scmp.lt.s32.totalorder %s326, 15
        %s330 = scalar_select %p329, %s326, 15
        %s331 = smul.addr %s330, 3
        %s332 = smul.addr %s328, 48
        %s333 = sadd.s32 %s331, %s332
        %s334 = smul.addr %s333, 4
        %s335 = scalar_lea.vmem %s0, %s334
        %s336 = smul.u32 16, %s24
      $region52: #{bottleneck_forward.1} parent=47 // pred_fallthru
        _
      // Predicated region
      $region53: #{bottleneck_forward.1} parent=47 // pred_check
        %p337 = pneg %p78
      $region54: #{bottleneck_forward.1} parent=47 // pred_check_branch
        %339 = sbr.rel (%p337) target = $region56
      $region55: #{bottleneck_forward.1} parent=47 // pred_region
        %p340 = scmp.lt.s32.totalorder %s23, 1
        %s341 = scalar_select %p340, %s23, 1
        %p342 = scmp.lt.s32.totalorder %s24, 0
        %s343 = scalar_select %p342, %s24, 0
        %s344 = smul.addr %s343, 9
        %s345 = smul.addr %s341, 9
        %s346 = sadd.s32 %s344, %s345
        %s347 = smul.addr %s346, 4
        %s348 = scalar_lea.vmem %s1, %s347
      $region56: #{bottleneck_forward.1} parent=47 // pred_fallthru
        _
    $region48: #{bottleneck_forward.1} parent=5 // pred_fallthru
      _
    %p349 = scmp.le.s32.totalorder 1, %s16
    %p350 = scmp.lt.s32.totalorder %s16, 3
    %p351 = pnand %p349, %p350
    %p352 = pneg %p351
    // Predicated region
    $region57: #{bottleneck_forward.1} parent=5 // pred_check
      _
    $region58: #{bottleneck_forward.1} parent=5 // pred_check_branch
      %354 = sbr.rel (%p351) target = $region60
    $region59: #{bottleneck_forward.1} parent=5 // pred_region
      %s355 = ssub.s32 %s16, 1
      %s356 = smul.u32 16, %s26
      %p357 = scmp.lt.s32.totalorder %s25, 1
      %s358 = scalar_select %p357, %s25, 1
      %p359 = scmp.lt.s32.totalorder %s356, 15
      %s360 = scalar_select %p359, %s356, 15
      %s361 = smul.addr %s360, 3
      %s362 = smul.addr %s358, 48
      %s363 = sadd.s32 %s361, %s362
      %s364 = smul.addr %s363, 4
      %s365 = scalar_lea.vmem %s0, %s364
      %p366 = pneg %p56
      %p367 = pneg %p53
      %p368 = scmp.lt.s32.totalorder %s25, 1
      %s369 = scalar_select %p368, %s25, 1
      %p370 = scmp.lt.s32.totalorder %s26, 0
      %s371 = scalar_select %p370, %s26, 0
      %s372 = smul.addr %s371, 9
      %s373 = smul.addr %s369, 9
      %s374 = sadd.s32 %s372, %s373
      %s375 = smul.addr %s374, 4
      %s376 = scalar_lea.vmem %s1, %s375
      %p377 = pneg %p84
      %p378 = pneg %p81
      %p379 = pneg %p105
      %p380 = pneg %p102
      %p381 = pneg %p126
      %p382 = pneg %p123
      %p383 = pneg %p147
      %p384 = pneg %p144
      %p385 = pneg %p168
      %p386 = pneg %p165
      %p387 = pneg %p189
      %p388 = pneg %p186
      %p389 = pneg %p210
      %p390 = pneg %p207
      %p391 = pneg %p231
      %p392 = pneg %p228
      %p393 = pneg %p252
      %p394 = pneg %p249
      %p395 = pneg %p280
      %p396 = pneg %p277
      %s397 = smul.u32 16, %s26
      %p398 = scmp.lt.s32.totalorder %s25, 1
      %s399 = scalar_select %p398, %s25, 1
      %p400 = scmp.lt.s32.totalorder %s397, 15
      %s401 = scalar_select %p400, %s397, 15
      %s402 = smul.addr %s401, 3
      %s403 = smul.addr %s399, 48
      %s404 = sadd.s32 %s402, %s403
      %s405 = smul.addr %s404, 8
      %s406 = scalar_lea.vmem %s10, %s405
      %s407 = smul.u32 16, %s26
      %p408 = scmp.lt.s32.totalorder %s25, 1
      %s409 = scalar_select %p408, %s25, 1
      %p410 = scmp.lt.s32.totalorder %s407, 15
      %s411 = scalar_select %p410, %s407, 15
      %s412 = smul.addr %s411, 3
      %s413 = smul.addr %s409, 48
      %s414 = sadd.s32 %s412, %s413
      %s415 = smul.addr %s414, 4
      %s416 = scalar_lea.vmem %s0, %s415
      %s417 = smul.u32 16, %s26
      %p418 = scmp.lt.s32.totalorder %s25, 1
      %s419 = scalar_select %p418, %s25, 1
      %p420 = scmp.lt.s32.totalorder %s26, 0
      %s421 = scalar_select %p420, %s26, 0
      %s422 = smul.addr %s421, 9
      %s423 = smul.addr %s419, 9
      %s424 = sadd.s32 %s422, %s423
      %s425 = smul.addr %s424, 4
      %s426 = scalar_lea.vmem %s1, %s425
      %s427 = smul.u32 16, %s26
      %p428 = scmp.lt.s32.totalorder %s25, 1
      %s429 = scalar_select %p428, %s25, 1
      %p430 = scmp.lt.s32.totalorder %s427, 15
      %s431 = scalar_select %p430, %s427, 15
      %s432 = smul.addr %s431, 3
      %s433 = smul.addr %s429, 48
      %s434 = sadd.s32 %s432, %s433
      %s435 = smul.addr %s434, 8
      %s436 = scalar_lea.vmem %s10, %s435
      %s437 = smul.u32 16, %s26
      %v439 = vld [vmem:[%s426] sm:$0xf]
      %v440 = vld [vmem:[%s426 + $0x4] sm:$0xf]
      %v441 = vld [vmem:[%s426 + $0x8] sm:$0xf]
      %v442 = vld [vmem:[%s426 + $0xc] sm:$0xf]
      %v443 = vld [vmem:[%s426 + $0x10] sm:$0xf]
      %v444 = vld [vmem:[%s426 + $0x14] sm:$0xf]
      %v445 = vld [vmem:[%s426 + $0x18] sm:$0xf]
      %v446 = vld [vmem:[%s426 + $0x1c] sm:$0xf]
      %v447 = vld [vmem:[%s426 + $0x20] sm:$0xf]
      %v448 = vld [vmem:[%s416] sm:$0xf]
      %v449 = vld [vmem:[%s416 + $0x4] sm:$0xf]
      %v450 = vld [vmem:[%s416 + $0x8] sm:$0xf]
      %v451 = vld [vmem:[%s416 + $0xc] sm:$0xf]
      %v452 = vld [vmem:[%s416 + $0x10] sm:$0xf]
      %v453 = vld [vmem:[%s416 + $0x14] sm:$0xf]
      %v454 = vld [vmem:[%s416 + $0x18] sm:$0xf]
      %v455 = vld [vmem:[%s416 + $0x1c] sm:$0xf]
      %v456 = vld [vmem:[%s416 + $0x20] sm:$0xf]
      %v457 = vld [vmem:[%s416 + $0x24] sm:$0xf]
      %v458 = vld [vmem:[%s416 + $0x28] sm:$0xf]
      %v459 = vld [vmem:[%s416 + $0x2c] sm:$0xf]
      %v460 = vld [vmem:[%s416 + $0x30] sm:$0xf]
      %v461 = vld [vmem:[%s416 + $0x34] sm:$0xf]
      %v462 = vld [vmem:[%s416 + $0x38] sm:$0xf]
      %v463 = vld [vmem:[%s416 + $0x3c] sm:$0xf]
      %v464 = vld [vmem:[%s416 + $0x40] sm:$0xf]
      %v465 = vld [vmem:[%s416 + $0x44] sm:$0xf]
      %v466 = vld [vmem:[%s416 + $0x48] sm:$0xf]
      %v467 = vld [vmem:[%s416 + $0x4c] sm:$0xf]
      %v468 = vld [vmem:[%s416 + $0x50] sm:$0xf]
      %v469 = vld [vmem:[%s416 + $0x54] sm:$0xf]
      %v470 = vld [vmem:[%s416 + $0x58] sm:$0xf]
      %v471 = vld [vmem:[%s416 + $0x5c] sm:$0xf]
      %v472 = vld [vmem:[%s416 + $0x60] sm:$0xf]
      %v473 = vld [vmem:[%s416 + $0x64] sm:$0xf]
      %v474 = vld [vmem:[%s416 + $0x68] sm:$0xf]
      %v475 = vld [vmem:[%s416 + $0x6c] sm:$0xf]
      %v476 = vld [vmem:[%s416 + $0x70] sm:$0xf]
      %v477 = vld [vmem:[%s416 + $0x74] sm:$0xf]
      %v478 = vld [vmem:[%s416 + $0x78] sm:$0xf]
      %v479 = vld [vmem:[%s416 + $0x7c] sm:$0xf]
      %v480 = vld [vmem:[%s416 + $0x80] sm:$0xf]
      %v481 = vld [vmem:[%s416 + $0x84] sm:$0xf]
      %v482 = vld [vmem:[%s416 + $0x88] sm:$0xf]
      %v483 = vld [vmem:[%s416 + $0x8c] sm:$0xf]
      %v484 = vld [vmem:[%s416 + $0x90] sm:$0xf]
      %v485 = vld [vmem:[%s416 + $0x94] sm:$0xf]
      %v486 = vld [vmem:[%s416 + $0x98] sm:$0xf]
      %v487 = vld [vmem:[%s416 + $0x9c] sm:$0xf]
      %v488 = vld [vmem:[%s416 + $0xa0] sm:$0xf]
      %v489 = vld [vmem:[%s416 + $0xa4] sm:$0xf]
      %v490 = vld [vmem:[%s416 + $0xa8] sm:$0xf]
      %v491 = vld [vmem:[%s416 + $0xac] sm:$0xf]
      %v492 = vld [vmem:[%s416 + $0xb0] sm:$0xf]
      %v493 = vld [vmem:[%s416 + $0xb4] sm:$0xf]
      %v494 = vld [vmem:[%s416 + $0xb8] sm:$0xf]
      %v495 = vld [vmem:[%s416 + $0xbc] sm:$0xf]
      %v496 = vld [vmem:[%s2] sm:$0x3]
      %v497 = vld [vmem:[%s3] sm:$0x1]
      %v499 = vlaneseq
      %v500 = vshrl.u32 %v499, 7
      %v501 = vsub.s32 0, %v500
      %v502 = vrot.slane %v497, %v501
      %v561 = vunpack.c.l.b16 %v439
      %v562 = vunpack.c.l.b16 %v440
      %v563 = vunpack.c.l.b16 %v441
      %v564 = vunpack.c.l.b16 %v448
      %v565 = vunpack.c.l.b16 %v449
      %v566 = vunpack.c.l.b16 %v450
      %v567 = vunpack.c.l.b16 %v451
      %v568 = vunpack.c.l.b16 %v452
      %v569 = vunpack.c.l.b16 %v453
      %v570 = vunpack.c.l.b16 %v454
      %v571 = vunpack.c.l.b16 %v455
      %v572 = vunpack.c.l.b16 %v456
      %v573 = vunpack.c.l.b16 %v457
      %v574 = vunpack.c.l.b16 %v458
      %v575 = vunpack.c.l.b16 %v459
      %v576 = vunpack.c.l.b16 %v460
      %v577 = vunpack.c.l.b16 %v461
      %v578 = vunpack.c.l.b16 %v462
      %v579 = vunpack.c.l.b16 %v463
      %v580 = vunpack.c.l.b16 %v464
      %v581 = vunpack.c.l.b16 %v465
      %v582 = vunpack.c.l.b16 %v466
      %v583 = vunpack.c.l.b16 %v467
      %v584 = vunpack.c.l.b16 %v468
      %v585 = vunpack.c.l.b16 %v469
      %v586 = vunpack.c.l.b16 %v470
      %v587 = vunpack.c.l.b16 %v471
      %v588 = vunpack.c.l.b16 %v472
      %v589 = vunpack.c.l.b16 %v473
      %v590 = vunpack.c.l.b16 %v474
      %v591 = vunpack.c.l.b16 %v475
      %v592 = vunpack.c.l.b16 %v476
      %v593 = vunpack.c.l.b16 %v477
      %v594 = vunpack.c.l.b16 %v478
      %v595 = vunpack.c.l.b16 %v479
      %v596 = vunpack.c.l.b16 %v480
      %v597 = vunpack.c.l.b16 %v481
      %v598 = vunpack.c.l.b16 %v482
      %v599 = vunpack.c.l.b16 %v483
      %v600 = vunpack.c.l.b16 %v484
      %v601 = vunpack.c.l.b16 %v485
      %v602 = vunpack.c.l.b16 %v486
      %v603 = vunpack.c.l.b16 %v487
      %v604 = vunpack.c.l.b16 %v488
      %v605 = vunpack.c.l.b16 %v489
      %v606 = vunpack.c.l.b16 %v490
      %v607 = vunpack.c.l.b16 %v491
      %v608 = vunpack.c.l.b16 %v492
      %v609 = vunpack.c.l.b16 %v493
      %v610 = vunpack.c.l.b16 %v494
      %v611 = vunpack.c.l.b16 %v495
      %v612 = vunpack.c.l.b16 %v442
      %v613 = vunpack.c.l.b16 %v443
      %v614 = vunpack.c.l.b16 %v444
      %v615 = vunpack.c.l.b16 %v445
      %v616 = vunpack.c.l.b16 %v446
      %v617 = vunpack.c.l.b16 %v447
      %v618 = vpack.c.b16 %v562, %v561
      %v619 = vpack.c.b16 %v564, %v563
      %v620 = vpack.c.b16 %v566, %v565
      %v621 = vpack.c.b16 %v568, %v567
      %v622 = vpack.c.b16 %v570, %v569
      %v623 = vpack.c.b16 %v572, %v571
      %v624 = vpack.c.b16 %v574, %v573
      %v625 = vpack.c.b16 %v576, %v575
      %v626 = vpack.c.b16 %v578, %v577
      %v627 = vpack.c.b16 %v580, %v579
      %v628 = vpack.c.b16 %v582, %v581
      %v629 = vpack.c.b16 %v584, %v583
      %v630 = vpack.c.b16 %v586, %v585
      %v631 = vpack.c.b16 %v588, %v587
      %v632 = vpack.c.b16 %v590, %v589
      %v633 = vpack.c.b16 %v592, %v591
      %v634 = vpack.c.b16 %v594, %v593
      %v635 = vpack.c.b16 %v596, %v595
      %v636 = vpack.c.b16 %v598, %v597
      %v637 = vpack.c.b16 %v600, %v599
      %v638 = vpack.c.b16 %v602, %v601
      %v639 = vpack.c.b16 %v604, %v603
      %v640 = vpack.c.b16 %v606, %v605
      %v641 = vpack.c.b16 %v608, %v607
      %v642 = vpack.c.b16 %v610, %v609
      %v643 = vpack.c.b16 %v612, %v611
      %v644 = vpack.c.b16 %v614, %v613
      %v645 = vpack.c.b16 %v616, %v615
      %v646 = vpack.c.b16 %v617, %v617
      %vm647 = vcmask 31744
      %v649 = vsel %vm647, %v618, 0
      %v652 = vsel %vm647, %v619, 0
      %v655 = vsel %vm647, %v620, 0
      %v658 = vsel %vm647, %v621, 0
      %v661 = vsel %vm647, %v622, 0
      %v664 = vsel %vm647, %v623, 0
      %v667 = vsel %vm647, %v624, 0
      %v670 = vsel %vm647, %v625, 0
      %v673 = vsel %vm647, %v626, 0
      %v676 = vsel %vm647, %v627, 0
      %v679 = vsel %vm647, %v628, 0
      %v682 = vsel %vm647, %v629, 0
      %v685 = vsel %vm647, %v630, 0
      %v688 = vsel %vm647, %v631, 0
      %v691 = vsel %vm647, %v632, 0
      %v694 = vsel %vm647, %v633, 0
      %v697 = vsel %vm647, %v634, 0
      %v700 = vsel %vm647, %v635, 0
      %v703 = vsel %vm647, %v636, 0
      %v706 = vsel %vm647, %v637, 0
      %v709 = vsel %vm647, %v638, 0
      %v712 = vsel %vm647, %v639, 0
      %v715 = vsel %vm647, %v640, 0
      %v718 = vsel %vm647, %v641, 0
      %v721 = vsel %vm647, %v642, 0
      %v724 = vsel %vm647, %v643, 0
      %v727 = vsel %vm647, %v644, 0
      %v730 = vsel %vm647, %v645, 0
      %v733 = vsel %vm647, %v646, 0
      %vm735 = vcmask 1041408
      %v737 = vsel %vm735, %v496, 0
      %739 = vmatprep.subr.bf16.mxu0 0
      %740 = vmatpush1.bf16.msra.mxu0 %v737
      %741 = vmatprep.subr.bf16.mxu0 0
      %742 = vmatpush1.bf16.msra.mxu0 0
      %743 = vmatprep.subr.bf16.mxu0 0
      %744 = vmatpush1.bf16.msra.mxu0 0
      %745 = vmatprep.subr.bf16.mxu0 0
      %746 = vmatpush1.bf16.msra.mxu0 0
      %747 = vmatprep.subr.bf16.mxu0 0
      %748 = vmatpush1.bf16.msra.mxu0 0
      %749 = vmatprep.subr.bf16.mxu0 0
      %750 = vmatpush1.bf16.msra.mxu0 0
      %751 = vmatprep.subr.bf16.mxu0 0
      %752 = vmatpush1.bf16.msra.mxu0 0
      %753 = vmatprep.subr.bf16.mxu0 0
      %754 = vmatpush1.bf16.msra.mxu0 0
      %755 = vmatprep.subr.bf16.mxu0 0
      %756 = vmatpush1.bf16.msra.mxu0 0
      %757 = vmatprep.subr.bf16.mxu0 0
      %758 = vmatpush1.bf16.msra.mxu0 0
      %759 = vmatprep.subr.bf16.mxu0 0
      %760 = vmatpush1.bf16.msra.mxu0 0
      %761 = vmatprep.subr.bf16.mxu0 0
      %762 = vmatpush1.bf16.msra.mxu0 0
      %763 = vmatprep.subr.bf16.mxu0 0
      %764 = vmatpush1.bf16.msra.mxu0 0
      %765 = vmatprep.subr.bf16.mxu0 0
      %766 = vmatpush1.bf16.msra.mxu0 0
      %767 = vmatprep.subr.bf16.mxu0 0
      %768 = vmatpush1.bf16.msra.mxu0 0
      %769 = vmatprep.subr.bf16.mxu0 0
      %770 = vmatpush1.bf16.msra.mxu0 0
      %771 = vmatprep.mubr.bf16.mxu0 0
      %772 = vmatmul.mubr.bf16.gmra.mrb[0].mxu0 %v649
      %v773 = vpop.f32.mrb[0].mxu0
      %v774 = vadd.f32 %v502, %v773
      %v775 = vpop.f32.mrb[0].mxu0
      %v776 = vpop.f32.mrb[0].mxu0
      %v777 = vadd.f32 %v502, %v776
      %v778 = vpop.f32.mrb[0].mxu0
      %779 = vmatprep.mubr.bf16.mxu0 0
      %780 = vmatmul.mubr.bf16.gmra.mrb[0].mxu0 %v652
      %v781 = vpop.f32.mrb[0].mxu0
      %v782 = vadd.f32 %v502, %v781
      %v783 = vpop.f32.mrb[0].mxu0
      %v784 = vpop.f32.mrb[0].mxu0
      %v785 = vadd.f32 %v502, %v784
      %v786 = vpop.f32.mrb[0].mxu0
      %787 = vmatprep.mubr.bf16.mxu0 0
      %788 = vmatmul.mubr.bf16.gmra.mrb[0].mxu0 %v655
      %v789 = vpop.f32.mrb[0].mxu0
      %v790 = vadd.f32 %v502, %v789
      %v791 = vpop.f32.mrb[0].mxu0
      %v792 = vpop.f32.mrb[0].mxu0
      %v793 = vadd.f32 %v502, %v792
      %v794 = vpop.f32.mrb[0].mxu0
      %795 = vmatprep.mubr.bf16.mxu0 0
      %796 = vmatmul.mubr.bf16.gmra.mrb[0].mxu0 %v658
      %v797 = vpop.f32.mrb[0].mxu0
      %v798 = vadd.f32 %v502, %v797
      %v799 = vpop.f32.mrb[0].mxu0
      %v800 = vpop.f32.mrb[0].mxu0
      %v801 = vadd.f32 %v502, %v800
      %v802 = vpop.f32.mrb[0].mxu0
      %803 = vmatprep.mubr.bf16.mxu0 0
      %804 = vmatmul.mubr.bf16.gmra.mrb[0].mxu0 %v661
      %v805 = vpop.f32.mrb[0].mxu0
      %v806 = vadd.f32 %v502, %v805
      %v807 = vpop.f32.mrb[0].mxu0
      %v808 = vpop.f32.mrb[0].mxu0
      %v809 = vadd.f32 %v502, %v808
      %v810 = vpop.f32.mrb[0].mxu0
      %811 = vmatprep.mubr.bf16.mxu0 0
      %812 = vmatmul.mubr.bf16.gmra.mrb[0].mxu0 %v664
      %v813 = vpop.f32.mrb[0].mxu0
      %v814 = vadd.f32 %v502, %v813
      %v815 = vpop.f32.mrb[0].mxu0
      %v816 = vpop.f32.mrb[0].mxu0
      %v817 = vadd.f32 %v502, %v816
      %v818 = vpop.f32.mrb[0].mxu0
      %819 = vmatprep.mubr.bf16.mxu0 0
      %820 = vmatmul.mubr.bf16.gmra.mrb[0].mxu0 %v667
      %v821 = vpop.f32.mrb[0].mxu0
      %v822 = vadd.f32 %v502, %v821
      %v823 = vpop.f32.mrb[0].mxu0
      %v824 = vpop.f32.mrb[0].mxu0
      %v825 = vadd.f32 %v502, %v824
      %v826 = vpop.f32.mrb[0].mxu0
      %827 = vmatprep.mubr.bf16.mxu0 0
      %828 = vmatmul.mubr.bf16.gmra.mrb[0].mxu0 %v670
      %v829 = vpop.f32.mrb[0].mxu0
      %v830 = vadd.f32 %v502, %v829
      %v831 = vpop.f32.mrb[0].mxu0
      %v832 = vpop.f32.mrb[0].mxu0
      %v833 = vadd.f32 %v502, %v832
      %v834 = vpop.f32.mrb[0].mxu0
      %835 = vmatprep.mubr.bf16.mxu0 0
      %836 = vmatmul.mubr.bf16.gmra.mrb[0].mxu0 %v673
      %v837 = vpop.f32.mrb[0].mxu0
      %v838 = vadd.f32 %v502, %v837
      %v839 = vpop.f32.mrb[0].mxu0
      %v840 = vpop.f32.mrb[0].mxu0
      %v841 = vadd.f32 %v502, %v840
      %v842 = vpop.f32.mrb[0].mxu0
      %843 = vmatprep.mubr.bf16.mxu0 0
      %844 = vmatmul.mubr.bf16.gmra.mrb[0].mxu0 %v676
      %v845 = vpop.f32.mrb[0].mxu0
      %v846 = vadd.f32 %v502, %v845
      %v847 = vpop.f32.mrb[0].mxu0
      %v848 = vpop.f32.mrb[0].mxu0
      %v849 = vadd.f32 %v502, %v848
      %v850 = vpop.f32.mrb[0].mxu0
      %851 = vmatprep.mubr.bf16.mxu0 0
      %852 = vmatmul.mubr.bf16.gmra.mrb[0].mxu0 %v679
      %v853 = vpop.f32.mrb[0].mxu0
      %v854 = vadd.f32 %v502, %v853
      %v855 = vpop.f32.mrb[0].mxu0
      %v856 = vpop.f32.mrb[0].mxu0
      %v857 = vadd.f32 %v502, %v856
      %v858 = vpop.f32.mrb[0].mxu0
      %859 = vmatprep.mubr.bf16.mxu0 0
      %860 = vmatmul.mubr.bf16.gmra.mrb[0].mxu0 %v682
      %v861 = vpop.f32.mrb[0].mxu0
      %v862 = vadd.f32 %v502, %v861
      %v863 = vpop.f32.mrb[0].mxu0
      %v864 = vpop.f32.mrb[0].mxu0
      %v865 = vadd.f32 %v502, %v864
      %v866 = vpop.f32.mrb[0].mxu0
      %867 = vmatprep.mubr.bf16.mxu0 0
      %868 = vmatmul.mubr.bf16.gmra.mrb[0].mxu0 %v685
      %v869 = vpop.f32.mrb[0].mxu0
      %v870 = vadd.f32 %v502, %v869
      %v871 = vpop.f32.mrb[0].mxu0
      %v872 = vpop.f32.mrb[0].mxu0
      %v873 = vadd.f32 %v502, %v872
      %v874 = vpop.f32.mrb[0].mxu0
      %875 = vmatprep.mubr.bf16.mxu0 0
      %876 = vmatmul.mubr.bf16.gmra.mrb[0].mxu0 %v688
      %v877 = vpop.f32.mrb[0].mxu0
      %v878 = vadd.f32 %v502, %v877
      %v879 = vpop.f32.mrb[0].mxu0
      %v880 = vpop.f32.mrb[0].mxu0
      %v881 = vadd.f32 %v502, %v880
      %v882 = vpop.f32.mrb[0].mxu0
      %883 = vmatprep.mubr.bf16.mxu0 0
      %884 = vmatmul.mubr.bf16.gmra.mrb[0].mxu0 %v691
      %v885 = vpop.f32.mrb[0].mxu0
      %v886 = vadd.f32 %v502, %v885
      %v887 = vpop.f32.mrb[0].mxu0
      %v888 = vpop.f32.mrb[0].mxu0
      %v889 = vadd.f32 %v502, %v888
      %v890 = vpop.f32.mrb[0].mxu0
      %891 = vmatprep.mubr.bf16.mxu0 0
      %892 = vmatmul.mubr.bf16.gmra.mrb[0].mxu0 %v694
      %v893 = vpop.f32.mrb[0].mxu0
      %v894 = vadd.f32 %v502, %v893
      %v895 = vpop.f32.mrb[0].mxu0
      %v896 = vpop.f32.mrb[0].mxu0
      %v897 = vadd.f32 %v502, %v896
      %v898 = vpop.f32.mrb[0].mxu0
      %899 = vmatprep.mubr.bf16.mxu0 0
      %900 = vmatmul.mubr.bf16.gmra.mrb[0].mxu0 %v697
      %v901 = vpop.f32.mrb[0].mxu0
      %v902 = vadd.f32 %v502, %v901
      %v903 = vpop.f32.mrb[0].mxu0
      %v904 = vpop.f32.mrb[0].mxu0
      %v905 = vadd.f32 %v502, %v904
      %v906 = vpop.f32.mrb[0].mxu0
      %907 = vmatprep.mubr.bf16.mxu0 0
      %908 = vmatmul.mubr.bf16.gmra.mrb[0].mxu0 %v700
      %v909 = vpop.f32.mrb[0].mxu0
      %v910 = vadd.f32 %v502, %v909
      %v911 = vpop.f32.mrb[0].mxu0
      %v912 = vpop.f32.mrb[0].mxu0
      %v913 = vadd.f32 %v502, %v912
      %v914 = vpop.f32.mrb[0].mxu0
      %915 = vmatprep.mubr.bf16.mxu0 0
      %916 = vmatmul.mubr.bf16.gmra.mrb[0].mxu0 %v703
      %v917 = vpop.f32.mrb[0].mxu0
      %v918 = vadd.f32 %v502, %v917
      %v919 = vpop.f32.mrb[0].mxu0
      %v920 = vpop.f32.mrb[0].mxu0
      %v921 = vadd.f32 %v502, %v920
      %v922 = vpop.f32.mrb[0].mxu0
      %923 = vmatprep.mubr.bf16.mxu0 0
      %924 = vmatmul.mubr.bf16.gmra.mrb[0].mxu0 %v706
      %v925 = vpop.f32.mrb[0].mxu0
      %v926 = vadd.f32 %v502, %v925
      %v927 = vpop.f32.mrb[0].mxu0
      %v928 = vpop.f32.mrb[0].mxu0
      %v929 = vadd.f32 %v502, %v928
      %v930 = vpop.f32.mrb[0].mxu0
      %931 = vmatprep.mubr.bf16.mxu0 0
      %932 = vmatmul.mubr.bf16.gmra.mrb[0].mxu0 %v709
      %v933 = vpop.f32.mrb[0].mxu0
      %v934 = vadd.f32 %v502, %v933
      %v935 = vpop.f32.mrb[0].mxu0
      %v936 = vpop.f32.mrb[0].mxu0
      %v937 = vadd.f32 %v502, %v936
      %v938 = vpop.f32.mrb[0].mxu0
      %939 = vmatprep.mubr.bf16.mxu0 0
      %940 = vmatmul.mubr.bf16.gmra.mrb[0].mxu0 %v712
      %v941 = vpop.f32.mrb[0].mxu0
      %v942 = vadd.f32 %v502, %v941
      %v943 = vpop.f32.mrb[0].mxu0
      %v944 = vpop.f32.mrb[0].mxu0
      %v945 = vadd.f32 %v502, %v944
      %v946 = vpop.f32.mrb[0].mxu0
      %947 = vmatprep.mubr.bf16.mxu0 0
      %948 = vmatmul.mubr.bf16.gmra.mrb[0].mxu0 %v715
      %v949 = vpop.f32.mrb[0].mxu0
      %v950 = vadd.f32 %v502, %v949
      %v951 = vpop.f32.mrb[0].mxu0
      %v952 = vpop.f32.mrb[0].mxu0
      %v953 = vadd.f32 %v502, %v952
      %v954 = vpop.f32.mrb[0].mxu0
      %955 = vmatprep.mubr.bf16.mxu0 0
      %956 = vmatmul.mubr.bf16.gmra.mrb[0].mxu0 %v718
      %v957 = vpop.f32.mrb[0].mxu0
      %v958 = vadd.f32 %v502, %v957
      %v959 = vpop.f32.mrb[0].mxu0
      %v960 = vpop.f32.mrb[0].mxu0
      %v961 = vadd.f32 %v502, %v960
      %v962 = vpop.f32.mrb[0].mxu0
      %963 = vmatprep.mubr.bf16.mxu0 0
      %964 = vmatmul.mubr.bf16.gmra.mrb[0].mxu0 %v721
      %v965 = vpop.f32.mrb[0].mxu0
      %v966 = vadd.f32 %v502, %v965
      %v967 = vpop.f32.mrb[0].mxu0
      %v968 = vpop.f32.mrb[0].mxu0
      %v969 = vadd.f32 %v502, %v968
      %v970 = vpop.f32.mrb[0].mxu0
      %971 = vmatprep.mubr.bf16.mxu0 0
      %972 = vmatmul.mubr.bf16.gmra.mrb[0].mxu0 %v724
      %v973 = vpop.f32.mrb[0].mxu0
      %v974 = vadd.f32 %v502, %v973
      %v975 = vpop.f32.mrb[0].mxu0
      %v976 = vpop.f32.mrb[0].mxu0
      %v977 = vadd.f32 %v502, %v976
      %v978 = vpop.f32.mrb[0].mxu0
      %979 = vmatprep.mubr.bf16.mxu0 0
      %980 = vmatmul.mubr.bf16.gmra.mrb[0].mxu0 %v727
      %v981 = vpop.f32.mrb[0].mxu0
      %v982 = vadd.f32 %v502, %v981
      %v983 = vpop.f32.mrb[0].mxu0
      %v984 = vpop.f32.mrb[0].mxu0
      %v985 = vadd.f32 %v502, %v984
      %v986 = vpop.f32.mrb[0].mxu0
      %987 = vmatprep.mubr.bf16.mxu0 0
      %988 = vmatmul.mubr.bf16.gmra.mrb[0].mxu0 %v730
      %v989 = vpop.f32.mrb[0].mxu0
      %v990 = vadd.f32 %v502, %v989
      %v991 = vpop.f32.mrb[0].mxu0
      %v992 = vpop.f32.mrb[0].mxu0
      %v993 = vadd.f32 %v502, %v992
      %v994 = vpop.f32.mrb[0].mxu0
      %995 = vmatprep.mubr.bf16.mxu0 0
      %996 = vmatmul.mubr.bf16.gmra.mrb[0].mxu0 %v733
      %v997 = vpop.f32.mrb[0].mxu0
      %v998 = vpop.f32.mrb[0].mxu0
      %v999 = vpop.f32.mrb[0].mxu0
      %v1000 = vpop.f32.mrb[0].mxu0
      %1001 = vdwg.mxu0
      %v1002 = vmax.f32 %v774, 0.0
      %v1003 = vmax.f32 %v777, 0.0
      %v1004 = vmax.f32 %v782, 0.0
      %v1005 = vmax.f32 %v785, 0.0
      %v1006 = vmax.f32 %v790, 0.0
      %v1007 = vmax.f32 %v793, 0.0
      %v1008 = vmax.f32 %v798, 0.0
      %v1009 = vmax.f32 %v801, 0.0
      %v1010 = vmax.f32 %v806, 0.0
      %v1011 = vmax.f32 %v809, 0.0
      %v1012 = vmax.f32 %v814, 0.0
      %v1013 = vmax.f32 %v817, 0.0
      %v1014 = vmax.f32 %v822, 0.0
      %v1015 = vmax.f32 %v825, 0.0
      %v1016 = vmax.f32 %v830, 0.0
      %v1017 = vmax.f32 %v833, 0.0
      %v1018 = vmax.f32 %v838, 0.0
      %v1019 = vmax.f32 %v841, 0.0
      %v1020 = vmax.f32 %v846, 0.0
      %v1021 = vmax.f32 %v849, 0.0
      %v1022 = vmax.f32 %v854, 0.0
      %v1023 = vmax.f32 %v857, 0.0
      %v1024 = vmax.f32 %v862, 0.0
      %v1025 = vmax.f32 %v865, 0.0
      %v1026 = vmax.f32 %v870, 0.0
      %v1027 = vmax.f32 %v873, 0.0
      %v1028 = vmax.f32 %v878, 0.0
      %v1029 = vmax.f32 %v881, 0.0
      %v1030 = vmax.f32 %v886, 0.0
      %v1031 = vmax.f32 %v889, 0.0
      %v1032 = vmax.f32 %v894, 0.0
      %v1033 = vmax.f32 %v897, 0.0
      %v1034 = vmax.f32 %v902, 0.0
      %v1035 = vmax.f32 %v905, 0.0
      %v1036 = vmax.f32 %v910, 0.0
      %v1037 = vmax.f32 %v913, 0.0
      %v1038 = vmax.f32 %v918, 0.0
      %v1039 = vmax.f32 %v921, 0.0
      %v1040 = vmax.f32 %v926, 0.0
      %v1041 = vmax.f32 %v929, 0.0
      %v1042 = vmax.f32 %v934, 0.0
      %v1043 = vmax.f32 %v937, 0.0
      %v1044 = vmax.f32 %v942, 0.0
      %v1045 = vmax.f32 %v945, 0.0
      %v1046 = vmax.f32 %v950, 0.0
      %v1047 = vmax.f32 %v953, 0.0
      %v1048 = vmax.f32 %v958, 0.0
      %v1049 = vmax.f32 %v961, 0.0
      %v1050 = vmax.f32 %v966, 0.0
      %v1051 = vmax.f32 %v969, 0.0
      %v1052 = vmax.f32 %v974, 0.0
      %v1053 = vmax.f32 %v977, 0.0
      %v1054 = vmax.f32 %v982, 0.0
      %v1055 = vmax.f32 %v985, 0.0
      %v1056 = vmax.f32 %v990, 0.0
      %v1057 = vmax.f32 %v993, 0.0
      %s1058 = smul.u32 %s26, 16
      %v1059 = vstv %s1058
      %v1060 = vadd.s32 %v1059, 1
      %v1061 = vadd.s32 %v1059, 2
      %v1062 = vadd.s32 %v1059, 3
      %v1063 = vadd.s32 %v1059, 4
      %v1064 = vadd.s32 %v1059, 5
      %v1065 = vadd.s32 %v1059, 6
      %v1066 = vadd.s32 %v1059, 7
      %v1067 = vadd.s32 %v1059, 8
      %v1068 = vadd.s32 %v1059, 9
      %v1069 = vadd.s32 %v1059, 10
      %v1070 = vadd.s32 %v1059, 11
      %v1071 = vadd.s32 %v1059, 12
      %v1072 = vadd.s32 %v1059, 13
      %v1073 = vadd.s32 %v1059, 14
      %v1074 = vadd.s32 %v1059, 15
      %v1075 = vadd.s32 %v1059, 16
      %v1076 = vadd.s32 %v1059, 17
      %v1077 = vadd.s32 %v1059, 18
      %v1078 = vlaneseq
      %v1079 = vshrl.u32 %v1078, 7
      %v1080 = vadd.s32 %v1079, 8
      %v1081 = vadd.s32 %v1079, 16
      %vm1082 = vcmp.ge.s32.totalorder %v1059, 1
      %vm1083 = vcmp.ge.s32.totalorder %v1060, 1
      %vm1084 = vcmp.ge.s32.totalorder %v1061, 1
      %vm1085 = vcmp.ge.s32.totalorder %v1062, 1
      %vm1086 = vcmp.ge.s32.totalorder %v1063, 1
      %vm1087 = vcmp.ge.s32.totalorder %v1064, 1
      %vm1088 = vcmp.ge.s32.totalorder %v1065, 1
      %vm1089 = vcmp.ge.s32.totalorder %v1066, 1
      %vm1090 = vcmp.ge.s32.totalorder %v1067, 1
      %vm1091 = vcmp.ge.s32.totalorder %v1068, 1
      %vm1092 = vcmp.ge.s32.totalorder %v1069, 1
      %vm1093 = vcmp.ge.s32.totalorder %v1070, 1
      %vm1094 = vcmp.ge.s32.totalorder %v1071, 1
      %vm1095 = vcmp.ge.s32.totalorder %v1072, 1
      %vm1096 = vcmp.ge.s32.totalorder %v1073, 1
      %vm1097 = vcmp.ge.s32.totalorder %v1074, 1
      %vm1098 = vcmp.ge.s32.totalorder %v1075, 1
      %vm1099 = vcmp.ge.s32.totalorder %v1076, 1
      %vm1100 = vcmp.ge.s32.totalorder %v1077, 1
      %vm1101 = vcmp.le.s32.totalorder %v1059, 16
      %vm1102 = vcmp.le.s32.totalorder %v1060, 16
      %vm1103 = vcmp.le.s32.totalorder %v1061, 16
      %vm1104 = vcmp.le.s32.totalorder %v1062, 16
      %vm1105 = vcmp.le.s32.totalorder %v1063, 16
      %vm1106 = vcmp.le.s32.totalorder %v1064, 16
      %vm1107 = vcmp.le.s32.totalorder %v1065, 16
      %vm1108 = vcmp.le.s32.totalorder %v1066, 16
      %vm1109 = vcmp.le.s32.totalorder %v1067, 16
      %vm1110 = vcmp.le.s32.totalorder %v1068, 16
      %vm1111 = vcmp.le.s32.totalorder %v1069, 16
      %vm1112 = vcmp.le.s32.totalorder %v1070, 16
      %vm1113 = vcmp.le.s32.totalorder %v1071, 16
      %vm1114 = vcmp.le.s32.totalorder %v1072, 16
      %vm1115 = vcmp.le.s32.totalorder %v1073, 16
      %vm1116 = vcmp.le.s32.totalorder %v1074, 16
      %vm1117 = vcmp.le.s32.totalorder %v1075, 16
      %vm1118 = vcmp.le.s32.totalorder %v1076, 16
      %vm1119 = vcmp.le.s32.totalorder %v1077, 16
      %vm1120 = vmand %vm1082, %vm1101
      %vm1121 = vmand %vm1083, %vm1102
      %vm1122 = vmand %vm1084, %vm1103
      %vm1123 = vmand %vm1085, %vm1104
      %vm1124 = vmand %vm1086, %vm1105
      %vm1125 = vmand %vm1087, %vm1106
      %vm1126 = vmand %vm1088, %vm1107
      %vm1127 = vmand %vm1089, %vm1108
      %vm1128 = vmand %vm1090, %vm1109
      %vm1129 = vmand %vm1091, %vm1110
      %vm1130 = vmand %vm1092, %vm1111
      %vm1131 = vmand %vm1093, %vm1112
      %vm1132 = vmand %vm1094, %vm1113
      %vm1133 = vmand %vm1095, %vm1114
      %vm1134 = vmand %vm1096, %vm1115
      %vm1135 = vmand %vm1097, %vm1116
      %vm1136 = vmand %vm1098, %vm1117
      %vm1137 = vmand %vm1099, %vm1118
      %vm1138 = vmand %vm1100, %vm1119
      %vm1139 = vcmp.ge.s32.totalorder %v1079, 1
      %vm1140 = vcmp.ge.s32.totalorder %v1080, 1
      %vm1141 = vcmp.ge.s32.totalorder %v1081, 1
      %vm1142 = vmand %vm1120, %vm1139
      %vm1143 = vmand %vm1120, %vm1140
      %vm1144 = vmand %vm1120, %vm1141
      %vm1145 = vmand %vm1121, %vm1139
      %vm1146 = vmand %vm1121, %vm1140
      %vm1147 = vmand %vm1121, %vm1141
      %vm1148 = vmand %vm1122, %vm1139
      %vm1149 = vmand %vm1122, %vm1140
      %vm1150 = vmand %vm1122, %vm1141
      %vm1151 = vmand %vm1123, %vm1139
      %vm1152 = vmand %vm1123, %vm1140
      %vm1153 = vmand %vm1123, %vm1141
      %vm1154 = vmand %vm1124, %vm1139
      %vm1155 = vmand %vm1124, %vm1140
      %vm1156 = vmand %vm1124, %vm1141
      %vm1157 = vmand %vm1125, %vm1139
      %vm1158 = vmand %vm1125, %vm1140
      %vm1159 = vmand %vm1125, %vm1141
      %vm1160 = vmand %vm1126, %vm1139
      %vm1161 = vmand %vm1126, %vm1140
      %vm1162 = vmand %vm1126, %vm1141
      %vm1163 = vmand %vm1127, %vm1139
      %vm1164 = vmand %vm1127, %vm1140
      %vm1165 = vmand %vm1127, %vm1141
      %vm1166 = vmand %vm1128, %vm1139
      %vm1167 = vmand %vm1128, %vm1140
      %vm1168 = vmand %vm1128, %vm1141
      %vm1169 = vmand %vm1129, %vm1139
      %vm1170 = vmand %vm1129, %vm1140
      %vm1171 = vmand %vm1129, %vm1141
      %vm1172 = vmand %vm1130, %vm1139
      %vm1173 = vmand %vm1130, %vm1140
      %vm1174 = vmand %vm1130, %vm1141
      %vm1175 = vmand %vm1131, %vm1139
      %vm1176 = vmand %vm1131, %vm1140
      %vm1177 = vmand %vm1131, %vm1141
      %vm1178 = vmand %vm1132, %vm1139
      %vm1179 = vmand %vm1132, %vm1140
      %vm1180 = vmand %vm1132, %vm1141
      %vm1181 = vmand %vm1133, %vm1139
      %vm1182 = vmand %vm1133, %vm1140
      %vm1183 = vmand %vm1133, %vm1141
      %vm1184 = vmand %vm1134, %vm1139
      %vm1185 = vmand %vm1134, %vm1140
      %vm1186 = vmand %vm1134, %vm1141
      %vm1187 = vmand %vm1135, %vm1139
      %vm1188 = vmand %vm1135, %vm1140
      %vm1189 = vmand %vm1135, %vm1141
      %vm1190 = vmand %vm1136, %vm1139
      %vm1191 = vmand %vm1136, %vm1140
      %vm1192 = vmand %vm1136, %vm1141
      %vm1193 = vmand %vm1137, %vm1139
      %vm1194 = vmand %vm1137, %vm1140
      %vm1195 = vmand %vm1137, %vm1141
      %vm1196 = vmand %vm1138, %vm1139
      %vm1197 = vmand %vm1138, %vm1140
      %vm1198 = vcmp.le.s32.totalorder %v1079, 16
      %vm1199 = vcmp.le.s32.totalorder %v1080, 16
      %vm1200 = vcmp.le.s32.totalorder %v1081, 16
      %vm1201 = vmand %vm1142, %vm1198
      %vm1202 = vmand %vm1143, %vm1199
      %vm1203 = vmand %vm1144, %vm1200
      %vm1204 = vmand %vm1145, %vm1198
      %vm1205 = vmand %vm1146, %vm1199
      %vm1206 = vmand %vm1147, %vm1200
      %vm1207 = vmand %vm1148, %vm1198
      %vm1208 = vmand %vm1149, %vm1199
      %vm1209 = vmand %vm1150, %vm1200
      %vm1210 = vmand %vm1151, %vm1198
      %vm1211 = vmand %vm1152, %vm1199
      %vm1212 = vmand %vm1153, %vm1200
      %vm1213 = vmand %vm1154, %vm1198
      %vm1214 = vmand %vm1155, %vm1199
      %vm1215 = vmand %vm1156, %vm1200
      %vm1216 = vmand %vm1157, %vm1198
      %vm1217 = vmand %vm1158, %vm1199
      %vm1218 = vmand %vm1159, %vm1200
      %vm1219 = vmand %vm1160, %vm1198
      %vm1220 = vmand %vm1161, %vm1199
      %vm1221 = vmand %vm1162, %vm1200
      %vm1222 = vmand %vm1163, %vm1198
      %vm1223 = vmand %vm1164, %vm1199
      %vm1224 = vmand %vm1165, %vm1200
      %vm1225 = vmand %vm1166, %vm1198
      %vm1226 = vmand %vm1167, %vm1199
      %vm1227 = vmand %vm1168, %vm1200
      %vm1228 = vmand %vm1169, %vm1198
      %vm1229 = vmand %vm1170, %vm1199
      %vm1230 = vmand %vm1171, %vm1200
      %vm1231 = vmand %vm1172, %vm1198
      %vm1232 = vmand %vm1173, %vm1199
      %vm1233 = vmand %vm1174, %vm1200
      %vm1234 = vmand %vm1175, %vm1198
      %vm1235 = vmand %vm1176, %vm1199
      %vm1236 = vmand %vm1177, %vm1200
      %vm1237 = vmand %vm1178, %vm1198
      %vm1238 = vmand %vm1179, %vm1199
      %vm1239 = vmand %vm1180, %vm1200
      %vm1240 = vmand %vm1181, %vm1198
      %vm1241 = vmand %vm1182, %vm1199
      %vm1242 = vmand %vm1183, %vm1200
      %vm1243 = vmand %vm1184, %vm1198
      %vm1244 = vmand %vm1185, %vm1199
      %vm1245 = vmand %vm1186, %vm1200
      %vm1246 = vmand %vm1187, %vm1198
      %vm1247 = vmand %vm1188, %vm1199
      %vm1248 = vmand %vm1189, %vm1200
      %vm1249 = vmand %vm1190, %vm1198
      %vm1250 = vmand %vm1191, %vm1199
      %vm1251 = vmand %vm1192, %vm1200
      %vm1252 = vmand %vm1193, %vm1198
      %vm1253 = vmand %vm1194, %vm1199
      %vm1254 = vmand %vm1195, %vm1200
      %vm1255 = vmand %vm1196, %vm1198
      %vm1256 = vmand %vm1197, %vm1199
      %v1257 = vsel %vm1201, 1, 0
      %v1258 = vsel %vm1202, 1, 0
      %v1259 = vsel %vm1203, 1, 0
      %v1260 = vsel %vm1204, 1, 0
      %v1261 = vsel %vm1205, 1, 0
      %v1262 = vsel %vm1206, 1, 0
      %v1263 = vsel %vm1207, 1, 0
      %v1264 = vsel %vm1208, 1, 0
      %v1265 = vsel %vm1209, 1, 0
      %v1266 = vsel %vm1210, 1, 0
      %v1267 = vsel %vm1211, 1, 0
      %v1268 = vsel %vm1212, 1, 0
      %v1269 = vsel %vm1213, 1, 0
      %v1270 = vsel %vm1214, 1, 0
      %v1271 = vsel %vm1215, 1, 0
      %v1272 = vsel %vm1216, 1, 0
      %v1273 = vsel %vm1217, 1, 0
      %v1274 = vsel %vm1218, 1, 0
      %v1275 = vsel %vm1219, 1, 0
      %v1276 = vsel %vm1220, 1, 0
      %v1277 = vsel %vm1221, 1, 0
      %v1278 = vsel %vm1222, 1, 0
      %v1279 = vsel %vm1223, 1, 0
      %v1280 = vsel %vm1224, 1, 0
      %v1281 = vsel %vm1225, 1, 0
      %v1282 = vsel %vm1226, 1, 0
      %v1283 = vsel %vm1227, 1, 0
      %v1284 = vsel %vm1228, 1, 0
      %v1285 = vsel %vm1229, 1, 0
      %v1286 = vsel %vm1230, 1, 0
      %v1287 = vsel %vm1231, 1, 0
      %v1288 = vsel %vm1232, 1, 0
      %v1289 = vsel %vm1233, 1, 0
      %v1290 = vsel %vm1234, 1, 0
      %v1291 = vsel %vm1235, 1, 0
      %v1292 = vsel %vm1236, 1, 0
      %v1293 = vsel %vm1237, 1, 0
      %v1294 = vsel %vm1238, 1, 0
      %v1295 = vsel %vm1239, 1, 0
      %v1296 = vsel %vm1240, 1, 0
      %v1297 = vsel %vm1241, 1, 0
      %v1298 = vsel %vm1242, 1, 0
      %v1299 = vsel %vm1243, 1, 0
      %v1300 = vsel %vm1244, 1, 0
      %v1301 = vsel %vm1245, 1, 0
      %v1302 = vsel %vm1246, 1, 0
      %v1303 = vsel %vm1247, 1, 0
      %v1304 = vsel %vm1248, 1, 0
      %v1305 = vsel %vm1249, 1, 0
      %v1306 = vsel %vm1250, 1, 0
      %v1307 = vsel %vm1251, 1, 0
      %v1308 = vsel %vm1252, 1, 0
      %v1309 = vsel %vm1253, 1, 0
      %v1310 = vsel %vm1254, 1, 0
      %v1311 = vsel %vm1255, 1, 0
      %v1312 = vsel %vm1256, 1, 0
      %vm1313 = vcmp.eq.s32.totalorder %v1257, 1
      %vm1314 = vcmp.eq.s32.totalorder %v1258, 1
      %vm1315 = vcmp.eq.s32.totalorder %v1259, 1
      %vm1316 = vcmp.eq.s32.totalorder %v1260, 1
      %vm1317 = vcmp.eq.s32.totalorder %v1261, 1
      %vm1318 = vcmp.eq.s32.totalorder %v1262, 1
      %vm1319 = vcmp.eq.s32.totalorder %v1263, 1
      %vm1320 = vcmp.eq.s32.totalorder %v1264, 1
      %vm1321 = vcmp.eq.s32.totalorder %v1265, 1
      %vm1322 = vcmp.eq.s32.totalorder %v1266, 1
      %vm1323 = vcmp.eq.s32.totalorder %v1267, 1
      %vm1324 = vcmp.eq.s32.totalorder %v1268, 1
      %vm1325 = vcmp.eq.s32.totalorder %v1269, 1
      %vm1326 = vcmp.eq.s32.totalorder %v1270, 1
      %vm1327 = vcmp.eq.s32.totalorder %v1271, 1
      %vm1328 = vcmp.eq.s32.totalorder %v1272, 1
      %vm1329 = vcmp.eq.s32.totalorder %v1273, 1
      %vm1330 = vcmp.eq.s32.totalorder %v1274, 1
      %vm1331 = vcmp.eq.s32.totalorder %v1275, 1
      %vm1332 = vcmp.eq.s32.totalorder %v1276, 1
      %vm1333 = vcmp.eq.s32.totalorder %v1277, 1
      %vm1334 = vcmp.eq.s32.totalorder %v1278, 1
      %vm1335 = vcmp.eq.s32.totalorder %v1279, 1
      %vm1336 = vcmp.eq.s32.totalorder %v1280, 1
      %vm1337 = vcmp.eq.s32.totalorder %v1281, 1
      %vm1338 = vcmp.eq.s32.totalorder %v1282, 1
      %vm1339 = vcmp.eq.s32.totalorder %v1283, 1
      %vm1340 = vcmp.eq.s32.totalorder %v1284, 1
      %vm1341 = vcmp.eq.s32.totalorder %v1285, 1
      %vm1342 = vcmp.eq.s32.totalorder %v1286, 1
      %vm1343 = vcmp.eq.s32.totalorder %v1287, 1
      %vm1344 = vcmp.eq.s32.totalorder %v1288, 1
      %vm1345 = vcmp.eq.s32.totalorder %v1289, 1
      %vm1346 = vcmp.eq.s32.totalorder %v1290, 1
      %vm1347 = vcmp.eq.s32.totalorder %v1291, 1
      %vm1348 = vcmp.eq.s32.totalorder %v1292, 1
      %vm1349 = vcmp.eq.s32.totalorder %v1293, 1
      %vm1350 = vcmp.eq.s32.totalorder %v1294, 1
      %vm1351 = vcmp.eq.s32.totalorder %v1295, 1
      %vm1352 = vcmp.eq.s32.totalorder %v1296, 1
      %vm1353 = vcmp.eq.s32.totalorder %v1297, 1
      %vm1354 = vcmp.eq.s32.totalorder %v1298, 1
      %vm1355 = vcmp.eq.s32.totalorder %v1299, 1
      %vm1356 = vcmp.eq.s32.totalorder %v1300, 1
      %vm1357 = vcmp.eq.s32.totalorder %v1301, 1
      %vm1358 = vcmp.eq.s32.totalorder %v1302, 1
      %vm1359 = vcmp.eq.s32.totalorder %v1303, 1
      %vm1360 = vcmp.eq.s32.totalorder %v1304, 1
      %vm1361 = vcmp.eq.s32.totalorder %v1305, 1
      %vm1362 = vcmp.eq.s32.totalorder %v1306, 1
      %vm1363 = vcmp.eq.s32.totalorder %v1307, 1
      %vm1364 = vcmp.eq.s32.totalorder %v1308, 1
      %vm1365 = vcmp.eq.s32.totalorder %v1309, 1
      %vm1366 = vcmp.eq.s32.totalorder %v1310, 1
      %vm1367 = vcmp.eq.s32.totalorder %v1311, 1
      %vm1368 = vcmp.eq.s32.totalorder %v1312, 1
      %v1369 = vsel %vm1313, %v1002, 0.0
      %v1370 = vsel %vm1314, %v1003, 0.0
      %v1371 = vsel %vm1315, %v1004, 0.0
      %v1372 = vsel %vm1316, %v1005, 0.0
      %v1373 = vsel %vm1317, %v1006, 0.0
      %v1374 = vsel %vm1318, %v1007, 0.0
      %v1375 = vsel %vm1319, %v1008, 0.0
      %v1376 = vsel %vm1320, %v1009, 0.0
      %v1377 = vsel %vm1321, %v1010, 0.0
      %v1378 = vsel %vm1322, %v1011, 0.0
      %v1379 = vsel %vm1323, %v1012, 0.0
      %v1380 = vsel %vm1324, %v1013, 0.0
      %v1381 = vsel %vm1325, %v1014, 0.0
      %v1382 = vsel %vm1326, %v1015, 0.0
      %v1383 = vsel %vm1327, %v1016, 0.0
      %v1384 = vsel %vm1328, %v1017, 0.0
      %v1385 = vsel %vm1329, %v1018, 0.0
      %v1386 = vsel %vm1330, %v1019, 0.0
      %v1387 = vsel %vm1331, %v1020, 0.0
      %v1388 = vsel %vm1332, %v1021, 0.0
      %v1389 = vsel %vm1333, %v1022, 0.0
      %v1390 = vsel %vm1334, %v1023, 0.0
      %v1391 = vsel %vm1335, %v1024, 0.0
      %v1392 = vsel %vm1336, %v1025, 0.0
      %v1393 = vsel %vm1337, %v1026, 0.0
      %v1394 = vsel %vm1338, %v1027, 0.0
      %v1395 = vsel %vm1339, %v1028, 0.0
      %v1396 = vsel %vm1340, %v1029, 0.0
      %v1397 = vsel %vm1341, %v1030, 0.0
      %v1398 = vsel %vm1342, %v1031, 0.0
      %v1399 = vsel %vm1343, %v1032, 0.0
      %v1400 = vsel %vm1344, %v1033, 0.0
      %v1401 = vsel %vm1345, %v1034, 0.0
      %v1402 = vsel %vm1346, %v1035, 0.0
      %v1403 = vsel %vm1347, %v1036, 0.0
      %v1404 = vsel %vm1348, %v1037, 0.0
      %v1405 = vsel %vm1349, %v1038, 0.0
      %v1406 = vsel %vm1350, %v1039, 0.0
      %v1407 = vsel %vm1351, %v1040, 0.0
      %v1408 = vsel %vm1352, %v1041, 0.0
      %v1409 = vsel %vm1353, %v1042, 0.0
      %v1410 = vsel %vm1354, %v1043, 0.0
      %v1411 = vsel %vm1355, %v1044, 0.0
      %v1412 = vsel %vm1356, %v1045, 0.0
      %v1413 = vsel %vm1357, %v1046, 0.0
      %v1414 = vsel %vm1358, %v1047, 0.0
      %v1415 = vsel %vm1359, %v1048, 0.0
      %v1416 = vsel %vm1360, %v1049, 0.0
      %v1417 = vsel %vm1361, %v1050, 0.0
      %v1418 = vsel %vm1362, %v1051, 0.0
      %v1419 = vsel %vm1363, %v1052, 0.0
      %v1420 = vsel %vm1364, %v1053, 0.0
      %v1421 = vsel %vm1365, %v1054, 0.0
      %v1422 = vsel %vm1366, %v1055, 0.0
      %v1423 = vsel %vm1367, %v1056, 0.0
      %v1424 = vsel %vm1368, %v1057, 0.0
      %v1425 = vpack.c.bf16 %v1370, %v1369
      %v1426 = vpack.c.bf16 %v1371, %v1371
      %v1427 = vpack.c.bf16 %v1373, %v1372
      %v1428 = vpack.c.bf16 %v1374, %v1374
      %v1429 = vpack.c.bf16 %v1376, %v1375
      %v1430 = vpack.c.bf16 %v1377, %v1377
      %v1431 = vpack.c.bf16 %v1379, %v1378
      %v1432 = vpack.c.bf16 %v1380, %v1380
      %v1433 = vpack.c.bf16 %v1382, %v1381
      %v1434 = vpack.c.bf16 %v1383, %v1383
      %v1435 = vpack.c.bf16 %v1385, %v1384
      %v1436 = vpack.c.bf16 %v1386, %v1386
      %v1437 = vpack.c.bf16 %v1388, %v1387
      %v1438 = vpack.c.bf16 %v1389, %v1389
      %v1439 = vpack.c.bf16 %v1391, %v1390
      %v1440 = vpack.c.bf16 %v1392, %v1392
      %v1441 = vpack.c.bf16 %v1394, %v1393
      %v1442 = vpack.c.bf16 %v1395, %v1395
      %v1443 = vpack.c.bf16 %v1397, %v1396
      %v1444 = vpack.c.bf16 %v1398, %v1398
      %v1445 = vpack.c.bf16 %v1400, %v1399
      %v1446 = vpack.c.bf16 %v1401, %v1401
      %v1447 = vpack.c.bf16 %v1403, %v1402
      %v1448 = vpack.c.bf16 %v1404, %v1404
      %v1449 = vpack.c.bf16 %v1406, %v1405
      %v1450 = vpack.c.bf16 %v1407, %v1407
      %v1451 = vpack.c.bf16 %v1409, %v1408
      %v1452 = vpack.c.bf16 %v1410, %v1410
      %v1453 = vpack.c.bf16 %v1412, %v1411
      %v1454 = vpack.c.bf16 %v1413, %v1413
      %v1455 = vpack.c.bf16 %v1415, %v1414
      %v1456 = vpack.c.bf16 %v1416, %v1416
      %v1457 = vpack.c.bf16 %v1418, %v1417
      %v1458 = vpack.c.bf16 %v1419, %v1419
      %v1459 = vpack.c.bf16 %v1421, %v1420
      %v1460 = vpack.c.bf16 %v1422, %v1422
      %v1461 = vpack.c.bf16 %v1424, %v1423
      %v1499 = vunpack.c.l.b16 %v1425
      %v1500 = vunpack.c.h.b16 %v1425
      %v1501 = vunpack.c.l.b16 %v1426
      %v1502 = vunpack.c.l.b16 %v1427
      %v1503 = vunpack.c.h.b16 %v1427
      %v1504 = vunpack.c.l.b16 %v1428
      %v1505 = vunpack.c.l.b16 %v1429
      %v1506 = vunpack.c.h.b16 %v1429
      %v1507 = vunpack.c.l.b16 %v1430
      %v1508 = vunpack.c.l.b16 %v1431
      %v1509 = vunpack.c.h.b16 %v1431
      %v1510 = vunpack.c.l.b16 %v1432
      %v1511 = vunpack.c.l.b16 %v1433
      %v1512 = vunpack.c.h.b16 %v1433
      %v1513 = vunpack.c.l.b16 %v1434
      %v1514 = vunpack.c.l.b16 %v1435
      %v1515 = vunpack.c.h.b16 %v1435
      %v1516 = vunpack.c.l.b16 %v1436
      %v1517 = vunpack.c.l.b16 %v1437
      %v1518 = vunpack.c.h.b16 %v1437
      %v1519 = vunpack.c.l.b16 %v1438
      %v1520 = vunpack.c.l.b16 %v1439
      %v1521 = vunpack.c.h.b16 %v1439
      %v1522 = vunpack.c.l.b16 %v1440
      %v1523 = vunpack.c.l.b16 %v1441
      %v1524 = vunpack.c.h.b16 %v1441
      %v1525 = vunpack.c.l.b16 %v1442
      %v1526 = vunpack.c.l.b16 %v1443
      %v1527 = vunpack.c.h.b16 %v1443
      %v1528 = vunpack.c.l.b16 %v1444
      %v1529 = vunpack.c.l.b16 %v1445
      %v1530 = vunpack.c.h.b16 %v1445
      %v1531 = vunpack.c.l.b16 %v1446
      %v1532 = vunpack.c.l.b16 %v1447
      %v1533 = vunpack.c.h.b16 %v1447
      %v1534 = vunpack.c.l.b16 %v1448
      %v1535 = vunpack.c.l.b16 %v1449
      %v1536 = vunpack.c.h.b16 %v1449
      %v1537 = vunpack.c.l.b16 %v1450
      %v1538 = vunpack.c.l.b16 %v1451
      %v1539 = vunpack.c.h.b16 %v1451
      %v1540 = vunpack.c.l.b16 %v1452
      %v1541 = vunpack.c.l.b16 %v1453
      %v1542 = vunpack.c.h.b16 %v1453
      %v1543 = vunpack.c.l.b16 %v1454
      %v1544 = vunpack.c.l.b16 %v1455
      %v1545 = vunpack.c.h.b16 %v1455
      %v1546 = vunpack.c.l.b16 %v1456
      %v1547 = vunpack.c.l.b16 %v1457
      %v1548 = vunpack.c.h.b16 %v1457
      %v1549 = vunpack.c.l.b16 %v1458
      %v1550 = vunpack.c.l.b16 %v1459
      %v1551 = vunpack.c.h.b16 %v1459
      %v1552 = vunpack.c.l.b16 %v1460
      %v1553 = vunpack.c.l.b16 %v1461
      %v1554 = vpack.c.b16 %v1500, %v1499
      %v1555 = vpack.c.b16 %v1502, %v1501
      %v1556 = vpack.c.b16 %v1504, %v1503
      %v1557 = vpack.c.b16 %v1506, %v1505
      %v1558 = vpack.c.b16 %v1508, %v1507
      %v1559 = vpack.c.b16 %v1510, %v1509
      %v1560 = vpack.c.b16 %v1512, %v1511
      %v1561 = vpack.c.b16 %v1514, %v1513
      %v1562 = vpack.c.b16 %v1516, %v1515
      %v1563 = vpack.c.b16 %v1518, %v1517
      %v1564 = vpack.c.b16 %v1520, %v1519
      %v1565 = vpack.c.b16 %v1522, %v1521
      %v1566 = vpack.c.b16 %v1524, %v1523
      %v1567 = vpack.c.b16 %v1526, %v1525
      %v1568 = vpack.c.b16 %v1528, %v1527
      %v1569 = vpack.c.b16 %v1530, %v1529
      %v1570 = vpack.c.b16 %v1532, %v1531
      %v1571 = vpack.c.b16 %v1534, %v1533
      %v1572 = vpack.c.b16 %v1536, %v1535
      %v1573 = vpack.c.b16 %v1538, %v1537
      %v1574 = vpack.c.b16 %v1540, %v1539
      %v1575 = vpack.c.b16 %v1542, %v1541
      %v1576 = vpack.c.b16 %v1544, %v1543
      %v1577 = vpack.c.b16 %v1546, %v1545
      %v1578 = vpack.c.b16 %v1547, %v1547
      %vm1579 = vsmask.f32 7424
      %v1581 = vshrl.u32 %v1554, 16
      %v1583 = vshll.u32 %v1554, 16
      %v1585 = vrot.slane %v1583, 1
      %v1586 = vor.u32 %v1581, %v1585
      %v1588 = vshll.u32 %v1555, 16
      %v1590 = vrot.slane %v1588, 1
      %v1591 = vsel %vm1579, %v1586, %v1590
      %v1592 = vshrl.u32 %v1555, 16
      %v1594 = vor.u32 %v1592, %v1590
      %v1596 = vshll.u32 %v1556, 16
      %v1598 = vrot.slane %v1596, 1
      %v1599 = vsel %vm1579, %v1594, %v1598
      %v1600 = vshrl.u32 %v1556, 16
      %v1602 = vor.u32 %v1600, %v1598
      %v1604 = vshll.u32 %v1557, 16
      %v1606 = vrot.slane %v1604, 1
      %v1607 = vsel %vm1579, %v1602, %v1606
      %v1608 = vshrl.u32 %v1557, 16
      %v1610 = vor.u32 %v1608, %v1606
      %v1612 = vshll.u32 %v1558, 16
      %v1614 = vrot.slane %v1612, 1
      %v1615 = vsel %vm1579, %v1610, %v1614
      %v1616 = vshrl.u32 %v1558, 16
      %v1618 = vor.u32 %v1616, %v1614
      %v1620 = vshll.u32 %v1559, 16
      %v1622 = vrot.slane %v1620, 1
      %v1623 = vsel %vm1579, %v1618, %v1622
      %v1624 = vshrl.u32 %v1559, 16
      %v1626 = vor.u32 %v1624, %v1622
      %v1628 = vshll.u32 %v1560, 16
      %v1630 = vrot.slane %v1628, 1
      %v1631 = vsel %vm1579, %v1626, %v1630
      %v1632 = vshrl.u32 %v1560, 16
      %v1634 = vor.u32 %v1632, %v1630
      %v1636 = vshll.u32 %v1561, 16
      %v1638 = vrot.slane %v1636, 1
      %v1639 = vsel %vm1579, %v1634, %v1638
      %v1640 = vshrl.u32 %v1561, 16
      %v1642 = vor.u32 %v1640, %v1638
      %v1644 = vshll.u32 %v1562, 16
      %v1646 = vrot.slane %v1644, 1
      %v1647 = vsel %vm1579, %v1642, %v1646
      %v1648 = vshrl.u32 %v1562, 16
      %v1650 = vor.u32 %v1648, %v1646
      %v1652 = vshll.u32 %v1563, 16
      %v1654 = vrot.slane %v1652, 1
      %v1655 = vsel %vm1579, %v1650, %v1654
      %v1656 = vshrl.u32 %v1563, 16
      %v1658 = vor.u32 %v1656, %v1654
      %v1660 = vshll.u32 %v1564, 16
      %v1662 = vrot.slane %v1660, 1
      %v1663 = vsel %vm1579, %v1658, %v1662
      %v1664 = vshrl.u32 %v1564, 16
      %v1666 = vor.u32 %v1664, %v1662
      %v1668 = vshll.u32 %v1565, 16
      %v1670 = vrot.slane %v1668, 1
      %v1671 = vsel %vm1579, %v1666, %v1670
      %v1672 = vshrl.u32 %v1565, 16
      %v1674 = vor.u32 %v1672, %v1670
      %v1676 = vshll.u32 %v1566, 16
      %v1678 = vrot.slane %v1676, 1
      %v1679 = vsel %vm1579, %v1674, %v1678
      %v1680 = vshrl.u32 %v1566, 16
      %v1682 = vor.u32 %v1680, %v1678
      %v1684 = vshll.u32 %v1567, 16
      %v1686 = vrot.slane %v1684, 1
      %v1687 = vsel %vm1579, %v1682, %v1686
      %v1688 = vshrl.u32 %v1567, 16
      %v1690 = vor.u32 %v1688, %v1686
      %v1692 = vshll.u32 %v1568, 16
      %v1694 = vrot.slane %v1692, 1
      %v1695 = vsel %vm1579, %v1690, %v1694
      %v1696 = vshrl.u32 %v1568, 16
      %v1698 = vor.u32 %v1696, %v1694
      %v1700 = vshll.u32 %v1569, 16
      %v1702 = vrot.slane %v1700, 1
      %v1703 = vsel %vm1579, %v1698, %v1702
      %v1704 = vshrl.u32 %v1569, 16
      %v1706 = vor.u32 %v1704, %v1702
      %v1708 = vshll.u32 %v1570, 16
      %v1710 = vrot.slane %v1708, 1
      %v1711 = vsel %vm1579, %v1706, %v1710
      %v1712 = vshrl.u32 %v1570, 16
      %v1714 = vor.u32 %v1712, %v1710
      %v1716 = vshll.u32 %v1571, 16
      %v1718 = vrot.slane %v1716, 1
      %v1719 = vsel %vm1579, %v1714, %v1718
      %v1720 = vshrl.u32 %v1571, 16
      %v1722 = vor.u32 %v1720, %v1718
      %v1724 = vshll.u32 %v1572, 16
      %v1726 = vrot.slane %v1724, 1
      %v1727 = vsel %vm1579, %v1722, %v1726
      %v1728 = vshrl.u32 %v1572, 16
      %v1730 = vor.u32 %v1728, %v1726
      %v1732 = vshll.u32 %v1573, 16
      %v1734 = vrot.slane %v1732, 1
      %v1735 = vsel %vm1579, %v1730, %v1734
      %v1736 = vshrl.u32 %v1573, 16
      %v1738 = vor.u32 %v1736, %v1734
      %v1740 = vshll.u32 %v1574, 16
      %v1742 = vrot.slane %v1740, 1
      %v1743 = vsel %vm1579, %v1738, %v1742
      %v1744 = vshrl.u32 %v1574, 16
      %v1746 = vor.u32 %v1744, %v1742
      %v1748 = vshll.u32 %v1575, 16
      %v1750 = vrot.slane %v1748, 1
      %v1751 = vsel %vm1579, %v1746, %v1750
      %v1752 = vshrl.u32 %v1575, 16
      %v1754 = vor.u32 %v1752, %v1750
      %v1756 = vshll.u32 %v1576, 16
      %v1758 = vrot.slane %v1756, 1
      %v1759 = vsel %vm1579, %v1754, %v1758
      %v1760 = vshrl.u32 %v1576, 16
      %v1762 = vor.u32 %v1760, %v1758
      %v1764 = vshll.u32 %v1577, 16
      %v1766 = vrot.slane %v1764, 1
      %v1767 = vsel %vm1579, %v1762, %v1766
      %v1768 = vshrl.u32 %v1577, 16
      %v1770 = vor.u32 %v1768, %v1766
      %v1772 = vshll.u32 %v1578, 16
      %v1774 = vrot.slane %v1772, 1
      %v1775 = vsel %vm1579, %v1770, %v1774
      %1776 = vrot.lane.b32.xlu0 %v1591, 4
      %v1777 = vpop.permute.xlu0 %1776
      %1778 = vrot.lane.b32.xlu0 %v1599, 4
      %v1779 = vpop.permute.xlu0 %1778
      %1780 = vrot.lane.b32.xlu0 %v1607, 4
      %v1781 = vpop.permute.xlu0 %1780
      %1782 = vrot.lane.b32.xlu0 %v1615, 4
      %v1783 = vpop.permute.xlu0 %1782
      %1784 = vrot.lane.b32.xlu0 %v1623, 4
      %v1785 = vpop.permute.xlu0 %1784
      %1786 = vrot.lane.b32.xlu0 %v1631, 4
      %v1787 = vpop.permute.xlu0 %1786
      %1788 = vrot.lane.b32.xlu0 %v1639, 4
      %v1789 = vpop.permute.xlu0 %1788
      %1790 = vrot.lane.b32.xlu0 %v1647, 4
      %v1791 = vpop.permute.xlu0 %1790
      %1792 = vrot.lane.b32.xlu0 %v1655, 4
      %v1793 = vpop.permute.xlu0 %1792
      %1794 = vrot.lane.b32.xlu0 %v1663, 4
      %v1795 = vpop.permute.xlu0 %1794
      %1796 = vrot.lane.b32.xlu0 %v1671, 4
      %v1797 = vpop.permute.xlu0 %1796
      %1798 = vrot.lane.b32.xlu0 %v1679, 4
      %v1799 = vpop.permute.xlu0 %1798
      %1800 = vrot.lane.b32.xlu0 %v1687, 4
      %v1801 = vpop.permute.xlu0 %1800
      %1802 = vrot.lane.b32.xlu0 %v1695, 4
      %v1803 = vpop.permute.xlu0 %1802
      %1804 = vrot.lane.b32.xlu0 %v1703, 4
      %v1805 = vpop.permute.xlu0 %1804
      %1806 = vrot.lane.b32.xlu0 %v1711, 4
      %v1807 = vpop.permute.xlu0 %1806
      %1808 = vrot.lane.b32.xlu0 %v1719, 4
      %v1809 = vpop.permute.xlu0 %1808
      %1810 = vrot.lane.b32.xlu0 %v1727, 4
      %v1811 = vpop.permute.xlu0 %1810
      %1812 = vrot.lane.b32.xlu0 %v1735, 4
      %v1813 = vpop.permute.xlu0 %1812
      %1814 = vrot.lane.b32.xlu0 %v1743, 4
      %v1815 = vpop.permute.xlu0 %1814
      %1816 = vrot.lane.b32.xlu0 %v1751, 4
      %v1817 = vpop.permute.xlu0 %1816
      %1818 = vrot.lane.b32.xlu0 %v1759, 4
      %v1819 = vpop.permute.xlu0 %1818
      %1820 = vrot.lane.b32.xlu0 %v1767, 4
      %v1821 = vpop.permute.xlu0 %1820
      %1822 = vrot.lane.b32.xlu0 %v1775, 4
      %v1823 = vpop.permute.xlu0 %1822
      %vm1824 = vcmask 1046528
      %v1825 = vrot.slane %v1554, 1
      %v1826 = vrot.slane %v1555, 1
      %v1827 = vsel %vm1824, %v1825, %v1826
      %v1828 = vrot.slane %v1556, 1
      %v1829 = vsel %vm1824, %v1826, %v1828
      %v1830 = vrot.slane %v1557, 1
      %v1831 = vsel %vm1824, %v1828, %v1830
      %v1832 = vrot.slane %v1558, 1
      %v1833 = vsel %vm1824, %v1830, %v1832
      %v1834 = vrot.slane %v1559, 1
      %v1835 = vsel %vm1824, %v1832, %v1834
      %v1836 = vrot.slane %v1560, 1
      %v1837 = vsel %vm1824, %v1834, %v1836
      %v1838 = vrot.slane %v1561, 1
      %v1839 = vsel %vm1824, %v1836, %v1838
      %v1840 = vrot.slane %v1562, 1
      %v1841 = vsel %vm1824, %v1838, %v1840
      %v1842 = vrot.slane %v1563, 1
      %v1843 = vsel %vm1824, %v1840, %v1842
      %v1844 = vrot.slane %v1564, 1
      %v1845 = vsel %vm1824, %v1842, %v1844
      %v1846 = vrot.slane %v1565, 1
      %v1847 = vsel %vm1824, %v1844, %v1846
      %v1848 = vrot.slane %v1566, 1
      %v1849 = vsel %vm1824, %v1846, %v1848
      %v1850 = vrot.slane %v1567, 1
      %v1851 = vsel %vm1824, %v1848, %v1850
      %v1852 = vrot.slane %v1568, 1
      %v1853 = vsel %vm1824, %v1850, %v1852
      %v1854 = vrot.slane %v1569, 1
      %v1855 = vsel %vm1824, %v1852, %v1854
      %v1856 = vrot.slane %v1570, 1
      %v1857 = vsel %vm1824, %v1854, %v1856
      %v1858 = vrot.slane %v1571, 1
      %v1859 = vsel %vm1824, %v1856, %v1858
      %v1860 = vrot.slane %v1572, 1
      %v1861 = vsel %vm1824, %v1858, %v1860
      %v1862 = vrot.slane %v1573, 1
      %v1863 = vsel %vm1824, %v1860, %v1862
      %v1864 = vrot.slane %v1574, 1
      %v1865 = vsel %vm1824, %v1862, %v1864
      %v1866 = vrot.slane %v1575, 1
      %v1867 = vsel %vm1824, %v1864, %v1866
      %v1868 = vrot.slane %v1576, 1
      %v1869 = vsel %vm1824, %v1866, %v1868
      %v1870 = vrot.slane %v1577, 1
      %v1871 = vsel %vm1824, %v1868, %v1870
      %v1872 = vrot.slane %v1578, 1
      %v1873 = vsel %vm1824, %v1870, %v1872
      %1874 = vrot.lane.b32.xlu0 %v1827, 8
      %v1875 = vpop.permute.xlu0 %1874
      %1876 = vrot.lane.b32.xlu0 %v1829, 8
      %v1877 = vpop.permute.xlu0 %1876
      %1878 = vrot.lane.b32.xlu0 %v1831, 8
      %v1879 = vpop.permute.xlu0 %1878
      %1880 = vrot.lane.b32.xlu0 %v1833, 8
      %v1881 = vpop.permute.xlu0 %1880
      %1882 = vrot.lane.b32.xlu0 %v1835, 8
      %v1883 = vpop.permute.xlu0 %1882
      %1884 = vrot.lane.b32.xlu0 %v1837, 8
      %v1885 = vpop.permute.xlu0 %1884
      %1886 = vrot.lane.b32.xlu0 %v1839, 8
      %v1887 = vpop.permute.xlu0 %1886
      %1888 = vrot.lane.b32.xlu0 %v1841, 8
      %v1889 = vpop.permute.xlu0 %1888
      %1890 = vrot.lane.b32.xlu0 %v1843, 8
      %v1891 = vpop.permute.xlu0 %1890
      %1892 = vrot.lane.b32.xlu0 %v1845, 8
      %v1893 = vpop.permute.xlu0 %1892
      %1894 = vrot.lane.b32.xlu0 %v1847, 8
      %v1895 = vpop.permute.xlu0 %1894
      %1896 = vrot.lane.b32.xlu0 %v1849, 8
      %v1897 = vpop.permute.xlu0 %1896
      %1898 = vrot.lane.b32.xlu0 %v1851, 8
      %v1899 = vpop.permute.xlu0 %1898
      %1900 = vrot.lane.b32.xlu0 %v1853, 8
      %v1901 = vpop.permute.xlu0 %1900
      %1902 = vrot.lane.b32.xlu0 %v1855, 8
      %v1903 = vpop.permute.xlu0 %1902
      %1904 = vrot.lane.b32.xlu0 %v1857, 8
      %v1905 = vpop.permute.xlu0 %1904
      %1906 = vrot.lane.b32.xlu0 %v1859, 8
      %v1907 = vpop.permute.xlu0 %1906
      %1908 = vrot.lane.b32.xlu0 %v1861, 8
      %v1909 = vpop.permute.xlu0 %1908
      %1910 = vrot.lane.b32.xlu0 %v1863, 8
      %v1911 = vpop.permute.xlu0 %1910
      %1912 = vrot.lane.b32.xlu0 %v1865, 8
      %v1913 = vpop.permute.xlu0 %1912
      %1914 = vrot.lane.b32.xlu0 %v1867, 8
      %v1915 = vpop.permute.xlu0 %1914
      %1916 = vrot.lane.b32.xlu0 %v1869, 8
      %v1917 = vpop.permute.xlu0 %1916
      %1918 = vrot.lane.b32.xlu0 %v1871, 8
      %v1919 = vpop.permute.xlu0 %1918
      %1920 = vrot.lane.b32.xlu0 %v1873, 8
      %v1921 = vpop.permute.xlu0 %1920
      %v1922 = vpack.c.b16 %v1503, %v1502
      %v1923 = vpack.c.b16 %v1505, %v1504
      %v1924 = vpack.c.b16 %v1507, %v1506
      %v1925 = vpack.c.b16 %v1509, %v1508
      %v1926 = vpack.c.b16 %v1511, %v1510
      %v1927 = vpack.c.b16 %v1513, %v1512
      %v1928 = vpack.c.b16 %v1515, %v1514
      %v1929 = vpack.c.b16 %v1517, %v1516
      %v1930 = vpack.c.b16 %v1519, %v1518
      %v1931 = vpack.c.b16 %v1521, %v1520
      %v1932 = vpack.c.b16 %v1523, %v1522
      %v1933 = vpack.c.b16 %v1525, %v1524
      %v1934 = vpack.c.b16 %v1527, %v1526
      %v1935 = vpack.c.b16 %v1529, %v1528
      %v1936 = vpack.c.b16 %v1531, %v1530
      %v1937 = vpack.c.b16 %v1533, %v1532
      %v1938 = vpack.c.b16 %v1535, %v1534
      %v1939 = vpack.c.b16 %v1537, %v1536
      %v1940 = vpack.c.b16 %v1539, %v1538
      %v1941 = vpack.c.b16 %v1541, %v1540
      %v1942 = vpack.c.b16 %v1543, %v1542
      %v1943 = vpack.c.b16 %v1545, %v1544
      %v1944 = vpack.c.b16 %v1547, %v1546
      %v1945 = vpack.c.b16 %v1549, %v1548
      %1946 = vrot.lane.b32.xlu0 %v1922, 12
      %v1947 = vpop.permute.xlu0 %1946
      %1948 = vrot.lane.b32.xlu0 %v1923, 12
      %v1949 = vpop.permute.xlu0 %1948
      %1950 = vrot.lane.b32.xlu0 %v1924, 12
      %v1951 = vpop.permute.xlu0 %1950
      %1952 = vrot.lane.b32.xlu0 %v1925, 12
      %v1953 = vpop.permute.xlu0 %1952
      %1954 = vrot.lane.b32.xlu0 %v1926, 12
      %v1955 = vpop.permute.xlu0 %1954
      %1956 = vrot.lane.b32.xlu0 %v1927, 12
      %v1957 = vpop.permute.xlu0 %1956
      %1958 = vrot.lane.b32.xlu0 %v1928, 12
      %v1959 = vpop.permute.xlu0 %1958
      %1960 = vrot.lane.b32.xlu0 %v1929, 12
      %v1961 = vpop.permute.xlu0 %1960
      %1962 = vrot.lane.b32.xlu0 %v1930, 12
      %v1963 = vpop.permute.xlu0 %1962
      %1964 = vrot.lane.b32.xlu0 %v1931, 12
      %v1965 = vpop.permute.xlu0 %1964
      %1966 = vrot.lane.b32.xlu0 %v1932, 12
      %v1967 = vpop.permute.xlu0 %1966
      %1968 = vrot.lane.b32.xlu0 %v1933, 12
      %v1969 = vpop.permute.xlu0 %1968
      %1970 = vrot.lane.b32.xlu0 %v1934, 12
      %v1971 = vpop.permute.xlu0 %1970
      %1972 = vrot.lane.b32.xlu0 %v1935, 12
      %v1973 = vpop.permute.xlu0 %1972
      %1974 = vrot.lane.b32.xlu0 %v1936, 12
      %v1975 = vpop.permute.xlu0 %1974
      %1976 = vrot.lane.b32.xlu0 %v1937, 12
      %v1977 = vpop.permute.xlu0 %1976
      %1978 = vrot.lane.b32.xlu0 %v1938, 12
      %v1979 = vpop.permute.xlu0 %1978
      %1980 = vrot.lane.b32.xlu0 %v1939, 12
      %v1981 = vpop.permute.xlu0 %1980
      %1982 = vrot.lane.b32.xlu0 %v1940, 12
      %v1983 = vpop.permute.xlu0 %1982
      %1984 = vrot.lane.b32.xlu0 %v1941, 12
      %v1985 = vpop.permute.xlu0 %1984
      %1986 = vrot.lane.b32.xlu0 %v1942, 12
      %v1987 = vpop.permute.xlu0 %1986
      %1988 = vrot.lane.b32.xlu0 %v1943, 12
      %v1989 = vpop.permute.xlu0 %1988
      %1990 = vrot.lane.b32.xlu0 %v1944, 12
      %v1991 = vpop.permute.xlu0 %1990
      %1992 = vrot.lane.b32.xlu0 %v1945, 12
      %v1993 = vpop.permute.xlu0 %1992
      %v1994 = vpack.c.b16 %v1550, %v1550
      %v1996 = vshrl.u32 %v1922, 16
      %v1998 = vshll.u32 %v1922, 16
      %v2000 = vrot.slane %v1998, 1
      %v2001 = vor.u32 %v1996, %v2000
      %v2003 = vshll.u32 %v1923, 16
      %v2005 = vrot.slane %v2003, 1
      %v2006 = vsel %vm1579, %v2001, %v2005
      %v2007 = vshrl.u32 %v1923, 16
      %v2009 = vor.u32 %v2007, %v2005
      %v2011 = vshll.u32 %v1924, 16
      %v2013 = vrot.slane %v2011, 1
      %v2014 = vsel %vm1579, %v2009, %v2013
      %v2015 = vshrl.u32 %v1924, 16
      %v2017 = vor.u32 %v2015, %v2013
      %v2019 = vshll.u32 %v1925, 16
      %v2021 = vrot.slane %v2019, 1
      %v2022 = vsel %vm1579, %v2017, %v2021
      %v2023 = vshrl.u32 %v1925, 16
      %v2025 = vor.u32 %v2023, %v2021
      %v2027 = vshll.u32 %v1926, 16
      %v2029 = vrot.slane %v2027, 1
      %v2030 = vsel %vm1579, %v2025, %v2029
      %v2031 = vshrl.u32 %v1926, 16
      %v2033 = vor.u32 %v2031, %v2029
      %v2035 = vshll.u32 %v1927, 16
      %v2037 = vrot.slane %v2035, 1
      %v2038 = vsel %vm1579, %v2033, %v2037
      %v2039 = vshrl.u32 %v1927, 16
      %v2041 = vor.u32 %v2039, %v2037
      %v2043 = vshll.u32 %v1928, 16
      %v2045 = vrot.slane %v2043, 1
      %v2046 = vsel %vm1579, %v2041, %v2045
      %v2047 = vshrl.u32 %v1928, 16
      %v2049 = vor.u32 %v2047, %v2045
      %v2051 = vshll.u32 %v1929, 16
      %v2053 = vrot.slane %v2051, 1
      %v2054 = vsel %vm1579, %v2049, %v2053
      %v2055 = vshrl.u32 %v1929, 16
      %v2057 = vor.u32 %v2055, %v2053
      %v2059 = vshll.u32 %v1930, 16
      %v2061 = vrot.slane %v2059, 1
      %v2062 = vsel %vm1579, %v2057, %v2061
      %v2063 = vshrl.u32 %v1930, 16
      %v2065 = vor.u32 %v2063, %v2061
      %v2067 = vshll.u32 %v1931, 16
      %v2069 = vrot.slane %v2067, 1
      %v2070 = vsel %vm1579, %v2065, %v2069
      %v2071 = vshrl.u32 %v1931, 16
      %v2073 = vor.u32 %v2071, %v2069
      %v2075 = vshll.u32 %v1932, 16
      %v2077 = vrot.slane %v2075, 1
      %v2078 = vsel %vm1579, %v2073, %v2077
      %v2079 = vshrl.u32 %v1932, 16
      %v2081 = vor.u32 %v2079, %v2077
      %v2083 = vshll.u32 %v1933, 16
      %v2085 = vrot.slane %v2083, 1
      %v2086 = vsel %vm1579, %v2081, %v2085
      %v2087 = vshrl.u32 %v1933, 16
      %v2089 = vor.u32 %v2087, %v2085
      %v2091 = vshll.u32 %v1934, 16
      %v2093 = vrot.slane %v2091, 1
      %v2094 = vsel %vm1579, %v2089, %v2093
      %v2095 = vshrl.u32 %v1934, 16
      %v2097 = vor.u32 %v2095, %v2093
      %v2099 = vshll.u32 %v1935, 16
      %v2101 = vrot.slane %v2099, 1
      %v2102 = vsel %vm1579, %v2097, %v2101
      %v2103 = vshrl.u32 %v1935, 16
      %v2105 = vor.u32 %v2103, %v2101
      %v2107 = vshll.u32 %v1936, 16
      %v2109 = vrot.slane %v2107, 1
      %v2110 = vsel %vm1579, %v2105, %v2109
      %v2111 = vshrl.u32 %v1936, 16
      %v2113 = vor.u32 %v2111, %v2109
      %v2115 = vshll.u32 %v1937, 16
      %v2117 = vrot.slane %v2115, 1
      %v2118 = vsel %vm1579, %v2113, %v2117
      %v2119 = vshrl.u32 %v1937, 16
      %v2121 = vor.u32 %v2119, %v2117
      %v2123 = vshll.u32 %v1938, 16
      %v2125 = vrot.slane %v2123, 1
      %v2126 = vsel %vm1579, %v2121, %v2125
      %v2127 = vshrl.u32 %v1938, 16
      %v2129 = vor.u32 %v2127, %v2125
      %v2131 = vshll.u32 %v1939, 16
      %v2133 = vrot.slane %v2131, 1
      %v2134 = vsel %vm1579, %v2129, %v2133
      %v2135 = vshrl.u32 %v1939, 16
      %v2137 = vor.u32 %v2135, %v2133
      %v2139 = vshll.u32 %v1940, 16
      %v2141 = vrot.slane %v2139, 1
      %v2142 = vsel %vm1579, %v2137, %v2141
      %v2143 = vshrl.u32 %v1940, 16
      %v2145 = vor.u32 %v2143, %v2141
      %v2147 = vshll.u32 %v1941, 16
      %v2149 = vrot.slane %v2147, 1
      %v2150 = vsel %vm1579, %v2145, %v2149
      %v2151 = vshrl.u32 %v1941, 16
      %v2153 = vor.u32 %v2151, %v2149
      %v2155 = vshll.u32 %v1942, 16
      %v2157 = vrot.slane %v2155, 1
      %v2158 = vsel %vm1579, %v2153, %v2157
      %v2159 = vshrl.u32 %v1942, 16
      %v2161 = vor.u32 %v2159, %v2157
      %v2163 = vshll.u32 %v1943, 16
      %v2165 = vrot.slane %v2163, 1
      %v2166 = vsel %vm1579, %v2161, %v2165
      %v2167 = vshrl.u32 %v1943, 16
      %v2169 = vor.u32 %v2167, %v2165
      %v2171 = vshll.u32 %v1944, 16
      %v2173 = vrot.slane %v2171, 1
      %v2174 = vsel %vm1579, %v2169, %v2173
      %v2175 = vshrl.u32 %v1944, 16
      %v2177 = vor.u32 %v2175, %v2173
      %v2179 = vshll.u32 %v1945, 16
      %v2181 = vrot.slane %v2179, 1
      %v2182 = vsel %vm1579, %v2177, %v2181
      %v2183 = vshrl.u32 %v1945, 16
      %v2185 = vor.u32 %v2183, %v2181
      %v2187 = vshll.u32 %v1994, 16
      %v2189 = vrot.slane %v2187, 1
      %v2190 = vsel %vm1579, %v2185, %v2189
      %2191 = vrot.lane.b32.xlu0 %v2006, 16
      %v2192 = vpop.permute.xlu0 %2191
      %2193 = vrot.lane.b32.xlu0 %v2014, 16
      %v2194 = vpop.permute.xlu0 %2193
      %2195 = vrot.lane.b32.xlu0 %v2022, 16
      %v2196 = vpop.permute.xlu0 %2195
      %2197 = vrot.lane.b32.xlu0 %v2030, 16
      %v2198 = vpop.permute.xlu0 %2197
      %2199 = vrot.lane.b32.xlu0 %v2038, 16
      %v2200 = vpop.permute.xlu0 %2199
      %2201 = vrot.lane.b32.xlu0 %v2046, 16
      %v2202 = vpop.permute.xlu0 %2201
      %2203 = vrot.lane.b32.xlu0 %v2054, 16
      %v2204 = vpop.permute.xlu0 %2203
      %2205 = vrot.lane.b32.xlu0 %v2062, 16
      %v2206 = vpop.permute.xlu0 %2205
      %2207 = vrot.lane.b32.xlu0 %v2070, 16
      %v2208 = vpop.permute.xlu0 %2207
      %2209 = vrot.lane.b32.xlu0 %v2078, 16
      %v2210 = vpop.permute.xlu0 %2209
      %2211 = vrot.lane.b32.xlu0 %v2086, 16
      %v2212 = vpop.permute.xlu0 %2211
      %2213 = vrot.lane.b32.xlu0 %v2094, 16
      %v2214 = vpop.permute.xlu0 %2213
      %2215 = vrot.lane.b32.xlu0 %v2102, 16
      %v2216 = vpop.permute.xlu0 %2215
      %2217 = vrot.lane.b32.xlu0 %v2110, 16
      %v2218 = vpop.permute.xlu0 %2217
      %2219 = vrot.lane.b32.xlu0 %v2118, 16
      %v2220 = vpop.permute.xlu0 %2219
      %2221 = vrot.lane.b32.xlu0 %v2126, 16
      %v2222 = vpop.permute.xlu0 %2221
      %2223 = vrot.lane.b32.xlu0 %v2134, 16
      %v2224 = vpop.permute.xlu0 %2223
      %2225 = vrot.lane.b32.xlu0 %v2142, 16
      %v2226 = vpop.permute.xlu0 %2225
      %2227 = vrot.lane.b32.xlu0 %v2150, 16
      %v2228 = vpop.permute.xlu0 %2227
      %2229 = vrot.lane.b32.xlu0 %v2158, 16
      %v2230 = vpop.permute.xlu0 %2229
      %2231 = vrot.lane.b32.xlu0 %v2166, 16
      %v2232 = vpop.permute.xlu0 %2231
      %2233 = vrot.lane.b32.xlu0 %v2174, 16
      %v2234 = vpop.permute.xlu0 %2233
      %2235 = vrot.lane.b32.xlu0 %v2182, 16
      %v2236 = vpop.permute.xlu0 %2235
      %2237 = vrot.lane.b32.xlu0 %v2190, 16
      %v2238 = vpop.permute.xlu0 %2237
      %v2239 = vrot.slane %v1922, 1
      %v2240 = vrot.slane %v1923, 1
      %v2241 = vsel %vm1824, %v2239, %v2240
      %v2242 = vrot.slane %v1924, 1
      %v2243 = vsel %vm1824, %v2240, %v2242
      %v2244 = vrot.slane %v1925, 1
      %v2245 = vsel %vm1824, %v2242, %v2244
      %v2246 = vrot.slane %v1926, 1
      %v2247 = vsel %vm1824, %v2244, %v2246
      %v2248 = vrot.slane %v1927, 1
      %v2249 = vsel %vm1824, %v2246, %v2248
      %v2250 = vrot.slane %v1928, 1
      %v2251 = vsel %vm1824, %v2248, %v2250
      %v2252 = vrot.slane %v1929, 1
      %v2253 = vsel %vm1824, %v2250, %v2252
      %v2254 = vrot.slane %v1930, 1
      %v2255 = vsel %vm1824, %v2252, %v2254
      %v2256 = vrot.slane %v1931, 1
      %v2257 = vsel %vm1824, %v2254, %v2256
      %v2258 = vrot.slane %v1932, 1
      %v2259 = vsel %vm1824, %v2256, %v2258
      %v2260 = vrot.slane %v1933, 1
      %v2261 = vsel %vm1824, %v2258, %v2260
      %v2262 = vrot.slane %v1934, 1
      %v2263 = vsel %vm1824, %v2260, %v2262
      %v2264 = vrot.slane %v1935, 1
      %v2265 = vsel %vm1824, %v2262, %v2264
      %v2266 = vrot.slane %v1936, 1
      %v2267 = vsel %vm1824, %v2264, %v2266
      %v2268 = vrot.slane %v1937, 1
      %v2269 = vsel %vm1824, %v2266, %v2268
      %v2270 = vrot.slane %v1938, 1
      %v2271 = vsel %vm1824, %v2268, %v2270
      %v2272 = vrot.slane %v1939, 1
      %v2273 = vsel %vm1824, %v2270, %v2272
      %v2274 = vrot.slane %v1940, 1
      %v2275 = vsel %vm1824, %v2272, %v2274
      %v2276 = vrot.slane %v1941, 1
      %v2277 = vsel %vm1824, %v2274, %v2276
      %v2278 = vrot.slane %v1942, 1
      %v2279 = vsel %vm1824, %v2276, %v2278
      %v2280 = vrot.slane %v1943, 1
      %v2281 = vsel %vm1824, %v2278, %v2280
      %v2282 = vrot.slane %v1944, 1
      %v2283 = vsel %vm1824, %v2280, %v2282
      %v2284 = vrot.slane %v1945, 1
      %v2285 = vsel %vm1824, %v2282, %v2284
      %v2286 = vrot.slane %v1994, 1
      %v2287 = vsel %vm1824, %v2284, %v2286
      %2288 = vrot.lane.b32.xlu0 %v2241, 20
      %v2289 = vpop.permute.xlu0 %2288
      %2290 = vrot.lane.b32.xlu0 %v2243, 20
      %v2291 = vpop.permute.xlu0 %2290
      %2292 = vrot.lane.b32.xlu0 %v2245, 20
      %v2293 = vpop.permute.xlu0 %2292
      %2294 = vrot.lane.b32.xlu0 %v2247, 20
      %v2295 = vpop.permute.xlu0 %2294
      %2296 = vrot.lane.b32.xlu0 %v2249, 20
      %v2297 = vpop.permute.xlu0 %2296
      %2298 = vrot.lane.b32.xlu0 %v2251, 20
      %v2299 = vpop.permute.xlu0 %2298
      %2300 = vrot.lane.b32.xlu0 %v2253, 20
      %v2301 = vpop.permute.xlu0 %2300
      %2302 = vrot.lane.b32.xlu0 %v2255, 20
      %v2303 = vpop.permute.xlu0 %2302
      %2304 = vrot.lane.b32.xlu0 %v2257, 20
      %v2305 = vpop.permute.xlu0 %2304
      %2306 = vrot.lane.b32.xlu0 %v2259, 20
      %v2307 = vpop.permute.xlu0 %2306
      %2308 = vrot.lane.b32.xlu0 %v2261, 20
      %v2309 = vpop.permute.xlu0 %2308
      %2310 = vrot.lane.b32.xlu0 %v2263, 20
      %v2311 = vpop.permute.xlu0 %2310
      %2312 = vrot.lane.b32.xlu0 %v2265, 20
      %v2313 = vpop.permute.xlu0 %2312
      %2314 = vrot.lane.b32.xlu0 %v2267, 20
      %v2315 = vpop.permute.xlu0 %2314
      %2316 = vrot.lane.b32.xlu0 %v2269, 20
      %v2317 = vpop.permute.xlu0 %2316
      %2318 = vrot.lane.b32.xlu0 %v2271, 20
      %v2319 = vpop.permute.xlu0 %2318
      %2320 = vrot.lane.b32.xlu0 %v2273, 20
      %v2321 = vpop.permute.xlu0 %2320
      %2322 = vrot.lane.b32.xlu0 %v2275, 20
      %v2323 = vpop.permute.xlu0 %2322
      %2324 = vrot.lane.b32.xlu0 %v2277, 20
      %v2325 = vpop.permute.xlu0 %2324
      %2326 = vrot.lane.b32.xlu0 %v2279, 20
      %v2327 = vpop.permute.xlu0 %2326
      %2328 = vrot.lane.b32.xlu0 %v2281, 20
      %v2329 = vpop.permute.xlu0 %2328
      %2330 = vrot.lane.b32.xlu0 %v2283, 20
      %v2331 = vpop.permute.xlu0 %2330
      %2332 = vrot.lane.b32.xlu0 %v2285, 20
      %v2333 = vpop.permute.xlu0 %2332
      %2334 = vrot.lane.b32.xlu0 %v2287, 20
      %v2335 = vpop.permute.xlu0 %2334
      %v2336 = vpack.c.b16 %v1548, %v1547
      %v2337 = vpack.c.b16 %v1550, %v1549
      %v2338 = vpack.c.b16 %v1552, %v1551
      %2339 = vrot.lane.b32.xlu0 %v1557, 24
      %v2340 = vpop.permute.xlu0 %2339
      %2341 = vrot.lane.b32.xlu0 %v1558, 24
      %v2342 = vpop.permute.xlu0 %2341
      %2343 = vrot.lane.b32.xlu0 %v1559, 24
      %v2344 = vpop.permute.xlu0 %2343
      %2345 = vrot.lane.b32.xlu0 %v1560, 24
      %v2346 = vpop.permute.xlu0 %2345
      %2347 = vrot.lane.b32.xlu0 %v1561, 24
      %v2348 = vpop.permute.xlu0 %2347
      %2349 = vrot.lane.b32.xlu0 %v1562, 24
      %v2350 = vpop.permute.xlu0 %2349
      %2351 = vrot.lane.b32.xlu0 %v1563, 24
      %v2352 = vpop.permute.xlu0 %2351
      %2353 = vrot.lane.b32.xlu0 %v1564, 24
      %v2354 = vpop.permute.xlu0 %2353
      %2355 = vrot.lane.b32.xlu0 %v1565, 24
      %v2356 = vpop.permute.xlu0 %2355
      %2357 = vrot.lane.b32.xlu0 %v1566, 24
      %v2358 = vpop.permute.xlu0 %2357
      %2359 = vrot.lane.b32.xlu0 %v1567, 24
      %v2360 = vpop.permute.xlu0 %2359
      %2361 = vrot.lane.b32.xlu0 %v1568, 24
      %v2362 = vpop.permute.xlu0 %2361
      %2363 = vrot.lane.b32.xlu0 %v1569, 24
      %v2364 = vpop.permute.xlu0 %2363
      %2365 = vrot.lane.b32.xlu0 %v1570, 24
      %v2366 = vpop.permute.xlu0 %2365
      %2367 = vrot.lane.b32.xlu0 %v1571, 24
      %v2368 = vpop.permute.xlu0 %2367
      %2369 = vrot.lane.b32.xlu0 %v1572, 24
      %v2370 = vpop.permute.xlu0 %2369
      %2371 = vrot.lane.b32.xlu0 %v1573, 24
      %v2372 = vpop.permute.xlu0 %2371
      %2373 = vrot.lane.b32.xlu0 %v1574, 24
      %v2374 = vpop.permute.xlu0 %2373
      %2375 = vrot.lane.b32.xlu0 %v1575, 24
      %v2376 = vpop.permute.xlu0 %2375
      %2377 = vrot.lane.b32.xlu0 %v1576, 24
      %v2378 = vpop.permute.xlu0 %2377
      %2379 = vrot.lane.b32.xlu0 %v1577, 24
      %v2380 = vpop.permute.xlu0 %2379
      %2381 = vrot.lane.b32.xlu0 %v2336, 24
      %v2382 = vpop.permute.xlu0 %2381
      %2383 = vrot.lane.b32.xlu0 %v2337, 24
      %v2384 = vpop.permute.xlu0 %2383
      %2385 = vrot.lane.b32.xlu0 %v2338, 24
      %v2386 = vpop.permute.xlu0 %2385
      %v2387 = vpack.c.b16 %v1553, %v1553
      %v2389 = vshll.u32 %v2336, 16
      %v2391 = vrot.slane %v2389, 1
      %v2392 = vsel %vm1579, %v1770, %v2391
      %v2393 = vshrl.u32 %v2336, 16
      %v2395 = vor.u32 %v2393, %v2391
      %v2397 = vshll.u32 %v2337, 16
      %v2399 = vrot.slane %v2397, 1
      %v2400 = vsel %vm1579, %v2395, %v2399
      %v2401 = vshrl.u32 %v2337, 16
      %v2403 = vor.u32 %v2401, %v2399
      %v2405 = vshll.u32 %v2338, 16
      %v2407 = vrot.slane %v2405, 1
      %v2408 = vsel %vm1579, %v2403, %v2407
      %v2409 = vshrl.u32 %v2338, 16
      %v2411 = vor.u32 %v2409, %v2407
      %v2413 = vshll.u32 %v2387, 16
      %v2415 = vrot.slane %v2413, 1
      %v2416 = vsel %vm1579, %v2411, %v2415
      %2417 = vrot.lane.b32.xlu0 %v1615, 28
      %v2418 = vpop.permute.xlu0 %2417
      %2419 = vrot.lane.b32.xlu0 %v1623, 28
      %v2420 = vpop.permute.xlu0 %2419
      %2421 = vrot.lane.b32.xlu0 %v1631, 28
      %v2422 = vpop.permute.xlu0 %2421
      %2423 = vrot.lane.b32.xlu0 %v1639, 28
      %v2424 = vpop.permute.xlu0 %2423
      %2425 = vrot.lane.b32.xlu0 %v1647, 28
      %v2426 = vpop.permute.xlu0 %2425
      %2427 = vrot.lane.b32.xlu0 %v1655, 28
      %v2428 = vpop.permute.xlu0 %2427
      %2429 = vrot.lane.b32.xlu0 %v1663, 28
      %v2430 = vpop.permute.xlu0 %2429
      %2431 = vrot.lane.b32.xlu0 %v1671, 28
      %v2432 = vpop.permute.xlu0 %2431
      %2433 = vrot.lane.b32.xlu0 %v1679, 28
      %v2434 = vpop.permute.xlu0 %2433
      %2435 = vrot.lane.b32.xlu0 %v1687, 28
      %v2436 = vpop.permute.xlu0 %2435
      %2437 = vrot.lane.b32.xlu0 %v1695, 28
      %v2438 = vpop.permute.xlu0 %2437
      %2439 = vrot.lane.b32.xlu0 %v1703, 28
      %v2440 = vpop.permute.xlu0 %2439
      %2441 = vrot.lane.b32.xlu0 %v1711, 28
      %v2442 = vpop.permute.xlu0 %2441
      %2443 = vrot.lane.b32.xlu0 %v1719, 28
      %v2444 = vpop.permute.xlu0 %2443
      %2445 = vrot.lane.b32.xlu0 %v1727, 28
      %v2446 = vpop.permute.xlu0 %2445
      %2447 = vrot.lane.b32.xlu0 %v1735, 28
      %v2448 = vpop.permute.xlu0 %2447
      %2449 = vrot.lane.b32.xlu0 %v1743, 28
      %v2450 = vpop.permute.xlu0 %2449
      %2451 = vrot.lane.b32.xlu0 %v1751, 28
      %v2452 = vpop.permute.xlu0 %2451
      %2453 = vrot.lane.b32.xlu0 %v1759, 28
      %v2454 = vpop.permute.xlu0 %2453
      %2455 = vrot.lane.b32.xlu0 %v1767, 28
      %v2456 = vpop.permute.xlu0 %2455
      %2457 = vrot.lane.b32.xlu0 %v2392, 28
      %v2458 = vpop.permute.xlu0 %2457
      %2459 = vrot.lane.b32.xlu0 %v2400, 28
      %v2460 = vpop.permute.xlu0 %2459
      %2461 = vrot.lane.b32.xlu0 %v2408, 28
      %v2462 = vpop.permute.xlu0 %2461
      %2463 = vrot.lane.b32.xlu0 %v2416, 28
      %v2464 = vpop.permute.xlu0 %2463
      %v2465 = vrot.slane %v2336, 1
      %v2466 = vsel %vm1824, %v1870, %v2465
      %v2467 = vrot.slane %v2337, 1
      %v2468 = vsel %vm1824, %v2465, %v2467
      %v2469 = vrot.slane %v2338, 1
      %v2470 = vsel %vm1824, %v2467, %v2469
      %v2471 = vrot.slane %v2387, 1
      %v2472 = vsel %vm1824, %v2469, %v2471
      %2473 = vrot.lane.b32.xlu0 %v1833, 32
      %v2474 = vpop.permute.xlu0 %2473
      %2475 = vrot.lane.b32.xlu0 %v1835, 32
      %v2476 = vpop.permute.xlu0 %2475
      %2477 = vrot.lane.b32.xlu0 %v1837, 32
      %v2478 = vpop.permute.xlu0 %2477
      %2479 = vrot.lane.b32.xlu0 %v1839, 32
      %v2480 = vpop.permute.xlu0 %2479
      %2481 = vrot.lane.b32.xlu0 %v1841, 32
      %v2482 = vpop.permute.xlu0 %2481
      %2483 = vrot.lane.b32.xlu0 %v1843, 32
      %v2484 = vpop.permute.xlu0 %2483
      %2485 = vrot.lane.b32.xlu0 %v1845, 32
      %v2486 = vpop.permute.xlu0 %2485
      %2487 = vrot.lane.b32.xlu0 %v1847, 32
      %v2488 = vpop.permute.xlu0 %2487
      %2489 = vrot.lane.b32.xlu0 %v1849, 32
      %v2490 = vpop.permute.xlu0 %2489
      %2491 = vrot.lane.b32.xlu0 %v1851, 32
      %v2492 = vpop.permute.xlu0 %2491
      %2493 = vrot.lane.b32.xlu0 %v1853, 32
      %v2494 = vpop.permute.xlu0 %2493
      %2495 = vrot.lane.b32.xlu0 %v1855, 32
      %v2496 = vpop.permute.xlu0 %2495
      %2497 = vrot.lane.b32.xlu0 %v1857, 32
      %v2498 = vpop.permute.xlu0 %2497
      %2499 = vrot.lane.b32.xlu0 %v1859, 32
      %v2500 = vpop.permute.xlu0 %2499
      %2501 = vrot.lane.b32.xlu0 %v1861, 32
      %v2502 = vpop.permute.xlu0 %2501
      %2503 = vrot.lane.b32.xlu0 %v1863, 32
      %v2504 = vpop.permute.xlu0 %2503
      %2505 = vrot.lane.b32.xlu0 %v1865, 32
      %v2506 = vpop.permute.xlu0 %2505
      %2507 = vrot.lane.b32.xlu0 %v1867, 32
      %v2508 = vpop.permute.xlu0 %2507
      %2509 = vrot.lane.b32.xlu0 %v1869, 32
      %v2510 = vpop.permute.xlu0 %2509
      %2511 = vrot.lane.b32.xlu0 %v1871, 32
      %v2512 = vpop.permute.xlu0 %2511
      %2513 = vrot.lane.b32.xlu0 %v2466, 32
      %v2514 = vpop.permute.xlu0 %2513
      %2515 = vrot.lane.b32.xlu0 %v2468, 32
      %v2516 = vpop.permute.xlu0 %2515
      %2517 = vrot.lane.b32.xlu0 %v2470, 32
      %v2518 = vpop.permute.xlu0 %2517
      %2519 = vrot.lane.b32.xlu0 %v2472, 32
      %v2520 = vpop.permute.xlu0 %2519
      %v2522 = vsel %vm647, %v1554, %v1777
      %v2524 = vsel %vm647, %v1555, %v1779
      %v2526 = vsel %vm647, %v1556, %v1781
      %v2528 = vsel %vm647, %v1557, %v1783
      %v2530 = vsel %vm647, %v1558, %v1785
      %v2532 = vsel %vm647, %v1559, %v1787
      %v2534 = vsel %vm647, %v1560, %v1789
      %v2536 = vsel %vm647, %v1561, %v1791
      %v2538 = vsel %vm647, %v1562, %v1793
      %v2540 = vsel %vm647, %v1563, %v1795
      %v2542 = vsel %vm647, %v1564, %v1797
      %v2544 = vsel %vm647, %v1565, %v1799
      %v2546 = vsel %vm647, %v1566, %v1801
      %v2548 = vsel %vm647, %v1567, %v1803
      %v2550 = vsel %vm647, %v1568, %v1805
      %v2552 = vsel %vm647, %v1569, %v1807
      %v2554 = vsel %vm647, %v1570, %v1809
      %v2556 = vsel %vm647, %v1571, %v1811
      %v2558 = vsel %vm647, %v1572, %v1813
      %v2560 = vsel %vm647, %v1573, %v1815
      %v2562 = vsel %vm647, %v1574, %v1817
      %v2564 = vsel %vm647, %v1575, %v1819
      %v2566 = vsel %vm647, %v1576, %v1821
      %v2568 = vsel %vm647, %v1577, %v1823
      %vm2569 = vcmask 64512
      %v2571 = vsel %vm2569, %v2522, %v1875
      %v2573 = vsel %vm2569, %v2524, %v1877
      %v2575 = vsel %vm2569, %v2526, %v1879
      %v2577 = vsel %vm2569, %v2528, %v1881
      %v2579 = vsel %vm2569, %v2530, %v1883
      %v2581 = vsel %vm2569, %v2532, %v1885
      %v2583 = vsel %vm2569, %v2534, %v1887
      %v2585 = vsel %vm2569, %v2536, %v1889
      %v2587 = vsel %vm2569, %v2538, %v1891
      %v2589 = vsel %vm2569, %v2540, %v1893
      %v2591 = vsel %vm2569, %v2542, %v1895
      %v2593 = vsel %vm2569, %v2544, %v1897
      %v2595 = vsel %vm2569, %v2546, %v1899
      %v2597 = vsel %vm2569, %v2548, %v1901
      %v2599 = vsel %vm2569, %v2550, %v1903
      %v2601 = vsel %vm2569, %v2552, %v1905
      %v2603 = vsel %vm2569, %v2554, %v1907
      %v2605 = vsel %vm2569, %v2556, %v1909
      %v2607 = vsel %vm2569, %v2558, %v1911
      %v2609 = vsel %vm2569, %v2560, %v1913
      %v2611 = vsel %vm2569, %v2562, %v1915
      %v2613 = vsel %vm2569, %v2564, %v1917
      %v2615 = vsel %vm2569, %v2566, %v1919
      %v2617 = vsel %vm2569, %v2568, %v1921
      %vm2618 = vcmask 97280
      %v2620 = vsel %vm2618, %v2571, %v1947
      %v2622 = vsel %vm2618, %v2573, %v1949
      %v2624 = vsel %vm2618, %v2575, %v1951
      %v2626 = vsel %vm2618, %v2577, %v1953
      %v2628 = vsel %vm2618, %v2579, %v1955
      %v2630 = vsel %vm2618, %v2581, %v1957
      %v2632 = vsel %vm2618, %v2583, %v1959
      %v2634 = vsel %vm2618, %v2585, %v1961
      %v2636 = vsel %vm2618, %v2587, %v1963
      %v2638 = vsel %vm2618, %v2589, %v1965
      %v2640 = vsel %vm2618, %v2591, %v1967
      %v2642 = vsel %vm2618, %v2593, %v1969
      %v2644 = vsel %vm2618, %v2595, %v1971
      %v2646 = vsel %vm2618, %v2597, %v1973
      %v2648 = vsel %vm2618, %v2599, %v1975
      %v2650 = vsel %vm2618, %v2601, %v1977
      %v2652 = vsel %vm2618, %v2603, %v1979
      %v2654 = vsel %vm2618, %v2605, %v1981
      %v2656 = vsel %vm2618, %v2607, %v1983
      %v2658 = vsel %vm2618, %v2609, %v1985
      %v2660 = vsel %vm2618, %v2611, %v1987
      %v2662 = vsel %vm2618, %v2613, %v1989
      %v2664 = vsel %vm2618, %v2615, %v1991
      %v2666 = vsel %vm2618, %v2617, %v1993
      %vm2667 = vcmask 130048
      %v2669 = vsel %vm2667, %v2620, %v2192
      %v2671 = vsel %vm2667, %v2622, %v2194
      %v2673 = vsel %vm2667, %v2624, %v2196
      %v2675 = vsel %vm2667, %v2626, %v2198
      %v2677 = vsel %vm2667, %v2628, %v2200
      %v2679 = vsel %vm2667, %v2630, %v2202
      %v2681 = vsel %vm2667, %v2632, %v2204
      %v2683 = vsel %vm2667, %v2634, %v2206
      %v2685 = vsel %vm2667, %v2636, %v2208
      %v2687 = vsel %vm2667, %v2638, %v2210
      %v2689 = vsel %vm2667, %v2640, %v2212
      %v2691 = vsel %vm2667, %v2642, %v2214
      %v2693 = vsel %vm2667, %v2644, %v2216
      %v2695 = vsel %vm2667, %v2646, %v2218
      %v2697 = vsel %vm2667, %v2648, %v2220
      %v2699 = vsel %vm2667, %v2650, %v2222
      %v2701 = vsel %vm2667, %v2652, %v2224
      %v2703 = vsel %vm2667, %v2654, %v2226
      %v2705 = vsel %vm2667, %v2656, %v2228
      %v2707 = vsel %vm2667, %v2658, %v2230
      %v2709 = vsel %vm2667, %v2660, %v2232
      %v2711 = vsel %vm2667, %v2662, %v2234
      %v2713 = vsel %vm2667, %v2664, %v2236
      %v2715 = vsel %vm2667, %v2666, %v2238
      %vm2716 = vcmask 162816
      %v2718 = vsel %vm2716, %v2669, %v2289
      %v2720 = vsel %vm2716, %v2671, %v2291
      %v2722 = vsel %vm2716, %v2673, %v2293
      %v2724 = vsel %vm2716, %v2675, %v2295
      %v2726 = vsel %vm2716, %v2677, %v2297
      %v2728 = vsel %vm2716, %v2679, %v2299
      %v2730 = vsel %vm2716, %v2681, %v2301
      %v2732 = vsel %vm2716, %v2683, %v2303
      %v2734 = vsel %vm2716, %v2685, %v2305
      %v2736 = vsel %vm2716, %v2687, %v2307
      %v2738 = vsel %vm2716, %v2689, %v2309
      %v2740 = vsel %vm2716, %v2691, %v2311
      %v2742 = vsel %vm2716, %v2693, %v2313
      %v2744 = vsel %vm2716, %v2695, %v2315
      %v2746 = vsel %vm2716, %v2697, %v2317
      %v2748 = vsel %vm2716, %v2699, %v2319
      %v2750 = vsel %vm2716, %v2701, %v2321
      %v2752 = vsel %vm2716, %v2703, %v2323
      %v2754 = vsel %vm2716, %v2705, %v2325
      %v2756 = vsel %vm2716, %v2707, %v2327
      %v2758 = vsel %vm2716, %v2709, %v2329
      %v2760 = vsel %vm2716, %v2711, %v2331
      %v2762 = vsel %vm2716, %v2713, %v2333
      %v2764 = vsel %vm2716, %v2715, %v2335
      %vm2765 = vcmask 195584
      %v2767 = vsel %vm2765, %v2718, %v2340
      %v2769 = vsel %vm2765, %v2720, %v2342
      %v2771 = vsel %vm2765, %v2722, %v2344
      %v2773 = vsel %vm2765, %v2724, %v2346
      %v2775 = vsel %vm2765, %v2726, %v2348
      %v2777 = vsel %vm2765, %v2728, %v2350
      %v2779 = vsel %vm2765, %v2730, %v2352
      %v2781 = vsel %vm2765, %v2732, %v2354
      %v2783 = vsel %vm2765, %v2734, %v2356
      %v2785 = vsel %vm2765, %v2736, %v2358
      %v2787 = vsel %vm2765, %v2738, %v2360
      %v2789 = vsel %vm2765, %v2740, %v2362
      %v2791 = vsel %vm2765, %v2742, %v2364
      %v2793 = vsel %vm2765, %v2744, %v2366
      %v2795 = vsel %vm2765, %v2746, %v2368
      %v2797 = vsel %vm2765, %v2748, %v2370
      %v2799 = vsel %vm2765, %v2750, %v2372
      %v2801 = vsel %vm2765, %v2752, %v2374
      %v2803 = vsel %vm2765, %v2754, %v2376
      %v2805 = vsel %vm2765, %v2756, %v2378
      %v2807 = vsel %vm2765, %v2758, %v2380
      %v2809 = vsel %vm2765, %v2760, %v2382
      %v2811 = vsel %vm2765, %v2762, %v2384
      %v2813 = vsel %vm2765, %v2764, %v2386
      %vm2814 = vcmask 228352
      %v2816 = vsel %vm2814, %v2767, %v2418
      %v2818 = vsel %vm2814, %v2769, %v2420
      %v2820 = vsel %vm2814, %v2771, %v2422
      %v2822 = vsel %vm2814, %v2773, %v2424
      %v2824 = vsel %vm2814, %v2775, %v2426
      %v2826 = vsel %vm2814, %v2777, %v2428
      %v2828 = vsel %vm2814, %v2779, %v2430
      %v2830 = vsel %vm2814, %v2781, %v2432
      %v2832 = vsel %vm2814, %v2783, %v2434
      %v2834 = vsel %vm2814, %v2785, %v2436
      %v2836 = vsel %vm2814, %v2787, %v2438
      %v2838 = vsel %vm2814, %v2789, %v2440
      %v2840 = vsel %vm2814, %v2791, %v2442
      %v2842 = vsel %vm2814, %v2793, %v2444
      %v2844 = vsel %vm2814, %v2795, %v2446
      %v2846 = vsel %vm2814, %v2797, %v2448
      %v2848 = vsel %vm2814, %v2799, %v2450
      %v2850 = vsel %vm2814, %v2801, %v2452
      %v2852 = vsel %vm2814, %v2803, %v2454
      %v2854 = vsel %vm2814, %v2805, %v2456
      %v2856 = vsel %vm2814, %v2807, %v2458
      %v2858 = vsel %vm2814, %v2809, %v2460
      %v2860 = vsel %vm2814, %v2811, %v2462
      %v2862 = vsel %vm2814, %v2813, %v2464
      %vm2863 = vcmask 261120
      %v2865 = vsel %vm2863, %v2816, %v2474
      %v2867 = vsel %vm2863, %v2818, %v2476
      %v2869 = vsel %vm2863, %v2820, %v2478
      %v2871 = vsel %vm2863, %v2822, %v2480
      %v2873 = vsel %vm2863, %v2824, %v2482
      %v2875 = vsel %vm2863, %v2826, %v2484
      %v2877 = vsel %vm2863, %v2828, %v2486
      %v2879 = vsel %vm2863, %v2830, %v2488
      %v2881 = vsel %vm2863, %v2832, %v2490
      %v2883 = vsel %vm2863, %v2834, %v2492
      %v2885 = vsel %vm2863, %v2836, %v2494
      %v2887 = vsel %vm2863, %v2838, %v2496
      %v2889 = vsel %vm2863, %v2840, %v2498
      %v2891 = vsel %vm2863, %v2842, %v2500
      %v2893 = vsel %vm2863, %v2844, %v2502
      %v2895 = vsel %vm2863, %v2846, %v2504
      %v2897 = vsel %vm2863, %v2848, %v2506
      %v2899 = vsel %vm2863, %v2850, %v2508
      %v2901 = vsel %vm2863, %v2852, %v2510
      %v2903 = vsel %vm2863, %v2854, %v2512
      %v2905 = vsel %vm2863, %v2856, %v2514
      %v2907 = vsel %vm2863, %v2858, %v2516
      %v2909 = vsel %vm2863, %v2860, %v2518
      %v2911 = vsel %vm2863, %v2862, %v2520
      %v2912 = vld [vmem:[%s4] sm:$0xf]
      %v2913 = vld [vmem:[%s4 + $0x4] sm:$0xf]
      %v2914 = vld [vmem:[%s4 + $0x8] sm:$0xf]
      %v2915 = vld [vmem:[%s4 + $0xc] sm:$0xf]
      %v2916 = vld [vmem:[%s4 + $0x10] sm:$0x3]
      %v2917 = vld [vmem:[%s5] sm:$0x1]
      %v2919 = vlaneseq
      %v2920 = vshrl.u32 %v2919, 7
      %v2921 = vsub.s32 0, %v2920
      %v2922 = vrot.slane %v2917, %v2921
      %v2929 = vunpack.c.l.b16 %v2912
      %v2930 = vunpack.c.l.b16 %v2913
      %v2931 = vunpack.c.l.b16 %v2914
      %v2932 = vunpack.c.l.b16 %v2915
      %v2933 = vunpack.c.l.b16 %v2916
      %v2934 = vpack.c.b16 %v2930, %v2929
      %v2935 = vpack.c.b16 %v2932, %v2931
      %v2936 = vpack.c.b16 %v2933, %v2933
      %vm2939 = vcmask 293888
      %v2940 = vsel %vm2939, %v2865, 0
      %v2942 = vsel %vm2939, %v2867, 0
      %v2944 = vsel %vm2939, %v2869, 0
      %v2946 = vsel %vm2939, %v2871, 0
      %v2948 = vsel %vm2939, %v2873, 0
      %v2950 = vsel %vm2939, %v2875, 0
      %v2952 = vsel %vm2939, %v2877, 0
      %v2954 = vsel %vm2939, %v2879, 0
      %v2956 = vsel %vm2939, %v2881, 0
      %v2958 = vsel %vm2939, %v2883, 0
      %v2960 = vsel %vm2939, %v2885, 0
      %v2962 = vsel %vm2939, %v2887, 0
      %v2964 = vsel %vm2939, %v2889, 0
      %v2966 = vsel %vm2939, %v2891, 0
      %v2968 = vsel %vm2939, %v2893, 0
      %v2970 = vsel %vm2939, %v2895, 0
      %v2972 = vsel %vm2939, %v2897, 0
      %v2974 = vsel %vm2939, %v2899, 0
      %v2976 = vsel %vm2939, %v2901, 0
      %v2978 = vsel %vm2939, %v2903, 0
      %v2980 = vsel %vm2939, %v2905, 0
      %v2982 = vsel %vm2939, %v2907, 0
      %v2984 = vsel %vm2939, %v2909, 0
      %v2986 = vsel %vm2939, %v2911, 0
      %v2989 = vsel %vm735, %v2936, 0
      %2991 = vmatprep.subr.bf16.mxu0 0
      %2992 = vmatpush1.bf16.msra.mxu0 %v2934
      %2993 = vmatprep.subr.bf16.mxu0 0
      %2994 = vmatpush1.bf16.msra.mxu0 %v2935
      %2995 = vmatprep.subr.bf16.mxu0 0
      %2996 = vmatpush1.bf16.msra.mxu0 %v2989
      %2997 = vmatprep.subr.bf16.mxu0 0
      %2998 = vmatpush1.bf16.msra.mxu0 0
      %2999 = vmatprep.subr.bf16.mxu0 0
      %3000 = vmatpush1.bf16.msra.mxu0 0
      %3001 = vmatprep.subr.bf16.mxu0 0
      %3002 = vmatpush1.bf16.msra.mxu0 0
      %3003 = vmatprep.subr.bf16.mxu0 0
      %3004 = vmatpush1.bf16.msra.mxu0 0
      %3005 = vmatprep.subr.bf16.mxu0 0
      %3006 = vmatpush1.bf16.msra.mxu0 0
      %3007 = vmatprep.subr.bf16.mxu0 0
      %3008 = vmatpush1.bf16.msra.mxu0 0
      %3009 = vmatprep.subr.bf16.mxu0 0
      %3010 = vmatpush1.bf16.msra.mxu0 0
      %3011 = vmatprep.subr.bf16.mxu0 0
      %3012 = vmatpush1.bf16.msra.mxu0 0
      %3013 = vmatprep.subr.bf16.mxu0 0
      %3014 = vmatpush1.bf16.msra.mxu0 0
      %3015 = vmatprep.subr.bf16.mxu0 0
      %3016 = vmatpush1.bf16.msra.mxu0 0
      %3017 = vmatprep.subr.bf16.mxu0 0
      %3018 = vmatpush1.bf16.msra.mxu0 0
      %3019 = vmatprep.subr.bf16.mxu0 0
      %3020 = vmatpush1.bf16.msra.mxu0 0
      %3021 = vmatprep.subr.bf16.mxu0 0
      %3022 = vmatpush1.bf16.msra.mxu0 0
      %3023 = vmatprep.mubr.bf16.mxu0 0
      %3024 = vmatmul.mubr.bf16.gmra.mrb[0].mxu0 %v2940
      %v3025 = vpop.f32.mrb[0].mxu0
      %v3026 = vadd.f32 %v2922, %v3025
      %v3027 = vpop.f32.mrb[0].mxu0
      %v3028 = vpop.f32.mrb[0].mxu0
      %v3029 = vadd.f32 %v2922, %v3028
      %v3030 = vpop.f32.mrb[0].mxu0
      %3031 = vmatprep.mubr.bf16.mxu0 0
      %3032 = vmatmul.mubr.bf16.gmra.mrb[0].mxu0 %v2942
      %v3033 = vpop.f32.mrb[0].mxu0
      %v3034 = vadd.f32 %v2922, %v3033
      %v3035 = vpop.f32.mrb[0].mxu0
      %v3036 = vpop.f32.mrb[0].mxu0
      %v3037 = vadd.f32 %v2922, %v3036
      %v3038 = vpop.f32.mrb[0].mxu0
      %3039 = vmatprep.mubr.bf16.mxu0 0
      %3040 = vmatmul.mubr.bf16.gmra.mrb[0].mxu0 %v2944
      %v3041 = vpop.f32.mrb[0].mxu0
      %v3042 = vadd.f32 %v2922, %v3041
      %v3043 = vpop.f32.mrb[0].mxu0
      %v3044 = vpop.f32.mrb[0].mxu0
      %v3045 = vadd.f32 %v2922, %v3044
      %v3046 = vpop.f32.mrb[0].mxu0
      %3047 = vmatprep.mubr.bf16.mxu0 0
      %3048 = vmatmul.mubr.bf16.gmra.mrb[0].mxu0 %v2946
      %v3049 = vpop.f32.mrb[0].mxu0
      %v3050 = vadd.f32 %v2922, %v3049
      %v3051 = vpop.f32.mrb[0].mxu0
      %v3052 = vpop.f32.mrb[0].mxu0
      %v3053 = vadd.f32 %v2922, %v3052
      %v3054 = vpop.f32.mrb[0].mxu0
      %3055 = vmatprep.mubr.bf16.mxu0 0
      %3056 = vmatmul.mubr.bf16.gmra.mrb[0].mxu0 %v2948
      %v3057 = vpop.f32.mrb[0].mxu0
      %v3058 = vadd.f32 %v2922, %v3057
      %v3059 = vpop.f32.mrb[0].mxu0
      %v3060 = vpop.f32.mrb[0].mxu0
      %v3061 = vadd.f32 %v2922, %v3060
      %v3062 = vpop.f32.mrb[0].mxu0
      %3063 = vmatprep.mubr.bf16.mxu0 0
      %3064 = vmatmul.mubr.bf16.gmra.mrb[0].mxu0 %v2950
      %v3065 = vpop.f32.mrb[0].mxu0
      %v3066 = vadd.f32 %v2922, %v3065
      %v3067 = vpop.f32.mrb[0].mxu0
      %v3068 = vpop.f32.mrb[0].mxu0
      %v3069 = vadd.f32 %v2922, %v3068
      %v3070 = vpop.f32.mrb[0].mxu0
      %3071 = vmatprep.mubr.bf16.mxu0 0
      %3072 = vmatmul.mubr.bf16.gmra.mrb[0].mxu0 %v2952
      %v3073 = vpop.f32.mrb[0].mxu0
      %v3074 = vadd.f32 %v2922, %v3073
      %v3075 = vpop.f32.mrb[0].mxu0
      %v3076 = vpop.f32.mrb[0].mxu0
      %v3077 = vadd.f32 %v2922, %v3076
      %v3078 = vpop.f32.mrb[0].mxu0
      %3079 = vmatprep.mubr.bf16.mxu0 0
      %3080 = vmatmul.mubr.bf16.gmra.mrb[0].mxu0 %v2954
      %v3081 = vpop.f32.mrb[0].mxu0
      %v3082 = vadd.f32 %v2922, %v3081
      %v3083 = vpop.f32.mrb[0].mxu0
      %v3084 = vpop.f32.mrb[0].mxu0
      %v3085 = vadd.f32 %v2922, %v3084
      %v3086 = vpop.f32.mrb[0].mxu0
      %3087 = vmatprep.mubr.bf16.mxu0 0
      %3088 = vmatmul.mubr.bf16.gmra.mrb[0].mxu0 %v2956
      %v3089 = vpop.f32.mrb[0].mxu0
      %v3090 = vadd.f32 %v2922, %v3089
      %v3091 = vpop.f32.mrb[0].mxu0
      %v3092 = vpop.f32.mrb[0].mxu0
      %v3093 = vadd.f32 %v2922, %v3092
      %v3094 = vpop.f32.mrb[0].mxu0
      %3095 = vmatprep.mubr.bf16.mxu0 0
      %3096 = vmatmul.mubr.bf16.gmra.mrb[0].mxu0 %v2958
      %v3097 = vpop.f32.mrb[0].mxu0
      %v3098 = vadd.f32 %v2922, %v3097
      %v3099 = vpop.f32.mrb[0].mxu0
      %v3100 = vpop.f32.mrb[0].mxu0
      %v3101 = vadd.f32 %v2922, %v3100
      %v3102 = vpop.f32.mrb[0].mxu0
      %3103 = vmatprep.mubr.bf16.mxu0 0
      %3104 = vmatmul.mubr.bf16.gmra.mrb[0].mxu0 %v2960
      %v3105 = vpop.f32.mrb[0].mxu0
      %v3106 = vadd.f32 %v2922, %v3105
      %v3107 = vpop.f32.mrb[0].mxu0
      %v3108 = vpop.f32.mrb[0].mxu0
      %v3109 = vadd.f32 %v2922, %v3108
      %v3110 = vpop.f32.mrb[0].mxu0
      %3111 = vmatprep.mubr.bf16.mxu0 0
      %3112 = vmatmul.mubr.bf16.gmra.mrb[0].mxu0 %v2962
      %v3113 = vpop.f32.mrb[0].mxu0
      %v3114 = vadd.f32 %v2922, %v3113
      %v3115 = vpop.f32.mrb[0].mxu0
      %v3116 = vpop.f32.mrb[0].mxu0
      %v3117 = vadd.f32 %v2922, %v3116
      %v3118 = vpop.f32.mrb[0].mxu0
      %3119 = vmatprep.mubr.bf16.mxu0 0
      %3120 = vmatmul.mubr.bf16.gmra.mrb[0].mxu0 %v2964
      %v3121 = vpop.f32.mrb[0].mxu0
      %v3122 = vadd.f32 %v2922, %v3121
      %v3123 = vpop.f32.mrb[0].mxu0
      %v3124 = vpop.f32.mrb[0].mxu0
      %v3125 = vadd.f32 %v2922, %v3124
      %v3126 = vpop.f32.mrb[0].mxu0
      %3127 = vmatprep.mubr.bf16.mxu0 0
      %3128 = vmatmul.mubr.bf16.gmra.mrb[0].mxu0 %v2966
      %v3129 = vpop.f32.mrb[0].mxu0
      %v3130 = vadd.f32 %v2922, %v3129
      %v3131 = vpop.f32.mrb[0].mxu0
      %v3132 = vpop.f32.mrb[0].mxu0
      %v3133 = vadd.f32 %v2922, %v3132
      %v3134 = vpop.f32.mrb[0].mxu0
      %3135 = vmatprep.mubr.bf16.mxu0 0
      %3136 = vmatmul.mubr.bf16.gmra.mrb[0].mxu0 %v2968
      %v3137 = vpop.f32.mrb[0].mxu0
      %v3138 = vadd.f32 %v2922, %v3137
      %v3139 = vpop.f32.mrb[0].mxu0
      %v3140 = vpop.f32.mrb[0].mxu0
      %v3141 = vadd.f32 %v2922, %v3140
      %v3142 = vpop.f32.mrb[0].mxu0
      %3143 = vmatprep.mubr.bf16.mxu0 0
      %3144 = vmatmul.mubr.bf16.gmra.mrb[0].mxu0 %v2970
      %v3145 = vpop.f32.mrb[0].mxu0
      %v3146 = vadd.f32 %v2922, %v3145
      %v3147 = vpop.f32.mrb[0].mxu0
      %v3148 = vpop.f32.mrb[0].mxu0
      %v3149 = vadd.f32 %v2922, %v3148
      %v3150 = vpop.f32.mrb[0].mxu0
      %3151 = vmatprep.mubr.bf16.mxu0 0
      %3152 = vmatmul.mubr.bf16.gmra.mrb[0].mxu0 %v2972
      %v3153 = vpop.f32.mrb[0].mxu0
      %v3154 = vadd.f32 %v2922, %v3153
      %v3155 = vpop.f32.mrb[0].mxu0
      %v3156 = vpop.f32.mrb[0].mxu0
      %v3157 = vadd.f32 %v2922, %v3156
      %v3158 = vpop.f32.mrb[0].mxu0
      %3159 = vmatprep.mubr.bf16.mxu0 0
      %3160 = vmatmul.mubr.bf16.gmra.mrb[0].mxu0 %v2974
      %v3161 = vpop.f32.mrb[0].mxu0
      %v3162 = vadd.f32 %v2922, %v3161
      %v3163 = vpop.f32.mrb[0].mxu0
      %v3164 = vpop.f32.mrb[0].mxu0
      %v3165 = vadd.f32 %v2922, %v3164
      %v3166 = vpop.f32.mrb[0].mxu0
      %3167 = vmatprep.mubr.bf16.mxu0 0
      %3168 = vmatmul.mubr.bf16.gmra.mrb[0].mxu0 %v2976
      %v3169 = vpop.f32.mrb[0].mxu0
      %v3170 = vadd.f32 %v2922, %v3169
      %v3171 = vpop.f32.mrb[0].mxu0
      %v3172 = vpop.f32.mrb[0].mxu0
      %v3173 = vadd.f32 %v2922, %v3172
      %v3174 = vpop.f32.mrb[0].mxu0
      %3175 = vmatprep.mubr.bf16.mxu0 0
      %3176 = vmatmul.mubr.bf16.gmra.mrb[0].mxu0 %v2978
      %v3177 = vpop.f32.mrb[0].mxu0
      %v3178 = vadd.f32 %v2922, %v3177
      %v3179 = vpop.f32.mrb[0].mxu0
      %v3180 = vpop.f32.mrb[0].mxu0
      %v3181 = vadd.f32 %v2922, %v3180
      %v3182 = vpop.f32.mrb[0].mxu0
      %3183 = vmatprep.mubr.bf16.mxu0 0
      %3184 = vmatmul.mubr.bf16.gmra.mrb[0].mxu0 %v2980
      %v3185 = vpop.f32.mrb[0].mxu0
      %v3186 = vadd.f32 %v2922, %v3185
      %v3187 = vpop.f32.mrb[0].mxu0
      %v3188 = vpop.f32.mrb[0].mxu0
      %v3189 = vadd.f32 %v2922, %v3188
      %v3190 = vpop.f32.mrb[0].mxu0
      %3191 = vmatprep.mubr.bf16.mxu0 0
      %3192 = vmatmul.mubr.bf16.gmra.mrb[0].mxu0 %v2982
      %v3193 = vpop.f32.mrb[0].mxu0
      %v3194 = vadd.f32 %v2922, %v3193
      %v3195 = vpop.f32.mrb[0].mxu0
      %v3196 = vpop.f32.mrb[0].mxu0
      %v3197 = vadd.f32 %v2922, %v3196
      %v3198 = vpop.f32.mrb[0].mxu0
      %3199 = vmatprep.mubr.bf16.mxu0 0
      %3200 = vmatmul.mubr.bf16.gmra.mrb[0].mxu0 %v2984
      %v3201 = vpop.f32.mrb[0].mxu0
      %v3202 = vadd.f32 %v2922, %v3201
      %v3203 = vpop.f32.mrb[0].mxu0
      %v3204 = vpop.f32.mrb[0].mxu0
      %v3205 = vadd.f32 %v2922, %v3204
      %v3206 = vpop.f32.mrb[0].mxu0
      %3207 = vmatprep.mubr.bf16.mxu0 0
      %3208 = vmatmul.mubr.bf16.gmra.mrb[0].mxu0 %v2986
      %v3209 = vpop.f32.mrb[0].mxu0
      %v3210 = vadd.f32 %v2922, %v3209
      %v3211 = vpop.f32.mrb[0].mxu0
      %v3212 = vpop.f32.mrb[0].mxu0
      %v3213 = vadd.f32 %v2922, %v3212
      %v3214 = vpop.f32.mrb[0].mxu0
      %3215 = vdwg.mxu0
      %v3216 = vmax.f32 %v3026, 0.0
      %v3217 = vmax.f32 %v3029, 0.0
      %v3218 = vmax.f32 %v3034, 0.0
      %v3219 = vmax.f32 %v3037, 0.0
      %v3220 = vmax.f32 %v3042, 0.0
      %v3221 = vmax.f32 %v3045, 0.0
      %v3222 = vmax.f32 %v3050, 0.0
      %v3223 = vmax.f32 %v3053, 0.0
      %v3224 = vmax.f32 %v3058, 0.0
      %v3225 = vmax.f32 %v3061, 0.0
      %v3226 = vmax.f32 %v3066, 0.0
      %v3227 = vmax.f32 %v3069, 0.0
      %v3228 = vmax.f32 %v3074, 0.0
      %v3229 = vmax.f32 %v3077, 0.0
      %v3230 = vmax.f32 %v3082, 0.0
      %v3231 = vmax.f32 %v3085, 0.0
      %v3232 = vmax.f32 %v3090, 0.0
      %v3233 = vmax.f32 %v3093, 0.0
      %v3234 = vmax.f32 %v3098, 0.0
      %v3235 = vmax.f32 %v3101, 0.0
      %v3236 = vmax.f32 %v3106, 0.0
      %v3237 = vmax.f32 %v3109, 0.0
      %v3238 = vmax.f32 %v3114, 0.0
      %v3239 = vmax.f32 %v3117, 0.0
      %v3240 = vmax.f32 %v3122, 0.0
      %v3241 = vmax.f32 %v3125, 0.0
      %v3242 = vmax.f32 %v3130, 0.0
      %v3243 = vmax.f32 %v3133, 0.0
      %v3244 = vmax.f32 %v3138, 0.0
      %v3245 = vmax.f32 %v3141, 0.0
      %v3246 = vmax.f32 %v3146, 0.0
      %v3247 = vmax.f32 %v3149, 0.0
      %v3248 = vmax.f32 %v3154, 0.0
      %v3249 = vmax.f32 %v3157, 0.0
      %v3250 = vmax.f32 %v3162, 0.0
      %v3251 = vmax.f32 %v3165, 0.0
      %v3252 = vmax.f32 %v3170, 0.0
      %v3253 = vmax.f32 %v3173, 0.0
      %v3254 = vmax.f32 %v3178, 0.0
      %v3255 = vmax.f32 %v3181, 0.0
      %v3256 = vmax.f32 %v3186, 0.0
      %v3257 = vmax.f32 %v3189, 0.0
      %v3258 = vmax.f32 %v3194, 0.0
      %v3259 = vmax.f32 %v3197, 0.0
      %v3260 = vmax.f32 %v3202, 0.0
      %v3261 = vmax.f32 %v3205, 0.0
      %v3262 = vmax.f32 %v3210, 0.0
      %v3263 = vmax.f32 %v3213, 0.0
      %v3264 = vpack.c.bf16 %v3217, %v3216
      %v3265 = vpack.c.bf16 %v3219, %v3218
      %v3266 = vpack.c.bf16 %v3221, %v3220
      %v3267 = vpack.c.bf16 %v3223, %v3222
      %v3268 = vpack.c.bf16 %v3225, %v3224
      %v3269 = vpack.c.bf16 %v3227, %v3226
      %v3270 = vpack.c.bf16 %v3229, %v3228
      %v3271 = vpack.c.bf16 %v3231, %v3230
      %v3272 = vpack.c.bf16 %v3233, %v3232
      %v3273 = vpack.c.bf16 %v3235, %v3234
      %v3274 = vpack.c.bf16 %v3237, %v3236
      %v3275 = vpack.c.bf16 %v3239, %v3238
      %v3276 = vpack.c.bf16 %v3241, %v3240
      %v3277 = vpack.c.bf16 %v3243, %v3242
      %v3278 = vpack.c.bf16 %v3245, %v3244
      %v3279 = vpack.c.bf16 %v3247, %v3246
      %v3280 = vpack.c.bf16 %v3249, %v3248
      %v3281 = vpack.c.bf16 %v3251, %v3250
      %v3282 = vpack.c.bf16 %v3253, %v3252
      %v3283 = vpack.c.bf16 %v3255, %v3254
      %v3284 = vpack.c.bf16 %v3257, %v3256
      %v3285 = vpack.c.bf16 %v3259, %v3258
      %v3286 = vpack.c.bf16 %v3261, %v3260
      %v3287 = vpack.c.bf16 %v3263, %v3262
      %v3288 = vld [vmem:[%s6] sm:$0x3]
      %v3289 = vld [vmem:[%s7] sm:$0x1]
      %v3291 = vlaneseq
      %v3292 = vshrl.u32 %v3291, 7
      %v3293 = vsub.s32 0, %v3292
      %v3294 = vrot.slane %v3289, %v3293
      %v3297 = vsel %vm647, %v3264, 0
      %v3300 = vsel %vm647, %v3265, 0
      %v3303 = vsel %vm647, %v3266, 0
      %v3306 = vsel %vm647, %v3267, 0
      %v3309 = vsel %vm647, %v3268, 0
      %v3312 = vsel %vm647, %v3269, 0
      %v3315 = vsel %vm647, %v3270, 0
      %v3318 = vsel %vm647, %v3271, 0
      %v3321 = vsel %vm647, %v3272, 0
      %v3324 = vsel %vm647, %v3273, 0
      %v3327 = vsel %vm647, %v3274, 0
      %v3330 = vsel %vm647, %v3275, 0
      %v3333 = vsel %vm647, %v3276, 0
      %v3336 = vsel %vm647, %v3277, 0
      %v3339 = vsel %vm647, %v3278, 0
      %v3342 = vsel %vm647, %v3279, 0
      %v3345 = vsel %vm647, %v3280, 0
      %v3348 = vsel %vm647, %v3281, 0
      %v3351 = vsel %vm647, %v3282, 0
      %v3354 = vsel %vm647, %v3283, 0
      %v3357 = vsel %vm647, %v3284, 0
      %v3360 = vsel %vm647, %v3285, 0
      %v3363 = vsel %vm647, %v3286, 0
      %v3366 = vsel %vm647, %v3287, 0
      %v3369 = vsel %vm735, %v3288, 0
      %3371 = vmatprep.subr.bf16.mxu0 0
      %3372 = vmatpush1.bf16.msra.mxu0 %v3369
      %3373 = vmatprep.subr.bf16.mxu0 0
      %3374 = vmatpush1.bf16.msra.mxu0 0
      %3375 = vmatprep.subr.bf16.mxu0 0
      %3376 = vmatpush1.bf16.msra.mxu0 0
      %3377 = vmatprep.subr.bf16.mxu0 0
      %3378 = vmatpush1.bf16.msra.mxu0 0
      %3379 = vmatprep.subr.bf16.mxu0 0
      %3380 = vmatpush1.bf16.msra.mxu0 0
      %3381 = vmatprep.subr.bf16.mxu0 0
      %3382 = vmatpush1.bf16.msra.mxu0 0
      %3383 = vmatprep.subr.bf16.mxu0 0
      %3384 = vmatpush1.bf16.msra.mxu0 0
      %3385 = vmatprep.subr.bf16.mxu0 0
      %3386 = vmatpush1.bf16.msra.mxu0 0
      %3387 = vmatprep.subr.bf16.mxu0 0
      %3388 = vmatpush1.bf16.msra.mxu0 0
      %3389 = vmatprep.subr.bf16.mxu0 0
      %3390 = vmatpush1.bf16.msra.mxu0 0
      %3391 = vmatprep.subr.bf16.mxu0 0
      %3392 = vmatpush1.bf16.msra.mxu0 0
      %3393 = vmatprep.subr.bf16.mxu0 0
      %3394 = vmatpush1.bf16.msra.mxu0 0
      %3395 = vmatprep.subr.bf16.mxu0 0
      %3396 = vmatpush1.bf16.msra.mxu0 0
      %3397 = vmatprep.subr.bf16.mxu0 0
      %3398 = vmatpush1.bf16.msra.mxu0 0
      %3399 = vmatprep.subr.bf16.mxu0 0
      %3400 = vmatpush1.bf16.msra.mxu0 0
      %3401 = vmatprep.subr.bf16.mxu0 0
      %3402 = vmatpush1.bf16.msra.mxu0 0
      %3403 = vmatprep.mubr.bf16.mxu0 0
      %3404 = vmatmul.mubr.bf16.gmra.mrb[0].mxu0 %v3297
      %v3405 = vpop.f32.mrb[0].mxu0
      %v3406 = vadd.f32 %v3294, %v3405
      %v3407 = vpop.f32.mrb[0].mxu0
      %v3408 = vpop.f32.mrb[0].mxu0
      %v3409 = vadd.f32 %v3294, %v3408
      %v3410 = vpop.f32.mrb[0].mxu0
      %3411 = vmatprep.mubr.bf16.mxu0 0
      %3412 = vmatmul.mubr.bf16.gmra.mrb[0].mxu0 %v3300
      %v3413 = vpop.f32.mrb[0].mxu0
      %v3414 = vadd.f32 %v3294, %v3413
      %v3415 = vpop.f32.mrb[0].mxu0
      %v3416 = vpop.f32.mrb[0].mxu0
      %v3417 = vadd.f32 %v3294, %v3416
      %v3418 = vpop.f32.mrb[0].mxu0
      %3419 = vmatprep.mubr.bf16.mxu0 0
      %3420 = vmatmul.mubr.bf16.gmra.mrb[0].mxu0 %v3303
      %v3421 = vpop.f32.mrb[0].mxu0
      %v3422 = vadd.f32 %v3294, %v3421
      %v3423 = vpop.f32.mrb[0].mxu0
      %v3424 = vpop.f32.mrb[0].mxu0
      %v3425 = vadd.f32 %v3294, %v3424
      %v3426 = vpop.f32.mrb[0].mxu0
      %3427 = vmatprep.mubr.bf16.mxu0 0
      %3428 = vmatmul.mubr.bf16.gmra.mrb[0].mxu0 %v3306
      %v3429 = vpop.f32.mrb[0].mxu0
      %v3430 = vadd.f32 %v3294, %v3429
      %v3431 = vpop.f32.mrb[0].mxu0
      %v3432 = vpop.f32.mrb[0].mxu0
      %v3433 = vadd.f32 %v3294, %v3432
      %v3434 = vpop.f32.mrb[0].mxu0
      %3435 = vmatprep.mubr.bf16.mxu0 0
      %3436 = vmatmul.mubr.bf16.gmra.mrb[0].mxu0 %v3309
      %v3437 = vpop.f32.mrb[0].mxu0
      %v3438 = vadd.f32 %v3294, %v3437
      %v3439 = vpop.f32.mrb[0].mxu0
      %v3440 = vpop.f32.mrb[0].mxu0
      %v3441 = vadd.f32 %v3294, %v3440
      %v3442 = vpop.f32.mrb[0].mxu0
      %3443 = vmatprep.mubr.bf16.mxu0 0
      %3444 = vmatmul.mubr.bf16.gmra.mrb[0].mxu0 %v3312
      %v3445 = vpop.f32.mrb[0].mxu0
      %v3446 = vadd.f32 %v3294, %v3445
      %v3447 = vpop.f32.mrb[0].mxu0
      %v3448 = vpop.f32.mrb[0].mxu0
      %v3449 = vadd.f32 %v3294, %v3448
      %v3450 = vpop.f32.mrb[0].mxu0
      %3451 = vmatprep.mubr.bf16.mxu0 0
      %3452 = vmatmul.mubr.bf16.gmra.mrb[0].mxu0 %v3315
      %v3453 = vpop.f32.mrb[0].mxu0
      %v3454 = vadd.f32 %v3294, %v3453
      %v3455 = vpop.f32.mrb[0].mxu0
      %v3456 = vpop.f32.mrb[0].mxu0
      %v3457 = vadd.f32 %v3294, %v3456
      %v3458 = vpop.f32.mrb[0].mxu0
      %3459 = vmatprep.mubr.bf16.mxu0 0
      %3460 = vmatmul.mubr.bf16.gmra.mrb[0].mxu0 %v3318
      %v3461 = vpop.f32.mrb[0].mxu0
      %v3462 = vadd.f32 %v3294, %v3461
      %v3463 = vpop.f32.mrb[0].mxu0
      %v3464 = vpop.f32.mrb[0].mxu0
      %v3465 = vadd.f32 %v3294, %v3464
      %v3466 = vpop.f32.mrb[0].mxu0
      %3467 = vmatprep.mubr.bf16.mxu0 0
      %3468 = vmatmul.mubr.bf16.gmra.mrb[0].mxu0 %v3321
      %v3469 = vpop.f32.mrb[0].mxu0
      %v3470 = vadd.f32 %v3294, %v3469
      %v3471 = vpop.f32.mrb[0].mxu0
      %v3472 = vpop.f32.mrb[0].mxu0
      %v3473 = vadd.f32 %v3294, %v3472
      %v3474 = vpop.f32.mrb[0].mxu0
      %3475 = vmatprep.mubr.bf16.mxu0 0
      %3476 = vmatmul.mubr.bf16.gmra.mrb[0].mxu0 %v3324
      %v3477 = vpop.f32.mrb[0].mxu0
      %v3478 = vadd.f32 %v3294, %v3477
      %v3479 = vpop.f32.mrb[0].mxu0
      %v3480 = vpop.f32.mrb[0].mxu0
      %v3481 = vadd.f32 %v3294, %v3480
      %v3482 = vpop.f32.mrb[0].mxu0
      %3483 = vmatprep.mubr.bf16.mxu0 0
      %3484 = vmatmul.mubr.bf16.gmra.mrb[0].mxu0 %v3327
      %v3485 = vpop.f32.mrb[0].mxu0
      %v3486 = vadd.f32 %v3294, %v3485
      %v3487 = vpop.f32.mrb[0].mxu0
      %v3488 = vpop.f32.mrb[0].mxu0
      %v3489 = vadd.f32 %v3294, %v3488
      %v3490 = vpop.f32.mrb[0].mxu0
      %3491 = vmatprep.mubr.bf16.mxu0 0
      %3492 = vmatmul.mubr.bf16.gmra.mrb[0].mxu0 %v3330
      %v3493 = vpop.f32.mrb[0].mxu0
      %v3494 = vadd.f32 %v3294, %v3493
      %v3495 = vpop.f32.mrb[0].mxu0
      %v3496 = vpop.f32.mrb[0].mxu0
      %v3497 = vadd.f32 %v3294, %v3496
      %v3498 = vpop.f32.mrb[0].mxu0
      %3499 = vmatprep.mubr.bf16.mxu0 0
      %3500 = vmatmul.mubr.bf16.gmra.mrb[0].mxu0 %v3333
      %v3501 = vpop.f32.mrb[0].mxu0
      %v3502 = vadd.f32 %v3294, %v3501
      %v3503 = vpop.f32.mrb[0].mxu0
      %v3504 = vpop.f32.mrb[0].mxu0
      %v3505 = vadd.f32 %v3294, %v3504
      %v3506 = vpop.f32.mrb[0].mxu0
      %3507 = vmatprep.mubr.bf16.mxu0 0
      %3508 = vmatmul.mubr.bf16.gmra.mrb[0].mxu0 %v3336
      %v3509 = vpop.f32.mrb[0].mxu0
      %v3510 = vadd.f32 %v3294, %v3509
      %v3511 = vpop.f32.mrb[0].mxu0
      %v3512 = vpop.f32.mrb[0].mxu0
      %v3513 = vadd.f32 %v3294, %v3512
      %v3514 = vpop.f32.mrb[0].mxu0
      %3515 = vmatprep.mubr.bf16.mxu0 0
      %3516 = vmatmul.mubr.bf16.gmra.mrb[0].mxu0 %v3339
      %v3517 = vpop.f32.mrb[0].mxu0
      %v3518 = vadd.f32 %v3294, %v3517
      %v3519 = vpop.f32.mrb[0].mxu0
      %v3520 = vpop.f32.mrb[0].mxu0
      %v3521 = vadd.f32 %v3294, %v3520
      %v3522 = vpop.f32.mrb[0].mxu0
      %3523 = vmatprep.mubr.bf16.mxu0 0
      %3524 = vmatmul.mubr.bf16.gmra.mrb[0].mxu0 %v3342
      %v3525 = vpop.f32.mrb[0].mxu0
      %v3526 = vadd.f32 %v3294, %v3525
      %v3527 = vpop.f32.mrb[0].mxu0
      %v3528 = vpop.f32.mrb[0].mxu0
      %v3529 = vadd.f32 %v3294, %v3528
      %v3530 = vpop.f32.mrb[0].mxu0
      %3531 = vmatprep.mubr.bf16.mxu0 0
      %3532 = vmatmul.mubr.bf16.gmra.mrb[0].mxu0 %v3345
      %v3533 = vpop.f32.mrb[0].mxu0
      %v3534 = vadd.f32 %v3294, %v3533
      %v3535 = vpop.f32.mrb[0].mxu0
      %v3536 = vpop.f32.mrb[0].mxu0
      %v3537 = vadd.f32 %v3294, %v3536
      %v3538 = vpop.f32.mrb[0].mxu0
      %3539 = vmatprep.mubr.bf16.mxu0 0
      %3540 = vmatmul.mubr.bf16.gmra.mrb[0].mxu0 %v3348
      %v3541 = vpop.f32.mrb[0].mxu0
      %v3542 = vadd.f32 %v3294, %v3541
      %v3543 = vpop.f32.mrb[0].mxu0
      %v3544 = vpop.f32.mrb[0].mxu0
      %v3545 = vadd.f32 %v3294, %v3544
      %v3546 = vpop.f32.mrb[0].mxu0
      %3547 = vmatprep.mubr.bf16.mxu0 0
      %3548 = vmatmul.mubr.bf16.gmra.mrb[0].mxu0 %v3351
      %v3549 = vpop.f32.mrb[0].mxu0
      %v3550 = vadd.f32 %v3294, %v3549
      %v3551 = vpop.f32.mrb[0].mxu0
      %v3552 = vpop.f32.mrb[0].mxu0
      %v3553 = vadd.f32 %v3294, %v3552
      %v3554 = vpop.f32.mrb[0].mxu0
      %3555 = vmatprep.mubr.bf16.mxu0 0
      %3556 = vmatmul.mubr.bf16.gmra.mrb[0].mxu0 %v3354
      %v3557 = vpop.f32.mrb[0].mxu0
      %v3558 = vadd.f32 %v3294, %v3557
      %v3559 = vpop.f32.mrb[0].mxu0
      %v3560 = vpop.f32.mrb[0].mxu0
      %v3561 = vadd.f32 %v3294, %v3560
      %v3562 = vpop.f32.mrb[0].mxu0
      %3563 = vmatprep.mubr.bf16.mxu0 0
      %3564 = vmatmul.mubr.bf16.gmra.mrb[0].mxu0 %v3357
      %v3565 = vpop.f32.mrb[0].mxu0
      %v3566 = vadd.f32 %v3294, %v3565
      %v3567 = vpop.f32.mrb[0].mxu0
      %v3568 = vpop.f32.mrb[0].mxu0
      %v3569 = vadd.f32 %v3294, %v3568
      %v3570 = vpop.f32.mrb[0].mxu0
      %3571 = vmatprep.mubr.bf16.mxu0 0
      %3572 = vmatmul.mubr.bf16.gmra.mrb[0].mxu0 %v3360
      %v3573 = vpop.f32.mrb[0].mxu0
      %v3574 = vadd.f32 %v3294, %v3573
      %v3575 = vpop.f32.mrb[0].mxu0
      %v3576 = vpop.f32.mrb[0].mxu0
      %v3577 = vadd.f32 %v3294, %v3576
      %v3578 = vpop.f32.mrb[0].mxu0
      %3579 = vmatprep.mubr.bf16.mxu0 0
      %3580 = vmatmul.mubr.bf16.gmra.mrb[0].mxu0 %v3363
      %v3581 = vpop.f32.mrb[0].mxu0
      %v3582 = vadd.f32 %v3294, %v3581
      %v3583 = vpop.f32.mrb[0].mxu0
      %v3584 = vpop.f32.mrb[0].mxu0
      %v3585 = vadd.f32 %v3294, %v3584
      %v3586 = vpop.f32.mrb[0].mxu0
      %3587 = vmatprep.mubr.bf16.mxu0 0
      %3588 = vmatmul.mubr.bf16.gmra.mrb[0].mxu0 %v3366
      %v3589 = vpop.f32.mrb[0].mxu0
      %v3590 = vadd.f32 %v3294, %v3589
      %v3591 = vpop.f32.mrb[0].mxu0
      %v3592 = vpop.f32.mrb[0].mxu0
      %v3593 = vadd.f32 %v3294, %v3592
      %v3594 = vpop.f32.mrb[0].mxu0
      %3595 = vdwg.mxu0
      %v3596 = vmax.f32 %v3406, 0.0
      %v3597 = vmax.f32 %v3409, 0.0
      %v3598 = vmax.f32 %v3414, 0.0
      %v3599 = vmax.f32 %v3417, 0.0
      %v3600 = vmax.f32 %v3422, 0.0
      %v3601 = vmax.f32 %v3425, 0.0
      %v3602 = vmax.f32 %v3430, 0.0
      %v3603 = vmax.f32 %v3433, 0.0
      %v3604 = vmax.f32 %v3438, 0.0
      %v3605 = vmax.f32 %v3441, 0.0
      %v3606 = vmax.f32 %v3446, 0.0
      %v3607 = vmax.f32 %v3449, 0.0
      %v3608 = vmax.f32 %v3454, 0.0
      %v3609 = vmax.f32 %v3457, 0.0
      %v3610 = vmax.f32 %v3462, 0.0
      %v3611 = vmax.f32 %v3465, 0.0
      %v3612 = vmax.f32 %v3470, 0.0
      %v3613 = vmax.f32 %v3473, 0.0
      %v3614 = vmax.f32 %v3478, 0.0
      %v3615 = vmax.f32 %v3481, 0.0
      %v3616 = vmax.f32 %v3486, 0.0
      %v3617 = vmax.f32 %v3489, 0.0
      %v3618 = vmax.f32 %v3494, 0.0
      %v3619 = vmax.f32 %v3497, 0.0
      %v3620 = vmax.f32 %v3502, 0.0
      %v3621 = vmax.f32 %v3505, 0.0
      %v3622 = vmax.f32 %v3510, 0.0
      %v3623 = vmax.f32 %v3513, 0.0
      %v3624 = vmax.f32 %v3518, 0.0
      %v3625 = vmax.f32 %v3521, 0.0
      %v3626 = vmax.f32 %v3526, 0.0
      %v3627 = vmax.f32 %v3529, 0.0
      %v3628 = vmax.f32 %v3534, 0.0
      %v3629 = vmax.f32 %v3537, 0.0
      %v3630 = vmax.f32 %v3542, 0.0
      %v3631 = vmax.f32 %v3545, 0.0
      %v3632 = vmax.f32 %v3550, 0.0
      %v3633 = vmax.f32 %v3553, 0.0
      %v3634 = vmax.f32 %v3558, 0.0
      %v3635 = vmax.f32 %v3561, 0.0
      %v3636 = vmax.f32 %v3566, 0.0
      %v3637 = vmax.f32 %v3569, 0.0
      %v3638 = vmax.f32 %v3574, 0.0
      %v3639 = vmax.f32 %v3577, 0.0
      %v3640 = vmax.f32 %v3582, 0.0
      %v3641 = vmax.f32 %v3585, 0.0
      %v3642 = vmax.f32 %v3590, 0.0
      %v3643 = vmax.f32 %v3593, 0.0
      %v3644 = vld [vmem:[%s8] sm:$0x3]
      %v3645 = vld [vmem:[%s9] sm:$0x1]
      %v3647 = vlaneseq
      %v3648 = vshrl.u32 %v3647, 7
      %v3649 = vsub.s32 0, %v3648
      %v3650 = vrot.slane %v3645, %v3649
      %v3652 = vpack.c.b16 %v565, %v564
      %v3653 = vpack.c.b16 %v567, %v566
      %v3654 = vpack.c.b16 %v569, %v568
      %v3655 = vpack.c.b16 %v571, %v570
      %v3656 = vpack.c.b16 %v573, %v572
      %v3657 = vpack.c.b16 %v575, %v574
      %v3658 = vpack.c.b16 %v577, %v576
      %v3659 = vpack.c.b16 %v579, %v578
      %v3660 = vpack.c.b16 %v581, %v580
      %v3661 = vpack.c.b16 %v583, %v582
      %v3662 = vpack.c.b16 %v585, %v584
      %v3663 = vpack.c.b16 %v587, %v586
      %v3664 = vpack.c.b16 %v589, %v588
      %v3665 = vpack.c.b16 %v591, %v590
      %v3666 = vpack.c.b16 %v593, %v592
      %v3667 = vpack.c.b16 %v595, %v594
      %v3668 = vpack.c.b16 %v597, %v596
      %v3669 = vpack.c.b16 %v599, %v598
      %v3670 = vpack.c.b16 %v601, %v600
      %v3671 = vpack.c.b16 %v603, %v602
      %v3672 = vpack.c.b16 %v605, %v604
      %v3673 = vpack.c.b16 %v607, %v606
      %v3674 = vpack.c.b16 %v609, %v608
      %v3675 = vpack.c.b16 %v611, %v610
      %v3676 = vpack.c.b16 %v612, %v612
      %v3678 = vshrl.u32 %v3652, 16
      %v3680 = vshll.u32 %v3652, 16
      %v3682 = vrot.slane %v3680, 1
      %v3683 = vor.u32 %v3678, %v3682
      %v3685 = vshll.u32 %v3653, 16
      %v3687 = vrot.slane %v3685, 1
      %v3688 = vsel %vm1579, %v3683, %v3687
      %v3689 = vshrl.u32 %v3653, 16
      %v3691 = vor.u32 %v3689, %v3687
      %v3693 = vshll.u32 %v3654, 16
      %v3695 = vrot.slane %v3693, 1
      %v3696 = vsel %vm1579, %v3691, %v3695
      %v3697 = vshrl.u32 %v3654, 16
      %v3699 = vor.u32 %v3697, %v3695
      %v3701 = vshll.u32 %v3655, 16
      %v3703 = vrot.slane %v3701, 1
      %v3704 = vsel %vm1579, %v3699, %v3703
      %v3705 = vshrl.u32 %v3655, 16
      %v3707 = vor.u32 %v3705, %v3703
      %v3709 = vshll.u32 %v3656, 16
      %v3711 = vrot.slane %v3709, 1
      %v3712 = vsel %vm1579, %v3707, %v3711
      %v3713 = vshrl.u32 %v3656, 16
      %v3715 = vor.u32 %v3713, %v3711
      %v3717 = vshll.u32 %v3657, 16
      %v3719 = vrot.slane %v3717, 1
      %v3720 = vsel %vm1579, %v3715, %v3719
      %v3721 = vshrl.u32 %v3657, 16
      %v3723 = vor.u32 %v3721, %v3719
      %v3725 = vshll.u32 %v3658, 16
      %v3727 = vrot.slane %v3725, 1
      %v3728 = vsel %vm1579, %v3723, %v3727
      %v3729 = vshrl.u32 %v3658, 16
      %v3731 = vor.u32 %v3729, %v3727
      %v3733 = vshll.u32 %v3659, 16
      %v3735 = vrot.slane %v3733, 1
      %v3736 = vsel %vm1579, %v3731, %v3735
      %v3737 = vshrl.u32 %v3659, 16
      %v3739 = vor.u32 %v3737, %v3735
      %v3741 = vshll.u32 %v3660, 16
      %v3743 = vrot.slane %v3741, 1
      %v3744 = vsel %vm1579, %v3739, %v3743
      %v3745 = vshrl.u32 %v3660, 16
      %v3747 = vor.u32 %v3745, %v3743
      %v3749 = vshll.u32 %v3661, 16
      %v3751 = vrot.slane %v3749, 1
      %v3752 = vsel %vm1579, %v3747, %v3751
      %v3753 = vshrl.u32 %v3661, 16
      %v3755 = vor.u32 %v3753, %v3751
      %v3757 = vshll.u32 %v3662, 16
      %v3759 = vrot.slane %v3757, 1
      %v3760 = vsel %vm1579, %v3755, %v3759
      %v3761 = vshrl.u32 %v3662, 16
      %v3763 = vor.u32 %v3761, %v3759
      %v3765 = vshll.u32 %v3663, 16
      %v3767 = vrot.slane %v3765, 1
      %v3768 = vsel %vm1579, %v3763, %v3767
      %v3769 = vshrl.u32 %v3663, 16
      %v3771 = vor.u32 %v3769, %v3767
      %v3773 = vshll.u32 %v3664, 16
      %v3775 = vrot.slane %v3773, 1
      %v3776 = vsel %vm1579, %v3771, %v3775
      %v3777 = vshrl.u32 %v3664, 16
      %v3779 = vor.u32 %v3777, %v3775
      %v3781 = vshll.u32 %v3665, 16
      %v3783 = vrot.slane %v3781, 1
      %v3784 = vsel %vm1579, %v3779, %v3783
      %v3785 = vshrl.u32 %v3665, 16
      %v3787 = vor.u32 %v3785, %v3783
      %v3789 = vshll.u32 %v3666, 16
      %v3791 = vrot.slane %v3789, 1
      %v3792 = vsel %vm1579, %v3787, %v3791
      %v3793 = vshrl.u32 %v3666, 16
      %v3795 = vor.u32 %v3793, %v3791
      %v3797 = vshll.u32 %v3667, 16
      %v3799 = vrot.slane %v3797, 1
      %v3800 = vsel %vm1579, %v3795, %v3799
      %v3801 = vshrl.u32 %v3667, 16
      %v3803 = vor.u32 %v3801, %v3799
      %v3805 = vshll.u32 %v3668, 16
      %v3807 = vrot.slane %v3805, 1
      %v3808 = vsel %vm1579, %v3803, %v3807
      %v3809 = vshrl.u32 %v3668, 16
      %v3811 = vor.u32 %v3809, %v3807
      %v3813 = vshll.u32 %v3669, 16
      %v3815 = vrot.slane %v3813, 1
      %v3816 = vsel %vm1579, %v3811, %v3815
      %v3817 = vshrl.u32 %v3669, 16
      %v3819 = vor.u32 %v3817, %v3815
      %v3821 = vshll.u32 %v3670, 16
      %v3823 = vrot.slane %v3821, 1
      %v3824 = vsel %vm1579, %v3819, %v3823
      %v3825 = vshrl.u32 %v3670, 16
      %v3827 = vor.u32 %v3825, %v3823
      %v3829 = vshll.u32 %v3671, 16
      %v3831 = vrot.slane %v3829, 1
      %v3832 = vsel %vm1579, %v3827, %v3831
      %v3833 = vshrl.u32 %v3671, 16
      %v3835 = vor.u32 %v3833, %v3831
      %v3837 = vshll.u32 %v3672, 16
      %v3839 = vrot.slane %v3837, 1
      %v3840 = vsel %vm1579, %v3835, %v3839
      %v3841 = vshrl.u32 %v3672, 16
      %v3843 = vor.u32 %v3841, %v3839
      %v3845 = vshll.u32 %v3673, 16
      %v3847 = vrot.slane %v3845, 1
      %v3848 = vsel %vm1579, %v3843, %v3847
      %v3849 = vshrl.u32 %v3673, 16
      %v3851 = vor.u32 %v3849, %v3847
      %v3853 = vshll.u32 %v3674, 16
      %v3855 = vrot.slane %v3853, 1
      %v3856 = vsel %vm1579, %v3851, %v3855
      %v3857 = vshrl.u32 %v3674, 16
      %v3859 = vor.u32 %v3857, %v3855
      %v3861 = vshll.u32 %v3675, 16
      %v3863 = vrot.slane %v3861, 1
      %v3864 = vsel %vm1579, %v3859, %v3863
      %v3865 = vshrl.u32 %v3675, 16
      %v3867 = vor.u32 %v3865, %v3863
      %v3869 = vshll.u32 %v3676, 16
      %v3871 = vrot.slane %v3869, 1
      %v3872 = vsel %vm1579, %v3867, %v3871
      %v3874 = vsel %vm647, %v3688, 0
      %v3877 = vsel %vm647, %v3696, 0
      %v3880 = vsel %vm647, %v3704, 0
      %v3883 = vsel %vm647, %v3712, 0
      %v3886 = vsel %vm647, %v3720, 0
      %v3889 = vsel %vm647, %v3728, 0
      %v3892 = vsel %vm647, %v3736, 0
      %v3895 = vsel %vm647, %v3744, 0
      %v3898 = vsel %vm647, %v3752, 0
      %v3901 = vsel %vm647, %v3760, 0
      %v3904 = vsel %vm647, %v3768, 0
      %v3907 = vsel %vm647, %v3776, 0
      %v3910 = vsel %vm647, %v3784, 0
      %v3913 = vsel %vm647, %v3792, 0
      %v3916 = vsel %vm647, %v3800, 0
      %v3919 = vsel %vm647, %v3808, 0
      %v3922 = vsel %vm647, %v3816, 0
      %v3925 = vsel %vm647, %v3824, 0
      %v3928 = vsel %vm647, %v3832, 0
      %v3931 = vsel %vm647, %v3840, 0
      %v3934 = vsel %vm647, %v3848, 0
      %v3937 = vsel %vm647, %v3856, 0
      %v3940 = vsel %vm647, %v3864, 0
      %v3943 = vsel %vm647, %v3872, 0
      %v3946 = vsel %vm735, %v3644, 0
      %3948 = vmatprep.subr.bf16.mxu0 0
      %3949 = vmatpush1.bf16.msra.mxu0 %v3946
      %3950 = vmatprep.subr.bf16.mxu0 0
      %3951 = vmatpush1.bf16.msra.mxu0 0
      %3952 = vmatprep.subr.bf16.mxu0 0
      %3953 = vmatpush1.bf16.msra.mxu0 0
      %3954 = vmatprep.subr.bf16.mxu0 0
      %3955 = vmatpush1.bf16.msra.mxu0 0
      %3956 = vmatprep.subr.bf16.mxu0 0
      %3957 = vmatpush1.bf16.msra.mxu0 0
      %3958 = vmatprep.subr.bf16.mxu0 0
      %3959 = vmatpush1.bf16.msra.mxu0 0
      %3960 = vmatprep.subr.bf16.mxu0 0
      %3961 = vmatpush1.bf16.msra.mxu0 0
      %3962 = vmatprep.subr.bf16.mxu0 0
      %3963 = vmatpush1.bf16.msra.mxu0 0
      %3964 = vmatprep.subr.bf16.mxu0 0
      %3965 = vmatpush1.bf16.msra.mxu0 0
      %3966 = vmatprep.subr.bf16.mxu0 0
      %3967 = vmatpush1.bf16.msra.mxu0 0
      %3968 = vmatprep.subr.bf16.mxu0 0
      %3969 = vmatpush1.bf16.msra.mxu0 0
      %3970 = vmatprep.subr.bf16.mxu0 0
      %3971 = vmatpush1.bf16.msra.mxu0 0
      %3972 = vmatprep.subr.bf16.mxu0 0
      %3973 = vmatpush1.bf16.msra.mxu0 0
      %3974 = vmatprep.subr.bf16.mxu0 0
      %3975 = vmatpush1.bf16.msra.mxu0 0
      %3976 = vmatprep.subr.bf16.mxu0 0
      %3977 = vmatpush1.bf16.msra.mxu0 0
      %3978 = vmatprep.subr.bf16.mxu0 0
      %3979 = vmatpush1.bf16.msra.mxu0 0
      %3980 = vmatprep.mubr.bf16.mxu0 0
      %3981 = vmatmul.mubr.bf16.gmra.mrb[0].mxu0 %v3874
      %v3982 = vpop.f32.mrb[0].mxu0
      %v3983 = vadd.f32 %v3650, %v3982
      %v3984 = vpop.f32.mrb[0].mxu0
      %v3985 = vpop.f32.mrb[0].mxu0
      %v3986 = vadd.f32 %v3650, %v3985
      %v3987 = vpop.f32.mrb[0].mxu0
      %3988 = vmatprep.mubr.bf16.mxu0 0
      %3989 = vmatmul.mubr.bf16.gmra.mrb[0].mxu0 %v3877
      %v3990 = vpop.f32.mrb[0].mxu0
      %v3991 = vadd.f32 %v3650, %v3990
      %v3992 = vpop.f32.mrb[0].mxu0
      %v3993 = vpop.f32.mrb[0].mxu0
      %v3994 = vadd.f32 %v3650, %v3993
      %v3995 = vpop.f32.mrb[0].mxu0
      %3996 = vmatprep.mubr.bf16.mxu0 0
      %3997 = vmatmul.mubr.bf16.gmra.mrb[0].mxu0 %v3880
      %v3998 = vpop.f32.mrb[0].mxu0
      %v3999 = vadd.f32 %v3650, %v3998
      %v4000 = vpop.f32.mrb[0].mxu0
      %v4001 = vpop.f32.mrb[0].mxu0
      %v4002 = vadd.f32 %v3650, %v4001
      %v4003 = vpop.f32.mrb[0].mxu0
      %4004 = vmatprep.mubr.bf16.mxu0 0
      %4005 = vmatmul.mubr.bf16.gmra.mrb[0].mxu0 %v3883
      %v4006 = vpop.f32.mrb[0].mxu0
      %v4007 = vadd.f32 %v3650, %v4006
      %v4008 = vpop.f32.mrb[0].mxu0
      %v4009 = vpop.f32.mrb[0].mxu0
      %v4010 = vadd.f32 %v3650, %v4009
      %v4011 = vpop.f32.mrb[0].mxu0
      %4012 = vmatprep.mubr.bf16.mxu0 0
      %4013 = vmatmul.mubr.bf16.gmra.mrb[0].mxu0 %v3886
      %v4014 = vpop.f32.mrb[0].mxu0
      %v4015 = vadd.f32 %v3650, %v4014
      %v4016 = vpop.f32.mrb[0].mxu0
      %v4017 = vpop.f32.mrb[0].mxu0
      %v4018 = vadd.f32 %v3650, %v4017
      %v4019 = vpop.f32.mrb[0].mxu0
      %4020 = vmatprep.mubr.bf16.mxu0 0
      %4021 = vmatmul.mubr.bf16.gmra.mrb[0].mxu0 %v3889
      %v4022 = vpop.f32.mrb[0].mxu0
      %v4023 = vadd.f32 %v3650, %v4022
      %v4024 = vpop.f32.mrb[0].mxu0
      %v4025 = vpop.f32.mrb[0].mxu0
      %v4026 = vadd.f32 %v3650, %v4025
      %v4027 = vpop.f32.mrb[0].mxu0
      %4028 = vmatprep.mubr.bf16.mxu0 0
      %4029 = vmatmul.mubr.bf16.gmra.mrb[0].mxu0 %v3892
      %v4030 = vpop.f32.mrb[0].mxu0
      %v4031 = vadd.f32 %v3650, %v4030
      %v4032 = vpop.f32.mrb[0].mxu0
      %v4033 = vpop.f32.mrb[0].mxu0
      %v4034 = vadd.f32 %v3650, %v4033
      %v4035 = vpop.f32.mrb[0].mxu0
      %4036 = vmatprep.mubr.bf16.mxu0 0
      %4037 = vmatmul.mubr.bf16.gmra.mrb[0].mxu0 %v3895
      %v4038 = vpop.f32.mrb[0].mxu0
      %v4039 = vadd.f32 %v3650, %v4038
      %v4040 = vpop.f32.mrb[0].mxu0
      %v4041 = vpop.f32.mrb[0].mxu0
      %v4042 = vadd.f32 %v3650, %v4041
      %v4043 = vpop.f32.mrb[0].mxu0
      %4044 = vmatprep.mubr.bf16.mxu0 0
      %4045 = vmatmul.mubr.bf16.gmra.mrb[0].mxu0 %v3898
      %v4046 = vpop.f32.mrb[0].mxu0
      %v4047 = vadd.f32 %v3650, %v4046
      %v4048 = vpop.f32.mrb[0].mxu0
      %v4049 = vpop.f32.mrb[0].mxu0
      %v4050 = vadd.f32 %v3650, %v4049
      %v4051 = vpop.f32.mrb[0].mxu0
      %4052 = vmatprep.mubr.bf16.mxu0 0
      %4053 = vmatmul.mubr.bf16.gmra.mrb[0].mxu0 %v3901
      %v4054 = vpop.f32.mrb[0].mxu0
      %v4055 = vadd.f32 %v3650, %v4054
      %v4056 = vpop.f32.mrb[0].mxu0
      %v4057 = vpop.f32.mrb[0].mxu0
      %v4058 = vadd.f32 %v3650, %v4057
      %v4059 = vpop.f32.mrb[0].mxu0
      %4060 = vmatprep.mubr.bf16.mxu0 0
      %4061 = vmatmul.mubr.bf16.gmra.mrb[0].mxu0 %v3904
      %v4062 = vpop.f32.mrb[0].mxu0
      %v4063 = vadd.f32 %v3650, %v4062
      %v4064 = vpop.f32.mrb[0].mxu0
      %v4065 = vpop.f32.mrb[0].mxu0
      %v4066 = vadd.f32 %v3650, %v4065
      %v4067 = vpop.f32.mrb[0].mxu0
      %4068 = vmatprep.mubr.bf16.mxu0 0
      %4069 = vmatmul.mubr.bf16.gmra.mrb[0].mxu0 %v3907
      %v4070 = vpop.f32.mrb[0].mxu0
      %v4071 = vadd.f32 %v3650, %v4070
      %v4072 = vpop.f32.mrb[0].mxu0
      %v4073 = vpop.f32.mrb[0].mxu0
      %v4074 = vadd.f32 %v3650, %v4073
      %v4075 = vpop.f32.mrb[0].mxu0
      %4076 = vmatprep.mubr.bf16.mxu0 0
      %4077 = vmatmul.mubr.bf16.gmra.mrb[0].mxu0 %v3910
      %v4078 = vpop.f32.mrb[0].mxu0
      %v4079 = vadd.f32 %v3650, %v4078
      %v4080 = vpop.f32.mrb[0].mxu0
      %v4081 = vpop.f32.mrb[0].mxu0
      %v4082 = vadd.f32 %v3650, %v4081
      %v4083 = vpop.f32.mrb[0].mxu0
      %4084 = vmatprep.mubr.bf16.mxu0 0
      %4085 = vmatmul.mubr.bf16.gmra.mrb[0].mxu0 %v3913
      %v4086 = vpop.f32.mrb[0].mxu0
      %v4087 = vadd.f32 %v3650, %v4086
      %v4088 = vpop.f32.mrb[0].mxu0
      %v4089 = vpop.f32.mrb[0].mxu0
      %v4090 = vadd.f32 %v3650, %v4089
      %v4091 = vpop.f32.mrb[0].mxu0
      %4092 = vmatprep.mubr.bf16.mxu0 0
      %4093 = vmatmul.mubr.bf16.gmra.mrb[0].mxu0 %v3916
      %v4094 = vpop.f32.mrb[0].mxu0
      %v4095 = vadd.f32 %v3650, %v4094
      %v4096 = vpop.f32.mrb[0].mxu0
      %v4097 = vpop.f32.mrb[0].mxu0
      %v4098 = vadd.f32 %v3650, %v4097
      %v4099 = vpop.f32.mrb[0].mxu0
      %4100 = vmatprep.mubr.bf16.mxu0 0
      %4101 = vmatmul.mubr.bf16.gmra.mrb[0].mxu0 %v3919
      %v4102 = vpop.f32.mrb[0].mxu0
      %v4103 = vadd.f32 %v3650, %v4102
      %v4104 = vpop.f32.mrb[0].mxu0
      %v4105 = vpop.f32.mrb[0].mxu0
      %v4106 = vadd.f32 %v3650, %v4105
      %v4107 = vpop.f32.mrb[0].mxu0
      %4108 = vmatprep.mubr.bf16.mxu0 0
      %4109 = vmatmul.mubr.bf16.gmra.mrb[0].mxu0 %v3922
      %v4110 = vpop.f32.mrb[0].mxu0
      %v4111 = vadd.f32 %v3650, %v4110
      %v4112 = vpop.f32.mrb[0].mxu0
      %v4113 = vpop.f32.mrb[0].mxu0
      %v4114 = vadd.f32 %v3650, %v4113
      %v4115 = vpop.f32.mrb[0].mxu0
      %4116 = vmatprep.mubr.bf16.mxu0 0
      %4117 = vmatmul.mubr.bf16.gmra.mrb[0].mxu0 %v3925
      %v4118 = vpop.f32.mrb[0].mxu0
      %v4119 = vadd.f32 %v3650, %v4118
      %v4120 = vpop.f32.mrb[0].mxu0
      %v4121 = vpop.f32.mrb[0].mxu0
      %v4122 = vadd.f32 %v3650, %v4121
      %v4123 = vpop.f32.mrb[0].mxu0
      %4124 = vmatprep.mubr.bf16.mxu0 0
      %4125 = vmatmul.mubr.bf16.gmra.mrb[0].mxu0 %v3928
      %v4126 = vpop.f32.mrb[0].mxu0
      %v4127 = vadd.f32 %v3650, %v4126
      %v4128 = vpop.f32.mrb[0].mxu0
      %v4129 = vpop.f32.mrb[0].mxu0
      %v4130 = vadd.f32 %v3650, %v4129
      %v4131 = vpop.f32.mrb[0].mxu0
      %4132 = vmatprep.mubr.bf16.mxu0 0
      %4133 = vmatmul.mubr.bf16.gmra.mrb[0].mxu0 %v3931
      %v4134 = vpop.f32.mrb[0].mxu0
      %v4135 = vadd.f32 %v3650, %v4134
      %v4136 = vpop.f32.mrb[0].mxu0
      %v4137 = vpop.f32.mrb[0].mxu0
      %v4138 = vadd.f32 %v3650, %v4137
      %v4139 = vpop.f32.mrb[0].mxu0
      %4140 = vmatprep.mubr.bf16.mxu0 0
      %4141 = vmatmul.mubr.bf16.gmra.mrb[0].mxu0 %v3934
      %v4142 = vpop.f32.mrb[0].mxu0
      %v4143 = vadd.f32 %v3650, %v4142
      %v4144 = vpop.f32.mrb[0].mxu0
      %v4145 = vpop.f32.mrb[0].mxu0
      %v4146 = vadd.f32 %v3650, %v4145
      %v4147 = vpop.f32.mrb[0].mxu0
      %4148 = vmatprep.mubr.bf16.mxu0 0
      %4149 = vmatmul.mubr.bf16.gmra.mrb[0].mxu0 %v3937
      %v4150 = vpop.f32.mrb[0].mxu0
      %v4151 = vadd.f32 %v3650, %v4150
      %v4152 = vpop.f32.mrb[0].mxu0
      %v4153 = vpop.f32.mrb[0].mxu0
      %v4154 = vadd.f32 %v3650, %v4153
      %v4155 = vpop.f32.mrb[0].mxu0
      %4156 = vmatprep.mubr.bf16.mxu0 0
      %4157 = vmatmul.mubr.bf16.gmra.mrb[0].mxu0 %v3940
      %v4158 = vpop.f32.mrb[0].mxu0
      %v4159 = vadd.f32 %v3650, %v4158
      %v4160 = vpop.f32.mrb[0].mxu0
      %v4161 = vpop.f32.mrb[0].mxu0
      %v4162 = vadd.f32 %v3650, %v4161
      %v4163 = vpop.f32.mrb[0].mxu0
      %4164 = vmatprep.mubr.bf16.mxu0 0
      %4165 = vmatmul.mubr.bf16.gmra.mrb[0].mxu0 %v3943
      %v4166 = vpop.f32.mrb[0].mxu0
      %v4167 = vadd.f32 %v3650, %v4166
      %v4168 = vpop.f32.mrb[0].mxu0
      %v4169 = vpop.f32.mrb[0].mxu0
      %v4170 = vadd.f32 %v3650, %v4169
      %v4171 = vpop.f32.mrb[0].mxu0
      %4172 = vdwg.mxu0
      %v4173 = vadd.f32 %v3596, %v3983
      %v4174 = vadd.f32 %v3597, %v3986
      %v4175 = vadd.f32 %v3598, %v3991
      %v4176 = vadd.f32 %v3599, %v3994
      %v4177 = vadd.f32 %v3600, %v3999
      %v4178 = vadd.f32 %v3601, %v4002
      %v4179 = vadd.f32 %v3602, %v4007
      %v4180 = vadd.f32 %v3603, %v4010
      %v4181 = vadd.f32 %v3604, %v4015
      %v4182 = vadd.f32 %v3605, %v4018
      %v4183 = vadd.f32 %v3606, %v4023
      %v4184 = vadd.f32 %v3607, %v4026
      %v4185 = vadd.f32 %v3608, %v4031
      %v4186 = vadd.f32 %v3609, %v4034
      %v4187 = vadd.f32 %v3610, %v4039
      %v4188 = vadd.f32 %v3611, %v4042
      %v4189 = vadd.f32 %v3612, %v4047
      %v4190 = vadd.f32 %v3613, %v4050
      %v4191 = vadd.f32 %v3614, %v4055
      %v4192 = vadd.f32 %v3615, %v4058
      %v4193 = vadd.f32 %v3616, %v4063
      %v4194 = vadd.f32 %v3617, %v4066
      %v4195 = vadd.f32 %v3618, %v4071
      %v4196 = vadd.f32 %v3619, %v4074
      %v4197 = vadd.f32 %v3620, %v4079
      %v4198 = vadd.f32 %v3621, %v4082
      %v4199 = vadd.f32 %v3622, %v4087
      %v4200 = vadd.f32 %v3623, %v4090
      %v4201 = vadd.f32 %v3624, %v4095
      %v4202 = vadd.f32 %v3625, %v4098
      %v4203 = vadd.f32 %v3626, %v4103
      %v4204 = vadd.f32 %v3627, %v4106
      %v4205 = vadd.f32 %v3628, %v4111
      %v4206 = vadd.f32 %v3629, %v4114
      %v4207 = vadd.f32 %v3630, %v4119
      %v4208 = vadd.f32 %v3631, %v4122
      %v4209 = vadd.f32 %v3632, %v4127
      %v4210 = vadd.f32 %v3633, %v4130
      %v4211 = vadd.f32 %v3634, %v4135
      %v4212 = vadd.f32 %v3635, %v4138
      %v4213 = vadd.f32 %v3636, %v4143
      %v4214 = vadd.f32 %v3637, %v4146
      %v4215 = vadd.f32 %v3638, %v4151
      %v4216 = vadd.f32 %v3639, %v4154
      %v4217 = vadd.f32 %v3640, %v4159
      %v4218 = vadd.f32 %v3641, %v4162
      %v4219 = vadd.f32 %v3642, %v4167
      %v4220 = vadd.f32 %v3643, %v4170
      %4221 = vst.msk [vmem:[%s436] sm:$0xff] %vm2569, %v4173
      %4222 = vst.msk [vmem:[%s436 + $0x8] sm:$0xff] %vm2569, %v4174
      %4223 = vst.msk [vmem:[%s436 + $0x10] sm:$0xff] %vm2569, %v4175
      %4224 = vst.msk [vmem:[%s436 + $0x18] sm:$0xff] %vm2569, %v4176
      %4225 = vst.msk [vmem:[%s436 + $0x20] sm:$0xff] %vm2569, %v4177
      %4226 = vst.msk [vmem:[%s436 + $0x28] sm:$0xff] %vm2569, %v4178
      %4227 = vst.msk [vmem:[%s436 + $0x30] sm:$0xff] %vm2569, %v4179
      %4228 = vst.msk [vmem:[%s436 + $0x38] sm:$0xff] %vm2569, %v4180
      %4229 = vst.msk [vmem:[%s436 + $0x40] sm:$0xff] %vm2569, %v4181
      %4230 = vst.msk [vmem:[%s436 + $0x48] sm:$0xff] %vm2569, %v4182
      %4231 = vst.msk [vmem:[%s436 + $0x50] sm:$0xff] %vm2569, %v4183
      %4232 = vst.msk [vmem:[%s436 + $0x58] sm:$0xff] %vm2569, %v4184
      %4233 = vst.msk [vmem:[%s436 + $0x60] sm:$0xff] %vm2569, %v4185
      %4234 = vst.msk [vmem:[%s436 + $0x68] sm:$0xff] %vm2569, %v4186
      %4235 = vst.msk [vmem:[%s436 + $0x70] sm:$0xff] %vm2569, %v4187
      %4236 = vst.msk [vmem:[%s436 + $0x78] sm:$0xff] %vm2569, %v4188
      %4237 = vst.msk [vmem:[%s436 + $0x80] sm:$0xff] %vm2569, %v4189
      %4238 = vst.msk [vmem:[%s436 + $0x88] sm:$0xff] %vm2569, %v4190
      %4239 = vst.msk [vmem:[%s436 + $0x90] sm:$0xff] %vm2569, %v4191
      %4240 = vst.msk [vmem:[%s436 + $0x98] sm:$0xff] %vm2569, %v4192
      %4241 = vst.msk [vmem:[%s436 + $0xa0] sm:$0xff] %vm2569, %v4193
      %4242 = vst.msk [vmem:[%s436 + $0xa8] sm:$0xff] %vm2569, %v4194
      %4243 = vst.msk [vmem:[%s436 + $0xb0] sm:$0xff] %vm2569, %v4195
      %4244 = vst.msk [vmem:[%s436 + $0xb8] sm:$0xff] %vm2569, %v4196
      %4245 = vst.msk [vmem:[%s436 + $0xc0] sm:$0xff] %vm2569, %v4197
      %4246 = vst.msk [vmem:[%s436 + $0xc8] sm:$0xff] %vm2569, %v4198
      %4247 = vst.msk [vmem:[%s436 + $0xd0] sm:$0xff] %vm2569, %v4199
      %4248 = vst.msk [vmem:[%s436 + $0xd8] sm:$0xff] %vm2569, %v4200
      %4249 = vst.msk [vmem:[%s436 + $0xe0] sm:$0xff] %vm2569, %v4201
      %4250 = vst.msk [vmem:[%s436 + $0xe8] sm:$0xff] %vm2569, %v4202
      %4251 = vst.msk [vmem:[%s436 + $0xf0] sm:$0xff] %vm2569, %v4203
      %4252 = vst.msk [vmem:[%s436 + $0xf8] sm:$0xff] %vm2569, %v4204
      %4253 = vst.msk [vmem:[%s436 + $0x100] sm:$0xff] %vm2569, %v4205
      %4254 = vst.msk [vmem:[%s436 + $0x108] sm:$0xff] %vm2569, %v4206
      %4255 = vst.msk [vmem:[%s436 + $0x110] sm:$0xff] %vm2569, %v4207
      %4256 = vst.msk [vmem:[%s436 + $0x118] sm:$0xff] %vm2569, %v4208
      %4257 = vst.msk [vmem:[%s436 + $0x120] sm:$0xff] %vm2569, %v4209
      %4258 = vst.msk [vmem:[%s436 + $0x128] sm:$0xff] %vm2569, %v4210
      %4259 = vst.msk [vmem:[%s436 + $0x130] sm:$0xff] %vm2569, %v4211
      %4260 = vst.msk [vmem:[%s436 + $0x138] sm:$0xff] %vm2569, %v4212
      %4261 = vst.msk [vmem:[%s436 + $0x140] sm:$0xff] %vm2569, %v4213
      %4262 = vst.msk [vmem:[%s436 + $0x148] sm:$0xff] %vm2569, %v4214
      %4263 = vst.msk [vmem:[%s436 + $0x150] sm:$0xff] %vm2569, %v4215
      %4264 = vst.msk [vmem:[%s436 + $0x158] sm:$0xff] %vm2569, %v4216
      %4265 = vst.msk [vmem:[%s436 + $0x160] sm:$0xff] %vm2569, %v4217
      %4266 = vst.msk [vmem:[%s436 + $0x168] sm:$0xff] %vm2569, %v4218
      %4267 = vst.msk [vmem:[%s436 + $0x170] sm:$0xff] %vm2569, %v4219
      %4268 = vst.msk [vmem:[%s436 + $0x178] sm:$0xff] %vm2569, %v4220
      %s4269 = smul.u32 16, %s26
      %p4270 = scmp.lt.s32.totalorder %s25, 1
      %s4271 = scalar_select %p4270, %s25, 1
      %p4272 = scmp.lt.s32.totalorder %s4269, 15
      %s4273 = scalar_select %p4272, %s4269, 15
      %s4274 = smul.addr %s4273, 3
      %s4275 = smul.addr %s4271, 48
      %s4276 = sadd.s32 %s4274, %s4275
      %s4277 = smul.addr %s4276, 8
      %s4278 = scalar_lea.vmem %s10, %s4277
      // Predicated region
      $region61: #{bottleneck_forward.1} parent=59 // pred_check
        %p4279 = pneg %p277
      $region62: #{bottleneck_forward.1} parent=59 // pred_check_branch
        %4281 = sbr.rel (%p4279) target = $region64
      $region63: #{bottleneck_forward.1} parent=59 // pred_region
        %s4282 = smul.u32 16, %s26
      $region64: #{bottleneck_forward.1} parent=59 // pred_fallthru
        _
    $region60: #{bottleneck_forward.1} parent=5 // pred_fallthru
      _
    %p4283 = scmp.le.s32.totalorder 2, %s16
    // Predicated region
    $region65: #{bottleneck_forward.1} parent=5 // pred_check
      %p4284 = pneg %p4283
    $region66: #{bottleneck_forward.1} parent=5 // pred_check_branch
      %4286 = sbr.rel (%p4284) target = $region68
    $region67: #{bottleneck_forward.1} parent=5 // pred_region
      %s4287 = ssub.s32 %s16, 2
      // Predicated region
      $region69: #{bottleneck_forward.1} parent=67 // pred_check
        %p4288 = pneg %p283
      $region70: #{bottleneck_forward.1} parent=67 // pred_check_branch
        %4290 = sbr.rel (%p4288) target = $region72
      $region71: #{bottleneck_forward.1} parent=67 // pred_region
        %s4291 = smul.u32 16, %s28
        %p4292 = scmp.lt.s32.totalorder %s27, 1
        %s4293 = scalar_select %p4292, %s27, 1
        %p4294 = scmp.lt.s32.totalorder %s4291, 15
        %s4295 = scalar_select %p4294, %s4291, 15
        %s4296 = smul.addr %s4295, 3
        %s4297 = smul.addr %s4293, 48
        %s4298 = sadd.s32 %s4296, %s4297
        %s4299 = smul.addr %s4298, 8
        %s4300 = scalar_lea.vmem %s10, %s4299
      $region72: #{bottleneck_forward.1} parent=67 // pred_fallthru
        _
    $region68: #{bottleneck_forward.1} parent=5 // pred_fallthru
      _
  $region6: #{bottleneck_forward.1} parent=0 // loop_footer
    %s20 = sadd.s32 1, %s16
  $region7: #{bottleneck_forward.1} parent=0 // loop_footer_branch
    %15 = sbr.rel target = $region3
  $region8: #{bottleneck_forward.1} parent=0 // loop_exit
    _

</llo_original>
